<compile_context>
chip_gen: v5e
topology: v5e:2x2
jax: 0.10.0
libtpu: 0.0.40
codegen_flags: <defaults>
</compile_context>

<pallas_src>
import functools

import jax
import jax.numpy as jnp
from jax.experimental import pallas as pl
from jax.experimental.pallas import tpu as pltpu


_GP = 128  # per-gate lane padding (vreg lane width)


# ----------------------------------------------------------------------------
# Fused kernel: encoder LSTM + ReLU -> (implicit concat) -> decoder LSTM + ReLU.
# No grid: whole problem is VMEM-resident; time loop is unrolled in-kernel and
# the encoder/decoder recurrences are interleaved per step.
# Input row layout is time-major flattened: row (t*B + b).
# ----------------------------------------------------------------------------
def _lstmae_kernel(x_ref, wih_e_ref, whh_e_ref, b_e_ref,
                   wih_dx_ref, wih_dh_ref, whh_d_ref, b_d_ref,
                   out_ref, *, T, B):
    P = _GP
    f32 = jnp.float32
    bf16 = jnp.bfloat16

    x = x_ref[...]                                        # (T*B, F) bf16

    # Hoisted, batched input projections (off the serial recurrence path).
    # Decoder: concat(x, enc) @ W_ih == x @ W_x + enc @ W_h (no concat).
    xw_e = jnp.dot(x, wih_e_ref[...],
                   preferred_element_type=f32) + b_e_ref[...]    # (T*B, 4P)
    xw_d = jnp.dot(x, wih_dx_ref[...],
                   preferred_element_type=f32) + b_d_ref[...]    # (T*B, 4P)

    whh_e = whh_e_ref[...]                                # (P, 4P) bf16
    wih_dh = wih_dh_ref[...]                              # (P, 4P) bf16
    whh_d = whh_d_ref[...]                                # (P, 4P) bf16

    def gates(pre):
        # PyTorch gate order along the padded 4P axis: i, f, g, o.
        # Each slice is a 128-lane-aligned vreg select.
        i = jax.nn.sigmoid(pre[:, 0 * P:1 * P])
        f = jax.nn.sigmoid(pre[:, 1 * P:2 * P])
        g = jnp.tanh(pre[:, 2 * P:3 * P])
        o = jax.nn.sigmoid(pre[:, 3 * P:4 * P])
        return i, f, g, o

    h_e = jnp.zeros((B, P), f32)
    c_e = jnp.zeros((B, P), f32)
    h_d = jnp.zeros((B, P), f32)
    c_d = jnp.zeros((B, P), f32)
    outs = []

    for t in range(T):                                    # static unroll (T small)
        # ---- Encoder step t.
        pre_e = xw_e[t * B:(t + 1) * B, :] + jnp.dot(
            h_e.astype(bf16), whh_e, preferred_element_type=f32)
        i, f, g, o = gates(pre_e)
        c_e = f * c_e + i * g
        h_e = o * jnp.tanh(c_e)
        enc_t = jnp.maximum(h_e, 0.0)                     # ReLU on emitted value only

        # ---- Decoder step t (depends only on enc_t; overlaps encoder t+1).
        pre_d = (xw_d[t * B:(t + 1) * B, :]
                 + jnp.dot(enc_t.astype(bf16), wih_dh, preferred_element_type=f32)
                 + jnp.dot(h_d.astype(bf16), whh_d, preferred_element_type=f32))
        i, f, g, o = gates(pre_d)
        c_d = f * c_d + i * g
        h_d = o * jnp.tanh(c_d)
        outs.append(jnp.maximum(h_d, 0.0))                # ReLU on output sequence

    # Single lane-dense coalesced store: (B, T*128), column block t = step t.
    out_ref[...] = jnp.concatenate(outs, axis=1).astype(out_ref.dtype)


# ----------------------------------------------------------------------------
# One-time weight preparation: transpose, per-gate 128-lane padding, bf16 cast.
# ----------------------------------------------------------------------------
def _pad_gate_cols(w, n):
    """(rows, 4n) -> (rows, 4*_GP), each gate block zero-padded to _GP lanes."""
    blocks = [jnp.pad(w[:, k * n:(k + 1) * n], ((0, 0), (0, _GP - n)))
              for k in range(4)]
    return jnp.concatenate(blocks, axis=1)


def _pad_gate_vec(b, n):
    blocks = [jnp.pad(b[k * n:(k + 1) * n], (0, _GP - n)) for k in range(4)]
    return jnp.concatenate(blocks).reshape(1, 4 * _GP)


def _pad_rows(w, rows_to):
    return jnp.pad(w, ((0, rows_to - w.shape[0]), (0, 0)))


def prepare_kernel_params(params, feature_size, hidden_size, label_size):
    """Done once (not per forward call): kernel-layout weights."""
    F, H, L = feature_size, hidden_size, label_size
    f32, bf16 = jnp.float32, jnp.bfloat16

    # Encoder: w_ih (4H, F), w_hh (4H, H) -> (F, 4P), (P, 4P).
    wih_e = _pad_gate_cols(params["enc_w_ih"].T.astype(f32), H)
    whh_e = _pad_rows(_pad_gate_cols(params["enc_w_hh"].T.astype(f32), H), _GP)
    b_e = _pad_gate_vec((params["enc_b_ih"] + params["enc_b_hh"]).astype(f32), H)

    # Decoder: w_ih (4L, F+H) -> split into x / enc halves; w_hh (4L, L).
    w_d = _pad_gate_cols(params["dec_w_ih"].T.astype(f32), L)       # (F+H, 4P)
    wih_dx = w_d[:F]                                                 # (F, 4P)
    wih_dh = _pad_rows(w_d[F:], _GP)                                 # (P, 4P)
    whh_d = _pad_rows(_pad_gate_cols(params["dec_w_hh"].T.astype(f32), L), _GP)
    b_d = _pad_gate_vec((params["dec_b_ih"] + params["dec_b_hh"]).astype(f32), L)

    return {
        "wih_e": wih_e.astype(bf16), "whh_e": whh_e.astype(bf16), "b_e": b_e,
        "wih_dx": wih_dx.astype(bf16), "wih_dh": wih_dh.astype(bf16),
        "whh_d": whh_d.astype(bf16), "b_d": b_d,
    }


@functools.partial(jax.jit, static_argnames=("label_size",))
def lstmae_forward(kparams, features, labels, *, label_size):
    """features: (B, T, feature_size); labels unused (parity with the module)."""
    del labels
    B, T, F = features.shape

    # Time-major flatten (row t*B + b) fused with the bf16 operand cast.
    x = jnp.transpose(features, (1, 0, 2)).reshape(T * B, F).astype(jnp.bfloat16)

    kernel = functools.partial(_lstmae_kernel, T=T, B=B)
    vmem = pl.BlockSpec(memory_space=pltpu.MemorySpace.VMEM)

    out = pl.pallas_call(
        kernel,
        out_shape=jax.ShapeDtypeStruct((B, T * _GP), jnp.float32),
        in_specs=[vmem] * 8,
        out_specs=vmem,
    )(x, kparams["wih_e"], kparams["whh_e"], kparams["b_e"],
      kparams["wih_dx"], kparams["wih_dh"], kparams["whh_d"], kparams["b_d"])

    # Lane-dense slab -> (B, T, label_size); no transpose needed.
    return out.reshape(B, T, _GP)[:, :, :label_size]


# ----------------------------------------------------------------------------
# Parameter construction (deterministic, mirrors the nn.Module's shapes/init).
# ----------------------------------------------------------------------------
def _xavier_uniform(key, shape, gain):
    fan_out, fan_in = shape
    a = gain * jnp.sqrt(6.0 / (fan_in + fan_out))
    return jax.random.uniform(key, shape, jnp.float32, -a, a)


def _lstm_bias(key, hidden):
    a = 1.0 / jnp.sqrt(jnp.float32(hidden))
    return jax.random.uniform(key, (4 * hidden,), jnp.float32, -a, a)


def init_lstmae_params(key, feature_size, label_size, hidden_size):
    ks = jax.random.split(key, 8)
    dec_in = feature_size + hidden_size
    return {
        # EncoderRNN: LSTM(feature_size -> hidden_size)
        "enc_w_ih": _xavier_uniform(ks[0], (4 * hidden_size, feature_size),
                                    jnp.sqrt(3.0)),
        "enc_w_hh": _xavier_uniform(ks[1], (4 * hidden_size, hidden_size),
                                    jnp.sqrt(2.0)),
        "enc_b_ih": _lstm_bias(ks[2], hidden_size),
        "enc_b_hh": _lstm_bias(ks[3], hidden_size),
        # DecoderRNN: LSTM(feature_size + hidden_size -> label_size)
        "dec_w_ih": _xavier_uniform(ks[4], (4 * label_size, dec_in),
                                    jnp.sqrt(2.0)),
        "dec_w_hh": _xavier_uniform(ks[5], (4 * label_size, label_size),
                                    jnp.sqrt(3.0)),
        "dec_b_ih": _lstm_bias(ks[6], label_size),
        "dec_b_hh": _lstm_bias(ks[7], label_size),
    }


# ----------------------------------------------------------------------------
# Pure-JAX reference (lax.scan LSTM). matmul_dtype=bf16 mirrors the kernel's
# mixed precision (bf16 operands, f32 accumulation/elementwise) for a tight
# structural check; f32 gives the exact PyTorch-style math for a sanity check.
# ----------------------------------------------------------------------------
def _lstm_ref(x_btd, w_ih, w_hh, b_ih, b_hh, apply_relu, matmul_dtype):
    H = w_ih.shape[0] // 4
    b = (b_ih + b_hh).astype(jnp.float32)
    wih_t = w_ih.T.astype(matmul_dtype)
    whh_t = w_hh.T.astype(matmul_dtype)

    def step(carry, x_t):
        h, c = carry
        gates = (jnp.dot(x_t.astype(matmul_dtype), wih_t,
                         preferred_element_type=jnp.float32)
                 + jnp.dot(h.astype(matmul_dtype), whh_t,
                           preferred_element_type=jnp.float32) + b)
        i, f, g, o = jnp.split(gates, 4, axis=-1)
        i, f, o = jax.nn.sigmoid(i), jax.nn.sigmoid(f), jax.nn.sigmoid(o)
        g = jnp.tanh(g)
        c = f * c + i * g
        h = o * jnp.tanh(c)
        return (h, c), h

    B = x_btd.shape[0]
    h0 = jnp.zeros((B, H), jnp.float32)
    c0 = jnp.zeros((B, H), jnp.float32)
    _, ys = jax.lax.scan(step, (h0, c0), jnp.transpose(x_btd, (1, 0, 2)))
    out = jnp.transpose(ys, (1, 0, 2))
    return jnp.maximum(out, 0.0) if apply_relu else out


def lstmae_ref(params, features, labels, matmul_dtype=jnp.float32):
    del labels
    enc = _lstm_ref(features, params["enc_w_ih"], params["enc_w_hh"],
                    params["enc_b_ih"], params["enc_b_hh"], True, matmul_dtype)
    dec_in = jnp.concatenate([features, enc], axis=-1)
    return _lstm_ref(dec_in, params["dec_w_ih"], params["dec_w_hh"],
                     params["dec_b_ih"], params["dec_b_hh"], True, matmul_dtype)


if __name__ == "__main__":
    B, T = 2, 8
    feature_size, label_size, hidden_size = 16, 8, 32

    key = jax.random.PRNGKey(0)
    k_feat, k_lab, k_par = jax.random.split(key, 3)
    features = jax.random.normal(k_feat, (B, T, feature_size), jnp.float32)
    labels = jax.random.normal(k_lab, (B, T, label_size), jnp.float32)
    params = init_lstmae_params(k_par, feature_size, label_size, hidden_size)
    kparams = prepare_kernel_params(params, feature_size, hidden_size, label_size)

    out = jax.block_until_ready(
        lstmae_forward(kparams, features, labels, label_size=label_size))
    assert out.shape == (B, T, label_size), out.shape

    # Structural check vs a reference that uses the same bf16-operand /
    # f32-accumulate matmul precision as the kernel.
    ref_bf16 = jax.block_until_ready(
        lstmae_ref(params, features, labels, matmul_dtype=jnp.bfloat16))
    err_bf16 = float(jnp.max(jnp.abs(out - ref_bf16)))
    assert jnp.allclose(out, ref_bf16, atol=5e-3, rtol=5e-3), err_bf16

    # Sanity check vs pure-f32 math (bf16 matmul operands drift slightly).
    ref_f32 = jax.block_until_ready(
        lstmae_ref(params, features, labels, matmul_dtype=jnp.float32))
    err_f32 = float(jnp.max(jnp.abs(out - ref_f32)))
    assert jnp.allclose(out, ref_f32, atol=5e-2, rtol=5e-2), err_f32

    print("KERNEL_OK")
</pallas_src>

<mosaic_0001>
module attributes {stable_mosaic.version = 11 : i64} {
  func.func @_lstmae_kernel(%arg0: memref<16x16xbf16, #tpu.memory_space<vmem>>, %arg1: memref<16x512xbf16, #tpu.memory_space<vmem>>, %arg2: memref<128x512xbf16, #tpu.memory_space<vmem>>, %arg3: memref<1x512xf32, #tpu.memory_space<vmem>>, %arg4: memref<16x512xbf16, #tpu.memory_space<vmem>>, %arg5: memref<128x512xbf16, #tpu.memory_space<vmem>>, %arg6: memref<128x512xbf16, #tpu.memory_space<vmem>>, %arg7: memref<1x512xf32, #tpu.memory_space<vmem>>, %arg8: memref<2x1024xf32, #tpu.memory_space<vmem>>) attributes {dimension_semantics = [], scalar_prefetch = 0 : i64, scratch_operands = 0 : i64, tpu.core_type = #tpu.core_type<tc>} {
    %c0 = arith.constant 0 : index
    %c0_0 = arith.constant 0 : index
    %0 = vector.load %arg0[%c0, %c0_0] : memref<16x16xbf16, #tpu.memory_space<vmem>>, vector<16x16xbf16>
    %c0_1 = arith.constant 0 : index
    %c0_2 = arith.constant 0 : index
    %1 = vector.load %arg1[%c0_1, %c0_2] : memref<16x512xbf16, #tpu.memory_space<vmem>>, vector<16x512xbf16>
    %cst = arith.constant dense<0.000000e+00> : vector<16x512xf32>
    %2 = tpu.matmul %0, %1, %cst {dimension_numbers = #tpu.dot_dimension_numbers<[1], [0], [0], [1], [0, 0, 1, 1], [], []>} : vector<16x16xbf16>, vector<16x512xbf16>, vector<16x512xf32> -> vector<16x512xf32>
    %c0_3 = arith.constant 0 : index
    %c0_4 = arith.constant 0 : index
    %3 = vector.load %arg3[%c0_3, %c0_4] : memref<1x512xf32, #tpu.memory_space<vmem>>, vector<1x512xf32>
    %4 = vector.broadcast %3 : vector<1x512xf32> to vector<16x512xf32>
    %5 = arith.addf %2, %4 : vector<16x512xf32>
    %c0_5 = arith.constant 0 : index
    %c0_6 = arith.constant 0 : index
    %6 = vector.load %arg4[%c0_5, %c0_6] : memref<16x512xbf16, #tpu.memory_space<vmem>>, vector<16x512xbf16>
    %cst_7 = arith.constant dense<0.000000e+00> : vector<16x512xf32>
    %7 = tpu.matmul %0, %6, %cst_7 {dimension_numbers = #tpu.dot_dimension_numbers<[1], [0], [0], [1], [0, 0, 1, 1], [], []>} : vector<16x16xbf16>, vector<16x512xbf16>, vector<16x512xf32> -> vector<16x512xf32>
    %c0_8 = arith.constant 0 : index
    %c0_9 = arith.constant 0 : index
    %8 = vector.load %arg7[%c0_8, %c0_9] : memref<1x512xf32, #tpu.memory_space<vmem>>, vector<1x512xf32>
    %9 = vector.broadcast %8 : vector<1x512xf32> to vector<16x512xf32>
    %10 = arith.addf %7, %9 : vector<16x512xf32>
    %c0_10 = arith.constant 0 : index
    %c0_11 = arith.constant 0 : index
    %11 = vector.load %arg2[%c0_10, %c0_11] : memref<128x512xbf16, #tpu.memory_space<vmem>>, vector<128x512xbf16>
    %c0_12 = arith.constant 0 : index
    %c0_13 = arith.constant 0 : index
    %12 = vector.load %arg5[%c0_12, %c0_13] : memref<128x512xbf16, #tpu.memory_space<vmem>>, vector<128x512xbf16>
    %c0_14 = arith.constant 0 : index
    %c0_15 = arith.constant 0 : index
    %13 = vector.load %arg6[%c0_14, %c0_15] : memref<128x512xbf16, #tpu.memory_space<vmem>>, vector<128x512xbf16>
    %cst_16 = arith.constant 0.000000e+00 : f32
    %14 = vector.broadcast %cst_16 : f32 to vector<2x128xf32>
    %cst_17 = arith.constant 0.000000e+00 : f32
    %15 = vector.broadcast %cst_17 : f32 to vector<2x128xf32>
    %cst_18 = arith.constant 0.000000e+00 : f32
    %16 = vector.broadcast %cst_18 : f32 to vector<2x128xf32>
    %cst_19 = arith.constant 0.000000e+00 : f32
    %17 = vector.broadcast %cst_19 : f32 to vector<2x128xf32>
    %18 = vector.extract_strided_slice %5 {offsets = [0, 0], sizes = [2, 512], strides = [1, 1]} : vector<16x512xf32> to vector<2x512xf32>
    %19 = arith.truncf %14 : vector<2x128xf32> to vector<2x128xbf16>
    %cst_20 = arith.constant dense<0.000000e+00> : vector<2x512xf32>
    %20 = tpu.matmul %19, %11, %cst_20 {dimension_numbers = #tpu.dot_dimension_numbers<[1], [0], [0], [1], [0, 0, 1, 1], [], []>} : vector<2x128xbf16>, vector<128x512xbf16>, vector<2x512xf32> -> vector<2x512xf32>
    %21 = arith.addf %18, %20 : vector<2x512xf32>
    %22 = vector.extract_strided_slice %21 {offsets = [0, 0], sizes = [2, 128], strides = [1, 1]} : vector<2x512xf32> to vector<2x128xf32>
    %23 = arith.negf %22 : vector<2x128xf32>
    %24 = math.exp %23 : vector<2x128xf32>
    %cst_21 = arith.constant 1.000000e+00 : f32
    %25 = vector.broadcast %cst_21 : f32 to vector<2x128xf32>
    %26 = arith.addf %25, %24 : vector<2x128xf32>
    %27 = arith.divf %25, %26 : vector<2x128xf32>
    %28 = vector.extract_strided_slice %21 {offsets = [0, 128], sizes = [2, 128], strides = [1, 1]} : vector<2x512xf32> to vector<2x128xf32>
    %29 = arith.negf %28 : vector<2x128xf32>
    %30 = math.exp %29 : vector<2x128xf32>
    %cst_22 = arith.constant 1.000000e+00 : f32
    %31 = vector.broadcast %cst_22 : f32 to vector<2x128xf32>
    %32 = arith.addf %31, %30 : vector<2x128xf32>
    %33 = arith.divf %31, %32 : vector<2x128xf32>
    %34 = vector.extract_strided_slice %21 {offsets = [0, 256], sizes = [2, 128], strides = [1, 1]} : vector<2x512xf32> to vector<2x128xf32>
    %35 = math.tanh %34 : vector<2x128xf32>
    %36 = vector.extract_strided_slice %21 {offsets = [0, 384], sizes = [2, 128], strides = [1, 1]} : vector<2x512xf32> to vector<2x128xf32>
    %37 = arith.negf %36 : vector<2x128xf32>
    %38 = math.exp %37 : vector<2x128xf32>
    %cst_23 = arith.constant 1.000000e+00 : f32
    %39 = vector.broadcast %cst_23 : f32 to vector<2x128xf32>
    %40 = arith.addf %39, %38 : vector<2x128xf32>
    %41 = arith.divf %39, %40 : vector<2x128xf32>
    %42 = arith.mulf %33, %15 : vector<2x128xf32>
    %43 = arith.mulf %27, %35 : vector<2x128xf32>
    %44 = arith.addf %42, %43 : vector<2x128xf32>
    %45 = math.tanh %44 : vector<2x128xf32>
    %46 = arith.mulf %41, %45 : vector<2x128xf32>
    %cst_24 = arith.constant 0.000000e+00 : f32
    %47 = vector.broadcast %cst_24 : f32 to vector<2x128xf32>
    %48 = arith.maximumf %46, %47 : vector<2x128xf32>
    %49 = vector.extract_strided_slice %10 {offsets = [0, 0], sizes = [2, 512], strides = [1, 1]} : vector<16x512xf32> to vector<2x512xf32>
    %50 = arith.truncf %48 : vector<2x128xf32> to vector<2x128xbf16>
    %cst_25 = arith.constant dense<0.000000e+00> : vector<2x512xf32>
    %51 = tpu.matmul %50, %12, %cst_25 {dimension_numbers = #tpu.dot_dimension_numbers<[1], [0], [0], [1], [0, 0, 1, 1], [], []>} : vector<2x128xbf16>, vector<128x512xbf16>, vector<2x512xf32> -> vector<2x512xf32>
    %52 = arith.addf %49, %51 : vector<2x512xf32>
    %53 = arith.truncf %16 : vector<2x128xf32> to vector<2x128xbf16>
    %cst_26 = arith.constant dense<0.000000e+00> : vector<2x512xf32>
    %54 = tpu.matmul %53, %13, %cst_26 {dimension_numbers = #tpu.dot_dimension_numbers<[1], [0], [0], [1], [0, 0, 1, 1], [], []>} : vector<2x128xbf16>, vector<128x512xbf16>, vector<2x512xf32> -> vector<2x512xf32>
    %55 = arith.addf %52, %54 : vector<2x512xf32>
    %56 = vector.extract_strided_slice %55 {offsets = [0, 0], sizes = [2, 128], strides = [1, 1]} : vector<2x512xf32> to vector<2x128xf32>
    %57 = arith.negf %56 : vector<2x128xf32>
    %58 = math.exp %57 : vector<2x128xf32>
    %cst_27 = arith.constant 1.000000e+00 : f32
    %59 = vector.broadcast %cst_27 : f32 to vector<2x128xf32>
    %60 = arith.addf %59, %58 : vector<2x128xf32>
    %61 = arith.divf %59, %60 : vector<2x128xf32>
    %62 = vector.extract_strided_slice %55 {offsets = [0, 128], sizes = [2, 128], strides = [1, 1]} : vector<2x512xf32> to vector<2x128xf32>
    %63 = arith.negf %62 : vector<2x128xf32>
    %64 = math.exp %63 : vector<2x128xf32>
    %cst_28 = arith.constant 1.000000e+00 : f32
    %65 = vector.broadcast %cst_28 : f32 to vector<2x128xf32>
    %66 = arith.addf %65, %64 : vector<2x128xf32>
    %67 = arith.divf %65, %66 : vector<2x128xf32>
    %68 = vector.extract_strided_slice %55 {offsets = [0, 256], sizes = [2, 128], strides = [1, 1]} : vector<2x512xf32> to vector<2x128xf32>
    %69 = math.tanh %68 : vector<2x128xf32>
    %70 = vector.extract_strided_slice %55 {offsets = [0, 384], sizes = [2, 128], strides = [1, 1]} : vector<2x512xf32> to vector<2x128xf32>
    %71 = arith.negf %70 : vector<2x128xf32>
    %72 = math.exp %71 : vector<2x128xf32>
    %cst_29 = arith.constant 1.000000e+00 : f32
    %73 = vector.broadcast %cst_29 : f32 to vector<2x128xf32>
    %74 = arith.addf %73, %72 : vector<2x128xf32>
    %75 = arith.divf %73, %74 : vector<2x128xf32>
    %76 = arith.mulf %67, %17 : vector<2x128xf32>
    %77 = arith.mulf %61, %69 : vector<2x128xf32>
    %78 = arith.addf %76, %77 : vector<2x128xf32>
    %79 = math.tanh %78 : vector<2x128xf32>
    %80 = arith.mulf %75, %79 : vector<2x128xf32>
    %cst_30 = arith.constant 0.000000e+00 : f32
    %81 = vector.broadcast %cst_30 : f32 to vector<2x128xf32>
    %82 = arith.maximumf %80, %81 : vector<2x128xf32>
    %83 = vector.extract_strided_slice %5 {offsets = [2, 0], sizes = [2, 512], strides = [1, 1]} : vector<16x512xf32> to vector<2x512xf32>
    %84 = arith.truncf %46 : vector<2x128xf32> to vector<2x128xbf16>
    %cst_31 = arith.constant dense<0.000000e+00> : vector<2x512xf32>
    %85 = tpu.matmul %84, %11, %cst_31 {dimension_numbers = #tpu.dot_dimension_numbers<[1], [0], [0], [1], [0, 0, 1, 1], [], []>} : vector<2x128xbf16>, vector<128x512xbf16>, vector<2x512xf32> -> vector<2x512xf32>
    %86 = arith.addf %83, %85 : vector<2x512xf32>
    %87 = vector.extract_strided_slice %86 {offsets = [0, 0], sizes = [2, 128], strides = [1, 1]} : vector<2x512xf32> to vector<2x128xf32>
    %88 = arith.negf %87 : vector<2x128xf32>
    %89 = math.exp %88 : vector<2x128xf32>
    %cst_32 = arith.constant 1.000000e+00 : f32
    %90 = vector.broadcast %cst_32 : f32 to vector<2x128xf32>
    %91 = arith.addf %90, %89 : vector<2x128xf32>
    %92 = arith.divf %90, %91 : vector<2x128xf32>
    %93 = vector.extract_strided_slice %86 {offsets = [0, 128], sizes = [2, 128], strides = [1, 1]} : vector<2x512xf32> to vector<2x128xf32>
    %94 = arith.negf %93 : vector<2x128xf32>
    %95 = math.exp %94 : vector<2x128xf32>
    %cst_33 = arith.constant 1.000000e+00 : f32
    %96 = vector.broadcast %cst_33 : f32 to vector<2x128xf32>
    %97 = arith.addf %96, %95 : vector<2x128xf32>
    %98 = arith.divf %96, %97 : vector<2x128xf32>
    %99 = vector.extract_strided_slice %86 {offsets = [0, 256], sizes = [2, 128], strides = [1, 1]} : vector<2x512xf32> to vector<2x128xf32>
    %100 = math.tanh %99 : vector<2x128xf32>
    %101 = vector.extract_strided_slice %86 {offsets = [0, 384], sizes = [2, 128], strides = [1, 1]} : vector<2x512xf32> to vector<2x128xf32>
    %102 = arith.negf %101 : vector<2x128xf32>
    %103 = math.exp %102 : vector<2x128xf32>
    %cst_34 = arith.constant 1.000000e+00 : f32
    %104 = vector.broadcast %cst_34 : f32 to vector<2x128xf32>
    %105 = arith.addf %104, %103 : vector<2x128xf32>
    %106 = arith.divf %104, %105 : vector<2x128xf32>
    %107 = arith.mulf %98, %44 : vector<2x128xf32>
    %108 = arith.mulf %92, %100 : vector<2x128xf32>
    %109 = arith.addf %107, %108 : vector<2x128xf32>
    %110 = math.tanh %109 : vector<2x128xf32>
    %111 = arith.mulf %106, %110 : vector<2x128xf32>
    %cst_35 = arith.constant 0.000000e+00 : f32
    %112 = vector.broadcast %cst_35 : f32 to vector<2x128xf32>
    %113 = arith.maximumf %111, %112 : vector<2x128xf32>
    %114 = vector.extract_strided_slice %10 {offsets = [2, 0], sizes = [2, 512], strides = [1, 1]} : vector<16x512xf32> to vector<2x512xf32>
    %115 = arith.truncf %113 : vector<2x128xf32> to vector<2x128xbf16>
    %cst_36 = arith.constant dense<0.000000e+00> : vector<2x512xf32>
    %116 = tpu.matmul %115, %12, %cst_36 {dimension_numbers = #tpu.dot_dimension_numbers<[1], [0], [0], [1], [0, 0, 1, 1], [], []>} : vector<2x128xbf16>, vector<128x512xbf16>, vector<2x512xf32> -> vector<2x512xf32>
    %117 = arith.addf %114, %116 : vector<2x512xf32>
    %118 = arith.truncf %80 : vector<2x128xf32> to vector<2x128xbf16>
    %cst_37 = arith.constant dense<0.000000e+00> : vector<2x512xf32>
    %119 = tpu.matmul %118, %13, %cst_37 {dimension_numbers = #tpu.dot_dimension_numbers<[1], [0], [0], [1], [0, 0, 1, 1], [], []>} : vector<2x128xbf16>, vector<128x512xbf16>, vector<2x512xf32> -> vector<2x512xf32>
    %120 = arith.addf %117, %119 : vector<2x512xf32>
    %121 = vector.extract_strided_slice %120 {offsets = [0, 0], sizes = [2, 128], strides = [1, 1]} : vector<2x512xf32> to vector<2x128xf32>
    %122 = arith.negf %121 : vector<2x128xf32>
    %123 = math.exp %122 : vector<2x128xf32>
    %cst_38 = arith.constant 1.000000e+00 : f32
    %124 = vector.broadcast %cst_38 : f32 to vector<2x128xf32>
    %125 = arith.addf %124, %123 : vector<2x128xf32>
    %126 = arith.divf %124, %125 : vector<2x128xf32>
    %127 = vector.extract_strided_slice %120 {offsets = [0, 128], sizes = [2, 128], strides = [1, 1]} : vector<2x512xf32> to vector<2x128xf32>
    %128 = arith.negf %127 : vector<2x128xf32>
    %129 = math.exp %128 : vector<2x128xf32>
    %cst_39 = arith.constant 1.000000e+00 : f32
    %130 = vector.broadcast %cst_39 : f32 to vector<2x128xf32>
    %131 = arith.addf %130, %129 : vector<2x128xf32>
    %132 = arith.divf %130, %131 : vector<2x128xf32>
    %133 = vector.extract_strided_slice %120 {offsets = [0, 256], sizes = [2, 128], strides = [1, 1]} : vector<2x512xf32> to vector<2x128xf32>
    %134 = math.tanh %133 : vector<2x128xf32>
    %135 = vector.extract_strided_slice %120 {offsets = [0, 384], sizes = [2, 128], strides = [1, 1]} : vector<2x512xf32> to vector<2x128xf32>
    %136 = arith.negf %135 : vector<2x128xf32>
    %137 = math.exp %136 : vector<2x128xf32>
    %cst_40 = arith.constant 1.000000e+00 : f32
    %138 = vector.broadcast %cst_40 : f32 to vector<2x128xf32>
    %139 = arith.addf %138, %137 : vector<2x128xf32>
    %140 = arith.divf %138, %139 : vector<2x128xf32>
    %141 = arith.mulf %132, %78 : vector<2x128xf32>
    %142 = arith.mulf %126, %134 : vector<2x128xf32>
    %143 = arith.addf %141, %142 : vector<2x128xf32>
    %144 = math.tanh %143 : vector<2x128xf32>
    %145 = arith.mulf %140, %144 : vector<2x128xf32>
    %cst_41 = arith.constant 0.000000e+00 : f32
    %146 = vector.broadcast %cst_41 : f32 to vector<2x128xf32>
    %147 = arith.maximumf %145, %146 : vector<2x128xf32>
    %148 = vector.extract_strided_slice %5 {offsets = [4, 0], sizes = [2, 512], strides = [1, 1]} : vector<16x512xf32> to vector<2x512xf32>
    %149 = arith.truncf %111 : vector<2x128xf32> to vector<2x128xbf16>
    %cst_42 = arith.constant dense<0.000000e+00> : vector<2x512xf32>
    %150 = tpu.matmul %149, %11, %cst_42 {dimension_numbers = #tpu.dot_dimension_numbers<[1], [0], [0], [1], [0, 0, 1, 1], [], []>} : vector<2x128xbf16>, vector<128x512xbf16>, vector<2x512xf32> -> vector<2x512xf32>
    %151 = arith.addf %148, %150 : vector<2x512xf32>
    %152 = vector.extract_strided_slice %151 {offsets = [0, 0], sizes = [2, 128], strides = [1, 1]} : vector<2x512xf32> to vector<2x128xf32>
    %153 = arith.negf %152 : vector<2x128xf32>
    %154 = math.exp %153 : vector<2x128xf32>
    %cst_43 = arith.constant 1.000000e+00 : f32
    %155 = vector.broadcast %cst_43 : f32 to vector<2x128xf32>
    %156 = arith.addf %155, %154 : vector<2x128xf32>
    %157 = arith.divf %155, %156 : vector<2x128xf32>
    %158 = vector.extract_strided_slice %151 {offsets = [0, 128], sizes = [2, 128], strides = [1, 1]} : vector<2x512xf32> to vector<2x128xf32>
    %159 = arith.negf %158 : vector<2x128xf32>
    %160 = math.exp %159 : vector<2x128xf32>
    %cst_44 = arith.constant 1.000000e+00 : f32
    %161 = vector.broadcast %cst_44 : f32 to vector<2x128xf32>
    %162 = arith.addf %161, %160 : vector<2x128xf32>
    %163 = arith.divf %161, %162 : vector<2x128xf32>
    %164 = vector.extract_strided_slice %151 {offsets = [0, 256], sizes = [2, 128], strides = [1, 1]} : vector<2x512xf32> to vector<2x128xf32>
    %165 = math.tanh %164 : vector<2x128xf32>
    %166 = vector.extract_strided_slice %151 {offsets = [0, 384], sizes = [2, 128], strides = [1, 1]} : vector<2x512xf32> to vector<2x128xf32>
    %167 = arith.negf %166 : vector<2x128xf32>
    %168 = math.exp %167 : vector<2x128xf32>
    %cst_45 = arith.constant 1.000000e+00 : f32
    %169 = vector.broadcast %cst_45 : f32 to vector<2x128xf32>
    %170 = arith.addf %169, %168 : vector<2x128xf32>
    %171 = arith.divf %169, %170 : vector<2x128xf32>
    %172 = arith.mulf %163, %109 : vector<2x128xf32>
    %173 = arith.mulf %157, %165 : vector<2x128xf32>
    %174 = arith.addf %172, %173 : vector<2x128xf32>
    %175 = math.tanh %174 : vector<2x128xf32>
    %176 = arith.mulf %171, %175 : vector<2x128xf32>
    %cst_46 = arith.constant 0.000000e+00 : f32
    %177 = vector.broadcast %cst_46 : f32 to vector<2x128xf32>
    %178 = arith.maximumf %176, %177 : vector<2x128xf32>
    %179 = vector.extract_strided_slice %10 {offsets = [4, 0], sizes = [2, 512], strides = [1, 1]} : vector<16x512xf32> to vector<2x512xf32>
    %180 = arith.truncf %178 : vector<2x128xf32> to vector<2x128xbf16>
    %cst_47 = arith.constant dense<0.000000e+00> : vector<2x512xf32>
    %181 = tpu.matmul %180, %12, %cst_47 {dimension_numbers = #tpu.dot_dimension_numbers<[1], [0], [0], [1], [0, 0, 1, 1], [], []>} : vector<2x128xbf16>, vector<128x512xbf16>, vector<2x512xf32> -> vector<2x512xf32>
    %182 = arith.addf %179, %181 : vector<2x512xf32>
    %183 = arith.truncf %145 : vector<2x128xf32> to vector<2x128xbf16>
    %cst_48 = arith.constant dense<0.000000e+00> : vector<2x512xf32>
    %184 = tpu.matmul %183, %13, %cst_48 {dimension_numbers = #tpu.dot_dimension_numbers<[1], [0], [0], [1], [0, 0, 1, 1], [], []>} : vector<2x128xbf16>, vector<128x512xbf16>, vector<2x512xf32> -> vector<2x512xf32>
    %185 = arith.addf %182, %184 : vector<2x512xf32>
    %186 = vector.extract_strided_slice %185 {offsets = [0, 0], sizes = [2, 128], strides = [1, 1]} : vector<2x512xf32> to vector<2x128xf32>
    %187 = arith.negf %186 : vector<2x128xf32>
    %188 = math.exp %187 : vector<2x128xf32>
    %cst_49 = arith.constant 1.000000e+00 : f32
    %189 = vector.broadcast %cst_49 : f32 to vector<2x128xf32>
    %190 = arith.addf %189, %188 : vector<2x128xf32>
    %191 = arith.divf %189, %190 : vector<2x128xf32>
    %192 = vector.extract_strided_slice %185 {offsets = [0, 128], sizes = [2, 128], strides = [1, 1]} : vector<2x512xf32> to vector<2x128xf32>
    %193 = arith.negf %192 : vector<2x128xf32>
    %194 = math.exp %193 : vector<2x128xf32>
    %cst_50 = arith.constant 1.000000e+00 : f32
    %195 = vector.broadcast %cst_50 : f32 to vector<2x128xf32>
    %196 = arith.addf %195, %194 : vector<2x128xf32>
    %197 = arith.divf %195, %196 : vector<2x128xf32>
    %198 = vector.extract_strided_slice %185 {offsets = [0, 256], sizes = [2, 128], strides = [1, 1]} : vector<2x512xf32> to vector<2x128xf32>
    %199 = math.tanh %198 : vector<2x128xf32>
    %200 = vector.extract_strided_slice %185 {offsets = [0, 384], sizes = [2, 128], strides = [1, 1]} : vector<2x512xf32> to vector<2x128xf32>
    %201 = arith.negf %200 : vector<2x128xf32>
    %202 = math.exp %201 : vector<2x128xf32>
    %cst_51 = arith.constant 1.000000e+00 : f32
    %203 = vector.broadcast %cst_51 : f32 to vector<2x128xf32>
    %204 = arith.addf %203, %202 : vector<2x128xf32>
    %205 = arith.divf %203, %204 : vector<2x128xf32>
    %206 = arith.mulf %197, %143 : vector<2x128xf32>
    %207 = arith.mulf %191, %199 : vector<2x128xf32>
    %208 = arith.addf %206, %207 : vector<2x128xf32>
    %209 = math.tanh %208 : vector<2x128xf32>
    %210 = arith.mulf %205, %209 : vector<2x128xf32>
    %cst_52 = arith.constant 0.000000e+00 : f32
    %211 = vector.broadcast %cst_52 : f32 to vector<2x128xf32>
    %212 = arith.maximumf %210, %211 : vector<2x128xf32>
    %213 = vector.extract_strided_slice %5 {offsets = [6, 0], sizes = [2, 512], strides = [1, 1]} : vector<16x512xf32> to vector<2x512xf32>
    %214 = arith.truncf %176 : vector<2x128xf32> to vector<2x128xbf16>
    %cst_53 = arith.constant dense<0.000000e+00> : vector<2x512xf32>
    %215 = tpu.matmul %214, %11, %cst_53 {dimension_numbers = #tpu.dot_dimension_numbers<[1], [0], [0], [1], [0, 0, 1, 1], [], []>} : vector<2x128xbf16>, vector<128x512xbf16>, vector<2x512xf32> -> vector<2x512xf32>
    %216 = arith.addf %213, %215 : vector<2x512xf32>
    %217 = vector.extract_strided_slice %216 {offsets = [0, 0], sizes = [2, 128], strides = [1, 1]} : vector<2x512xf32> to vector<2x128xf32>
    %218 = arith.negf %217 : vector<2x128xf32>
    %219 = math.exp %218 : vector<2x128xf32>
    %cst_54 = arith.constant 1.000000e+00 : f32
    %220 = vector.broadcast %cst_54 : f32 to vector<2x128xf32>
    %221 = arith.addf %220, %219 : vector<2x128xf32>
    %222 = arith.divf %220, %221 : vector<2x128xf32>
    %223 = vector.extract_strided_slice %216 {offsets = [0, 128], sizes = [2, 128], strides = [1, 1]} : vector<2x512xf32> to vector<2x128xf32>
    %224 = arith.negf %223 : vector<2x128xf32>
    %225 = math.exp %224 : vector<2x128xf32>
    %cst_55 = arith.constant 1.000000e+00 : f32
    %226 = vector.broadcast %cst_55 : f32 to vector<2x128xf32>
    %227 = arith.addf %226, %225 : vector<2x128xf32>
    %228 = arith.divf %226, %227 : vector<2x128xf32>
    %229 = vector.extract_strided_slice %216 {offsets = [0, 256], sizes = [2, 128], strides = [1, 1]} : vector<2x512xf32> to vector<2x128xf32>
    %230 = math.tanh %229 : vector<2x128xf32>
    %231 = vector.extract_strided_slice %216 {offsets = [0, 384], sizes = [2, 128], strides = [1, 1]} : vector<2x512xf32> to vector<2x128xf32>
    %232 = arith.negf %231 : vector<2x128xf32>
    %233 = math.exp %232 : vector<2x128xf32>
    %cst_56 = arith.constant 1.000000e+00 : f32
    %234 = vector.broadcast %cst_56 : f32 to vector<2x128xf32>
    %235 = arith.addf %234, %233 : vector<2x128xf32>
    %236 = arith.divf %234, %235 : vector<2x128xf32>
    %237 = arith.mulf %228, %174 : vector<2x128xf32>
    %238 = arith.mulf %222, %230 : vector<2x128xf32>
    %239 = arith.addf %237, %238 : vector<2x128xf32>
    %240 = math.tanh %239 : vector<2x128xf32>
    %241 = arith.mulf %236, %240 : vector<2x128xf32>
    %cst_57 = arith.constant 0.000000e+00 : f32
    %242 = vector.broadcast %cst_57 : f32 to vector<2x128xf32>
    %243 = arith.maximumf %241, %242 : vector<2x128xf32>
    %244 = vector.extract_strided_slice %10 {offsets = [6, 0], sizes = [2, 512], strides = [1, 1]} : vector<16x512xf32> to vector<2x512xf32>
    %245 = arith.truncf %243 : vector<2x128xf32> to vector<2x128xbf16>
    %cst_58 = arith.constant dense<0.000000e+00> : vector<2x512xf32>
    %246 = tpu.matmul %245, %12, %cst_58 {dimension_numbers = #tpu.dot_dimension_numbers<[1], [0], [0], [1], [0, 0, 1, 1], [], []>} : vector<2x128xbf16>, vector<128x512xbf16>, vector<2x512xf32> -> vector<2x512xf32>
    %247 = arith.addf %244, %246 : vector<2x512xf32>
    %248 = arith.truncf %210 : vector<2x128xf32> to vector<2x128xbf16>
    %cst_59 = arith.constant dense<0.000000e+00> : vector<2x512xf32>
    %249 = tpu.matmul %248, %13, %cst_59 {dimension_numbers = #tpu.dot_dimension_numbers<[1], [0], [0], [1], [0, 0, 1, 1], [], []>} : vector<2x128xbf16>, vector<128x512xbf16>, vector<2x512xf32> -> vector<2x512xf32>
    %250 = arith.addf %247, %249 : vector<2x512xf32>
    %251 = vector.extract_strided_slice %250 {offsets = [0, 0], sizes = [2, 128], strides = [1, 1]} : vector<2x512xf32> to vector<2x128xf32>
    %252 = arith.negf %251 : vector<2x128xf32>
    %253 = math.exp %252 : vector<2x128xf32>
    %cst_60 = arith.constant 1.000000e+00 : f32
    %254 = vector.broadcast %cst_60 : f32 to vector<2x128xf32>
    %255 = arith.addf %254, %253 : vector<2x128xf32>
    %256 = arith.divf %254, %255 : vector<2x128xf32>
    %257 = vector.extract_strided_slice %250 {offsets = [0, 128], sizes = [2, 128], strides = [1, 1]} : vector<2x512xf32> to vector<2x128xf32>
    %258 = arith.negf %257 : vector<2x128xf32>
    %259 = math.exp %258 : vector<2x128xf32>
    %cst_61 = arith.constant 1.000000e+00 : f32
    %260 = vector.broadcast %cst_61 : f32 to vector<2x128xf32>
    %261 = arith.addf %260, %259 : vector<2x128xf32>
    %262 = arith.divf %260, %261 : vector<2x128xf32>
    %263 = vector.extract_strided_slice %250 {offsets = [0, 256], sizes = [2, 128], strides = [1, 1]} : vector<2x512xf32> to vector<2x128xf32>
    %264 = math.tanh %263 : vector<2x128xf32>
    %265 = vector.extract_strided_slice %250 {offsets = [0, 384], sizes = [2, 128], strides = [1, 1]} : vector<2x512xf32> to vector<2x128xf32>
    %266 = arith.negf %265 : vector<2x128xf32>
    %267 = math.exp %266 : vector<2x128xf32>
    %cst_62 = arith.constant 1.000000e+00 : f32
    %268 = vector.broadcast %cst_62 : f32 to vector<2x128xf32>
    %269 = arith.addf %268, %267 : vector<2x128xf32>
    %270 = arith.divf %268, %269 : vector<2x128xf32>
    %271 = arith.mulf %262, %208 : vector<2x128xf32>
    %272 = arith.mulf %256, %264 : vector<2x128xf32>
    %273 = arith.addf %271, %272 : vector<2x128xf32>
    %274 = math.tanh %273 : vector<2x128xf32>
    %275 = arith.mulf %270, %274 : vector<2x128xf32>
    %cst_63 = arith.constant 0.000000e+00 : f32
    %276 = vector.broadcast %cst_63 : f32 to vector<2x128xf32>
    %277 = arith.maximumf %275, %276 : vector<2x128xf32>
    %278 = vector.extract_strided_slice %5 {offsets = [8, 0], sizes = [2, 512], strides = [1, 1]} : vector<16x512xf32> to vector<2x512xf32>
    %279 = arith.truncf %241 : vector<2x128xf32> to vector<2x128xbf16>
    %cst_64 = arith.constant dense<0.000000e+00> : vector<2x512xf32>
    %280 = tpu.matmul %279, %11, %cst_64 {dimension_numbers = #tpu.dot_dimension_numbers<[1], [0], [0], [1], [0, 0, 1, 1], [], []>} : vector<2x128xbf16>, vector<128x512xbf16>, vector<2x512xf32> -> vector<2x512xf32>
    %281 = arith.addf %278, %280 : vector<2x512xf32>
    %282 = vector.extract_strided_slice %281 {offsets = [0, 0], sizes = [2, 128], strides = [1, 1]} : vector<2x512xf32> to vector<2x128xf32>
    %283 = arith.negf %282 : vector<2x128xf32>
    %284 = math.exp %283 : vector<2x128xf32>
    %cst_65 = arith.constant 1.000000e+00 : f32
    %285 = vector.broadcast %cst_65 : f32 to vector<2x128xf32>
    %286 = arith.addf %285, %284 : vector<2x128xf32>
    %287 = arith.divf %285, %286 : vector<2x128xf32>
    %288 = vector.extract_strided_slice %281 {offsets = [0, 128], sizes = [2, 128], strides = [1, 1]} : vector<2x512xf32> to vector<2x128xf32>
    %289 = arith.negf %288 : vector<2x128xf32>
    %290 = math.exp %289 : vector<2x128xf32>
    %cst_66 = arith.constant 1.000000e+00 : f32
    %291 = vector.broadcast %cst_66 : f32 to vector<2x128xf32>
    %292 = arith.addf %291, %290 : vector<2x128xf32>
    %293 = arith.divf %291, %292 : vector<2x128xf32>
    %294 = vector.extract_strided_slice %281 {offsets = [0, 256], sizes = [2, 128], strides = [1, 1]} : vector<2x512xf32> to vector<2x128xf32>
    %295 = math.tanh %294 : vector<2x128xf32>
    %296 = vector.extract_strided_slice %281 {offsets = [0, 384], sizes = [2, 128], strides = [1, 1]} : vector<2x512xf32> to vector<2x128xf32>
    %297 = arith.negf %296 : vector<2x128xf32>
    %298 = math.exp %297 : vector<2x128xf32>
    %cst_67 = arith.constant 1.000000e+00 : f32
    %299 = vector.broadcast %cst_67 : f32 to vector<2x128xf32>
    %300 = arith.addf %299, %298 : vector<2x128xf32>
    %301 = arith.divf %299, %300 : vector<2x128xf32>
    %302 = arith.mulf %293, %239 : vector<2x128xf32>
    %303 = arith.mulf %287, %295 : vector<2x128xf32>
    %304 = arith.addf %302, %303 : vector<2x128xf32>
    %305 = math.tanh %304 : vector<2x128xf32>
    %306 = arith.mulf %301, %305 : vector<2x128xf32>
    %cst_68 = arith.constant 0.000000e+00 : f32
    %307 = vector.broadcast %cst_68 : f32 to vector<2x128xf32>
    %308 = arith.maximumf %306, %307 : vector<2x128xf32>
    %309 = vector.extract_strided_slice %10 {offsets = [8, 0], sizes = [2, 512], strides = [1, 1]} : vector<16x512xf32> to vector<2x512xf32>
    %310 = arith.truncf %308 : vector<2x128xf32> to vector<2x128xbf16>
    %cst_69 = arith.constant dense<0.000000e+00> : vector<2x512xf32>
    %311 = tpu.matmul %310, %12, %cst_69 {dimension_numbers = #tpu.dot_dimension_numbers<[1], [0], [0], [1], [0, 0, 1, 1], [], []>} : vector<2x128xbf16>, vector<128x512xbf16>, vector<2x512xf32> -> vector<2x512xf32>
    %312 = arith.addf %309, %311 : vector<2x512xf32>
    %313 = arith.truncf %275 : vector<2x128xf32> to vector<2x128xbf16>
    %cst_70 = arith.constant dense<0.000000e+00> : vector<2x512xf32>
    %314 = tpu.matmul %313, %13, %cst_70 {dimension_numbers = #tpu.dot_dimension_numbers<[1], [0], [0], [1], [0, 0, 1, 1], [], []>} : vector<2x128xbf16>, vector<128x512xbf16>, vector<2x512xf32> -> vector<2x512xf32>
    %315 = arith.addf %312, %314 : vector<2x512xf32>
    %316 = vector.extract_strided_slice %315 {offsets = [0, 0], sizes = [2, 128], strides = [1, 1]} : vector<2x512xf32> to vector<2x128xf32>
    %317 = arith.negf %316 : vector<2x128xf32>
    %318 = math.exp %317 : vector<2x128xf32>
    %cst_71 = arith.constant 1.000000e+00 : f32
    %319 = vector.broadcast %cst_71 : f32 to vector<2x128xf32>
    %320 = arith.addf %319, %318 : vector<2x128xf32>
    %321 = arith.divf %319, %320 : vector<2x128xf32>
    %322 = vector.extract_strided_slice %315 {offsets = [0, 128], sizes = [2, 128], strides = [1, 1]} : vector<2x512xf32> to vector<2x128xf32>
    %323 = arith.negf %322 : vector<2x128xf32>
    %324 = math.exp %323 : vector<2x128xf32>
    %cst_72 = arith.constant 1.000000e+00 : f32
    %325 = vector.broadcast %cst_72 : f32 to vector<2x128xf32>
    %326 = arith.addf %325, %324 : vector<2x128xf32>
    %327 = arith.divf %325, %326 : vector<2x128xf32>
    %328 = vector.extract_strided_slice %315 {offsets = [0, 256], sizes = [2, 128], strides = [1, 1]} : vector<2x512xf32> to vector<2x128xf32>
    %329 = math.tanh %328 : vector<2x128xf32>
    %330 = vector.extract_strided_slice %315 {offsets = [0, 384], sizes = [2, 128], strides = [1, 1]} : vector<2x512xf32> to vector<2x128xf32>
    %331 = arith.negf %330 : vector<2x128xf32>
    %332 = math.exp %331 : vector<2x128xf32>
    %cst_73 = arith.constant 1.000000e+00 : f32
    %333 = vector.broadcast %cst_73 : f32 to vector<2x128xf32>
    %334 = arith.addf %333, %332 : vector<2x128xf32>
    %335 = arith.divf %333, %334 : vector<2x128xf32>
    %336 = arith.mulf %327, %273 : vector<2x128xf32>
    %337 = arith.mulf %321, %329 : vector<2x128xf32>
    %338 = arith.addf %336, %337 : vector<2x128xf32>
    %339 = math.tanh %338 : vector<2x128xf32>
    %340 = arith.mulf %335, %339 : vector<2x128xf32>
    %cst_74 = arith.constant 0.000000e+00 : f32
    %341 = vector.broadcast %cst_74 : f32 to vector<2x128xf32>
    %342 = arith.maximumf %340, %341 : vector<2x128xf32>
    %343 = vector.extract_strided_slice %5 {offsets = [10, 0], sizes = [2, 512], strides = [1, 1]} : vector<16x512xf32> to vector<2x512xf32>
    %344 = arith.truncf %306 : vector<2x128xf32> to vector<2x128xbf16>
    %cst_75 = arith.constant dense<0.000000e+00> : vector<2x512xf32>
    %345 = tpu.matmul %344, %11, %cst_75 {dimension_numbers = #tpu.dot_dimension_numbers<[1], [0], [0], [1], [0, 0, 1, 1], [], []>} : vector<2x128xbf16>, vector<128x512xbf16>, vector<2x512xf32> -> vector<2x512xf32>
    %346 = arith.addf %343, %345 : vector<2x512xf32>
    %347 = vector.extract_strided_slice %346 {offsets = [0, 0], sizes = [2, 128], strides = [1, 1]} : vector<2x512xf32> to vector<2x128xf32>
    %348 = arith.negf %347 : vector<2x128xf32>
    %349 = math.exp %348 : vector<2x128xf32>
    %cst_76 = arith.constant 1.000000e+00 : f32
    %350 = vector.broadcast %cst_76 : f32 to vector<2x128xf32>
    %351 = arith.addf %350, %349 : vector<2x128xf32>
    %352 = arith.divf %350, %351 : vector<2x128xf32>
    %353 = vector.extract_strided_slice %346 {offsets = [0, 128], sizes = [2, 128], strides = [1, 1]} : vector<2x512xf32> to vector<2x128xf32>
    %354 = arith.negf %353 : vector<2x128xf32>
    %355 = math.exp %354 : vector<2x128xf32>
    %cst_77 = arith.constant 1.000000e+00 : f32
    %356 = vector.broadcast %cst_77 : f32 to vector<2x128xf32>
    %357 = arith.addf %356, %355 : vector<2x128xf32>
    %358 = arith.divf %356, %357 : vector<2x128xf32>
    %359 = vector.extract_strided_slice %346 {offsets = [0, 256], sizes = [2, 128], strides = [1, 1]} : vector<2x512xf32> to vector<2x128xf32>
    %360 = math.tanh %359 : vector<2x128xf32>
    %361 = vector.extract_strided_slice %346 {offsets = [0, 384], sizes = [2, 128], strides = [1, 1]} : vector<2x512xf32> to vector<2x128xf32>
    %362 = arith.negf %361 : vector<2x128xf32>
    %363 = math.exp %362 : vector<2x128xf32>
    %cst_78 = arith.constant 1.000000e+00 : f32
    %364 = vector.broadcast %cst_78 : f32 to vector<2x128xf32>
    %365 = arith.addf %364, %363 : vector<2x128xf32>
    %366 = arith.divf %364, %365 : vector<2x128xf32>
    %367 = arith.mulf %358, %304 : vector<2x128xf32>
    %368 = arith.mulf %352, %360 : vector<2x128xf32>
    %369 = arith.addf %367, %368 : vector<2x128xf32>
    %370 = math.tanh %369 : vector<2x128xf32>
    %371 = arith.mulf %366, %370 : vector<2x128xf32>
    %cst_79 = arith.constant 0.000000e+00 : f32
    %372 = vector.broadcast %cst_79 : f32 to vector<2x128xf32>
    %373 = arith.maximumf %371, %372 : vector<2x128xf32>
    %374 = vector.extract_strided_slice %10 {offsets = [10, 0], sizes = [2, 512], strides = [1, 1]} : vector<16x512xf32> to vector<2x512xf32>
    %375 = arith.truncf %373 : vector<2x128xf32> to vector<2x128xbf16>
    %cst_80 = arith.constant dense<0.000000e+00> : vector<2x512xf32>
    %376 = tpu.matmul %375, %12, %cst_80 {dimension_numbers = #tpu.dot_dimension_numbers<[1], [0], [0], [1], [0, 0, 1, 1], [], []>} : vector<2x128xbf16>, vector<128x512xbf16>, vector<2x512xf32> -> vector<2x512xf32>
    %377 = arith.addf %374, %376 : vector<2x512xf32>
    %378 = arith.truncf %340 : vector<2x128xf32> to vector<2x128xbf16>
    %cst_81 = arith.constant dense<0.000000e+00> : vector<2x512xf32>
    %379 = tpu.matmul %378, %13, %cst_81 {dimension_numbers = #tpu.dot_dimension_numbers<[1], [0], [0], [1], [0, 0, 1, 1], [], []>} : vector<2x128xbf16>, vector<128x512xbf16>, vector<2x512xf32> -> vector<2x512xf32>
    %380 = arith.addf %377, %379 : vector<2x512xf32>
    %381 = vector.extract_strided_slice %380 {offsets = [0, 0], sizes = [2, 128], strides = [1, 1]} : vector<2x512xf32> to vector<2x128xf32>
    %382 = arith.negf %381 : vector<2x128xf32>
    %383 = math.exp %382 : vector<2x128xf32>
    %cst_82 = arith.constant 1.000000e+00 : f32
    %384 = vector.broadcast %cst_82 : f32 to vector<2x128xf32>
    %385 = arith.addf %384, %383 : vector<2x128xf32>
    %386 = arith.divf %384, %385 : vector<2x128xf32>
    %387 = vector.extract_strided_slice %380 {offsets = [0, 128], sizes = [2, 128], strides = [1, 1]} : vector<2x512xf32> to vector<2x128xf32>
    %388 = arith.negf %387 : vector<2x128xf32>
    %389 = math.exp %388 : vector<2x128xf32>
    %cst_83 = arith.constant 1.000000e+00 : f32
    %390 = vector.broadcast %cst_83 : f32 to vector<2x128xf32>
    %391 = arith.addf %390, %389 : vector<2x128xf32>
    %392 = arith.divf %390, %391 : vector<2x128xf32>
    %393 = vector.extract_strided_slice %380 {offsets = [0, 256], sizes = [2, 128], strides = [1, 1]} : vector<2x512xf32> to vector<2x128xf32>
    %394 = math.tanh %393 : vector<2x128xf32>
    %395 = vector.extract_strided_slice %380 {offsets = [0, 384], sizes = [2, 128], strides = [1, 1]} : vector<2x512xf32> to vector<2x128xf32>
    %396 = arith.negf %395 : vector<2x128xf32>
    %397 = math.exp %396 : vector<2x128xf32>
    %cst_84 = arith.constant 1.000000e+00 : f32
    %398 = vector.broadcast %cst_84 : f32 to vector<2x128xf32>
    %399 = arith.addf %398, %397 : vector<2x128xf32>
    %400 = arith.divf %398, %399 : vector<2x128xf32>
    %401 = arith.mulf %392, %338 : vector<2x128xf32>
    %402 = arith.mulf %386, %394 : vector<2x128xf32>
    %403 = arith.addf %401, %402 : vector<2x128xf32>
    %404 = math.tanh %403 : vector<2x128xf32>
    %405 = arith.mulf %400, %404 : vector<2x128xf32>
    %cst_85 = arith.constant 0.000000e+00 : f32
    %406 = vector.broadcast %cst_85 : f32 to vector<2x128xf32>
    %407 = arith.maximumf %405, %406 : vector<2x128xf32>
    %408 = vector.extract_strided_slice %5 {offsets = [12, 0], sizes = [2, 512], strides = [1, 1]} : vector<16x512xf32> to vector<2x512xf32>
    %409 = arith.truncf %371 : vector<2x128xf32> to vector<2x128xbf16>
    %cst_86 = arith.constant dense<0.000000e+00> : vector<2x512xf32>
    %410 = tpu.matmul %409, %11, %cst_86 {dimension_numbers = #tpu.dot_dimension_numbers<[1], [0], [0], [1], [0, 0, 1, 1], [], []>} : vector<2x128xbf16>, vector<128x512xbf16>, vector<2x512xf32> -> vector<2x512xf32>
    %411 = arith.addf %408, %410 : vector<2x512xf32>
    %412 = vector.extract_strided_slice %411 {offsets = [0, 0], sizes = [2, 128], strides = [1, 1]} : vector<2x512xf32> to vector<2x128xf32>
    %413 = arith.negf %412 : vector<2x128xf32>
    %414 = math.exp %413 : vector<2x128xf32>
    %cst_87 = arith.constant 1.000000e+00 : f32
    %415 = vector.broadcast %cst_87 : f32 to vector<2x128xf32>
    %416 = arith.addf %415, %414 : vector<2x128xf32>
    %417 = arith.divf %415, %416 : vector<2x128xf32>
    %418 = vector.extract_strided_slice %411 {offsets = [0, 128], sizes = [2, 128], strides = [1, 1]} : vector<2x512xf32> to vector<2x128xf32>
    %419 = arith.negf %418 : vector<2x128xf32>
    %420 = math.exp %419 : vector<2x128xf32>
    %cst_88 = arith.constant 1.000000e+00 : f32
    %421 = vector.broadcast %cst_88 : f32 to vector<2x128xf32>
    %422 = arith.addf %421, %420 : vector<2x128xf32>
    %423 = arith.divf %421, %422 : vector<2x128xf32>
    %424 = vector.extract_strided_slice %411 {offsets = [0, 256], sizes = [2, 128], strides = [1, 1]} : vector<2x512xf32> to vector<2x128xf32>
    %425 = math.tanh %424 : vector<2x128xf32>
    %426 = vector.extract_strided_slice %411 {offsets = [0, 384], sizes = [2, 128], strides = [1, 1]} : vector<2x512xf32> to vector<2x128xf32>
    %427 = arith.negf %426 : vector<2x128xf32>
    %428 = math.exp %427 : vector<2x128xf32>
    %cst_89 = arith.constant 1.000000e+00 : f32
    %429 = vector.broadcast %cst_89 : f32 to vector<2x128xf32>
    %430 = arith.addf %429, %428 : vector<2x128xf32>
    %431 = arith.divf %429, %430 : vector<2x128xf32>
    %432 = arith.mulf %423, %369 : vector<2x128xf32>
    %433 = arith.mulf %417, %425 : vector<2x128xf32>
    %434 = arith.addf %432, %433 : vector<2x128xf32>
    %435 = math.tanh %434 : vector<2x128xf32>
    %436 = arith.mulf %431, %435 : vector<2x128xf32>
    %cst_90 = arith.constant 0.000000e+00 : f32
    %437 = vector.broadcast %cst_90 : f32 to vector<2x128xf32>
    %438 = arith.maximumf %436, %437 : vector<2x128xf32>
    %439 = vector.extract_strided_slice %10 {offsets = [12, 0], sizes = [2, 512], strides = [1, 1]} : vector<16x512xf32> to vector<2x512xf32>
    %440 = arith.truncf %438 : vector<2x128xf32> to vector<2x128xbf16>
    %cst_91 = arith.constant dense<0.000000e+00> : vector<2x512xf32>
    %441 = tpu.matmul %440, %12, %cst_91 {dimension_numbers = #tpu.dot_dimension_numbers<[1], [0], [0], [1], [0, 0, 1, 1], [], []>} : vector<2x128xbf16>, vector<128x512xbf16>, vector<2x512xf32> -> vector<2x512xf32>
    %442 = arith.addf %439, %441 : vector<2x512xf32>
    %443 = arith.truncf %405 : vector<2x128xf32> to vector<2x128xbf16>
    %cst_92 = arith.constant dense<0.000000e+00> : vector<2x512xf32>
    %444 = tpu.matmul %443, %13, %cst_92 {dimension_numbers = #tpu.dot_dimension_numbers<[1], [0], [0], [1], [0, 0, 1, 1], [], []>} : vector<2x128xbf16>, vector<128x512xbf16>, vector<2x512xf32> -> vector<2x512xf32>
    %445 = arith.addf %442, %444 : vector<2x512xf32>
    %446 = vector.extract_strided_slice %445 {offsets = [0, 0], sizes = [2, 128], strides = [1, 1]} : vector<2x512xf32> to vector<2x128xf32>
    %447 = arith.negf %446 : vector<2x128xf32>
    %448 = math.exp %447 : vector<2x128xf32>
    %cst_93 = arith.constant 1.000000e+00 : f32
    %449 = vector.broadcast %cst_93 : f32 to vector<2x128xf32>
    %450 = arith.addf %449, %448 : vector<2x128xf32>
    %451 = arith.divf %449, %450 : vector<2x128xf32>
    %452 = vector.extract_strided_slice %445 {offsets = [0, 128], sizes = [2, 128], strides = [1, 1]} : vector<2x512xf32> to vector<2x128xf32>
    %453 = arith.negf %452 : vector<2x128xf32>
    %454 = math.exp %453 : vector<2x128xf32>
    %cst_94 = arith.constant 1.000000e+00 : f32
    %455 = vector.broadcast %cst_94 : f32 to vector<2x128xf32>
    %456 = arith.addf %455, %454 : vector<2x128xf32>
    %457 = arith.divf %455, %456 : vector<2x128xf32>
    %458 = vector.extract_strided_slice %445 {offsets = [0, 256], sizes = [2, 128], strides = [1, 1]} : vector<2x512xf32> to vector<2x128xf32>
    %459 = math.tanh %458 : vector<2x128xf32>
    %460 = vector.extract_strided_slice %445 {offsets = [0, 384], sizes = [2, 128], strides = [1, 1]} : vector<2x512xf32> to vector<2x128xf32>
    %461 = arith.negf %460 : vector<2x128xf32>
    %462 = math.exp %461 : vector<2x128xf32>
    %cst_95 = arith.constant 1.000000e+00 : f32
    %463 = vector.broadcast %cst_95 : f32 to vector<2x128xf32>
    %464 = arith.addf %463, %462 : vector<2x128xf32>
    %465 = arith.divf %463, %464 : vector<2x128xf32>
    %466 = arith.mulf %457, %403 : vector<2x128xf32>
    %467 = arith.mulf %451, %459 : vector<2x128xf32>
    %468 = arith.addf %466, %467 : vector<2x128xf32>
    %469 = math.tanh %468 : vector<2x128xf32>
    %470 = arith.mulf %465, %469 : vector<2x128xf32>
    %cst_96 = arith.constant 0.000000e+00 : f32
    %471 = vector.broadcast %cst_96 : f32 to vector<2x128xf32>
    %472 = arith.maximumf %470, %471 : vector<2x128xf32>
    %473 = vector.extract_strided_slice %5 {offsets = [14, 0], sizes = [2, 512], strides = [1, 1]} : vector<16x512xf32> to vector<2x512xf32>
    %474 = arith.truncf %436 : vector<2x128xf32> to vector<2x128xbf16>
    %cst_97 = arith.constant dense<0.000000e+00> : vector<2x512xf32>
    %475 = tpu.matmul %474, %11, %cst_97 {dimension_numbers = #tpu.dot_dimension_numbers<[1], [0], [0], [1], [0, 0, 1, 1], [], []>} : vector<2x128xbf16>, vector<128x512xbf16>, vector<2x512xf32> -> vector<2x512xf32>
    %476 = arith.addf %473, %475 : vector<2x512xf32>
    %477 = vector.extract_strided_slice %476 {offsets = [0, 0], sizes = [2, 128], strides = [1, 1]} : vector<2x512xf32> to vector<2x128xf32>
    %478 = arith.negf %477 : vector<2x128xf32>
    %479 = math.exp %478 : vector<2x128xf32>
    %cst_98 = arith.constant 1.000000e+00 : f32
    %480 = vector.broadcast %cst_98 : f32 to vector<2x128xf32>
    %481 = arith.addf %480, %479 : vector<2x128xf32>
    %482 = arith.divf %480, %481 : vector<2x128xf32>
    %483 = vector.extract_strided_slice %476 {offsets = [0, 128], sizes = [2, 128], strides = [1, 1]} : vector<2x512xf32> to vector<2x128xf32>
    %484 = arith.negf %483 : vector<2x128xf32>
    %485 = math.exp %484 : vector<2x128xf32>
    %cst_99 = arith.constant 1.000000e+00 : f32
    %486 = vector.broadcast %cst_99 : f32 to vector<2x128xf32>
    %487 = arith.addf %486, %485 : vector<2x128xf32>
    %488 = arith.divf %486, %487 : vector<2x128xf32>
    %489 = vector.extract_strided_slice %476 {offsets = [0, 256], sizes = [2, 128], strides = [1, 1]} : vector<2x512xf32> to vector<2x128xf32>
    %490 = math.tanh %489 : vector<2x128xf32>
    %491 = vector.extract_strided_slice %476 {offsets = [0, 384], sizes = [2, 128], strides = [1, 1]} : vector<2x512xf32> to vector<2x128xf32>
    %492 = arith.negf %491 : vector<2x128xf32>
    %493 = math.exp %492 : vector<2x128xf32>
    %cst_100 = arith.constant 1.000000e+00 : f32
    %494 = vector.broadcast %cst_100 : f32 to vector<2x128xf32>
    %495 = arith.addf %494, %493 : vector<2x128xf32>
    %496 = arith.divf %494, %495 : vector<2x128xf32>
    %497 = arith.mulf %488, %434 : vector<2x128xf32>
    %498 = arith.mulf %482, %490 : vector<2x128xf32>
    %499 = arith.addf %497, %498 : vector<2x128xf32>
    %500 = math.tanh %499 : vector<2x128xf32>
    %501 = arith.mulf %496, %500 : vector<2x128xf32>
    %cst_101 = arith.constant 0.000000e+00 : f32
    %502 = vector.broadcast %cst_101 : f32 to vector<2x128xf32>
    %503 = arith.maximumf %501, %502 : vector<2x128xf32>
    %504 = vector.extract_strided_slice %10 {offsets = [14, 0], sizes = [2, 512], strides = [1, 1]} : vector<16x512xf32> to vector<2x512xf32>
    %505 = arith.truncf %503 : vector<2x128xf32> to vector<2x128xbf16>
    %cst_102 = arith.constant dense<0.000000e+00> : vector<2x512xf32>
    %506 = tpu.matmul %505, %12, %cst_102 {dimension_numbers = #tpu.dot_dimension_numbers<[1], [0], [0], [1], [0, 0, 1, 1], [], []>} : vector<2x128xbf16>, vector<128x512xbf16>, vector<2x512xf32> -> vector<2x512xf32>
    %507 = arith.addf %504, %506 : vector<2x512xf32>
    %508 = arith.truncf %470 : vector<2x128xf32> to vector<2x128xbf16>
    %cst_103 = arith.constant dense<0.000000e+00> : vector<2x512xf32>
    %509 = tpu.matmul %508, %13, %cst_103 {dimension_numbers = #tpu.dot_dimension_numbers<[1], [0], [0], [1], [0, 0, 1, 1], [], []>} : vector<2x128xbf16>, vector<128x512xbf16>, vector<2x512xf32> -> vector<2x512xf32>
    %510 = arith.addf %507, %509 : vector<2x512xf32>
    %511 = vector.extract_strided_slice %510 {offsets = [0, 0], sizes = [2, 128], strides = [1, 1]} : vector<2x512xf32> to vector<2x128xf32>
    %512 = arith.negf %511 : vector<2x128xf32>
    %513 = math.exp %512 : vector<2x128xf32>
    %cst_104 = arith.constant 1.000000e+00 : f32
    %514 = vector.broadcast %cst_104 : f32 to vector<2x128xf32>
    %515 = arith.addf %514, %513 : vector<2x128xf32>
    %516 = arith.divf %514, %515 : vector<2x128xf32>
    %517 = vector.extract_strided_slice %510 {offsets = [0, 128], sizes = [2, 128], strides = [1, 1]} : vector<2x512xf32> to vector<2x128xf32>
    %518 = arith.negf %517 : vector<2x128xf32>
    %519 = math.exp %518 : vector<2x128xf32>
    %cst_105 = arith.constant 1.000000e+00 : f32
    %520 = vector.broadcast %cst_105 : f32 to vector<2x128xf32>
    %521 = arith.addf %520, %519 : vector<2x128xf32>
    %522 = arith.divf %520, %521 : vector<2x128xf32>
    %523 = vector.extract_strided_slice %510 {offsets = [0, 256], sizes = [2, 128], strides = [1, 1]} : vector<2x512xf32> to vector<2x128xf32>
    %524 = math.tanh %523 : vector<2x128xf32>
    %525 = vector.extract_strided_slice %510 {offsets = [0, 384], sizes = [2, 128], strides = [1, 1]} : vector<2x512xf32> to vector<2x128xf32>
    %526 = arith.negf %525 : vector<2x128xf32>
    %527 = math.exp %526 : vector<2x128xf32>
    %cst_106 = arith.constant 1.000000e+00 : f32
    %528 = vector.broadcast %cst_106 : f32 to vector<2x128xf32>
    %529 = arith.addf %528, %527 : vector<2x128xf32>
    %530 = arith.divf %528, %529 : vector<2x128xf32>
    %531 = arith.mulf %522, %468 : vector<2x128xf32>
    %532 = arith.mulf %516, %524 : vector<2x128xf32>
    %533 = arith.addf %531, %532 : vector<2x128xf32>
    %534 = math.tanh %533 : vector<2x128xf32>
    %535 = arith.mulf %530, %534 : vector<2x128xf32>
    %cst_107 = arith.constant 0.000000e+00 : f32
    %536 = vector.broadcast %cst_107 : f32 to vector<2x128xf32>
    %537 = arith.maximumf %535, %536 : vector<2x128xf32>
    %538 = tpu.concatenate %82, %147, %212, %277, %342, %407, %472, %537 in 1 : vector<2x128xf32>, vector<2x128xf32>, vector<2x128xf32>, vector<2x128xf32>, vector<2x128xf32>, vector<2x128xf32>, vector<2x128xf32>, vector<2x128xf32> -> vector<2x1024xf32>
    %c0_108 = arith.constant 0 : index
    %c0_109 = arith.constant 0 : index
    %539 = vector.load %arg8[%c0_108, %c0_109] : memref<2x1024xf32, #tpu.memory_space<vmem>>, vector<2x1024xf32>
    tpu.vector_store %arg8[%c0_108, %c0_109], %538 {strides = array<i32>} : memref<2x1024xf32, #tpu.memory_space<vmem>>, vector<2x1024xf32>,
    return
  }
}

</mosaic_0001>

<llo_original>
// kernel: lstmae_forward.1
$region0: #{lstmae_forward.1}
  #allocation0 [shape = 'u32[]', space=smem, size = 0x4, offset = 0x4, fixed_abs, tag = 'smem constant byte address 0x4 - core index']
  #allocation1 [shape = 'u32[72,128]{1,0:T(1,128)}', space=vmem, size = 0x9000, scoped, tag = 'internal scratch']
  %s0 = inlined_call_operand.vmem [shape: bf16[16,16], index: 0, kind: input, shape index: {}]
  %s1 = inlined_call_operand.vmem [shape: bf16[16,512], index: 1, kind: input, shape index: {}]
  %s2 = inlined_call_operand.hbm [shape: bf16[128,512], index: 2, kind: input, shape index: {}]
  %s3 = inlined_call_operand.vmem [shape: f32[1,512], index: 3, kind: input, shape index: {}]
  %s4 = inlined_call_operand.hbm [shape: bf16[16,512], index: 4, kind: input, shape index: {}]
  %s5 = inlined_call_operand.hbm [shape: bf16[128,512], index: 5, kind: input, shape index: {}]
  %s6 = inlined_call_operand.hbm [shape: bf16[128,512], index: 6, kind: input, shape index: {}]
  %s7 = inlined_call_operand.vmem [shape: f32[1,512], index: 7, kind: input, shape index: {}]
  %s8 = inlined_call_operand.vmem [shape: f32[2,1024], index: 8, kind: output, shape index: {}]
  %s9 = sld [smem:[#allocation0]]
  $region58: #{lstmae_forward.1} parent=0
    _
  %s11 = ssub.s32 1, %s9
  %s12 = scalar_select 0, %s11, %s9
  $region1: #{lstmae_forward.1} parent=0
    #allocation2 [shape = 'u8[131072]{0}', space=vmem, size = 0x20000, scoped, tag = 'input window, operand 2, single buffered']
    #allocation3 [shape = 's32[1]{0}', space=sflag, size = 0x4, scoped, tag = 'scoped memory for lstmae_forward.1']
    #allocation4 [shape = 'u8[16384]{0}', space=vmem, size = 0x4000, scoped, tag = 'input window, operand 4, single buffered']
    #allocation5 [shape = 's32[1]{0}', space=sflag, size = 0x4, scoped, tag = 'scoped memory for lstmae_forward.1']
    #allocation6 [shape = 'u8[131072]{0}', space=vmem, size = 0x20000, scoped, tag = 'input window, operand 5, single buffered']
    #allocation7 [shape = 'u8[131072]{0}', space=vmem, size = 0x20000, scoped, tag = 'input window, operand 6, single buffered']
    #allocation8 [shape = 's32[1]{0}', space=sflag, size = 0x4, scoped, tag = 'scoped memory for lstmae_forward.1']
    %13 = vsyncpa [#allocation3], 0
    %14 = vsyncpa [#allocation5], 0
    %15 = vsyncpa [#allocation8], 0
    // Predicated region
    $region2: #{lstmae_forward.1} parent=1 // pred_check
      _
    $region3: #{lstmae_forward.1} parent=1 // pred_check_branch
      %17 = sbr.rel (0) target = $region5
    $region4: #{lstmae_forward.1} parent=1 // pred_region
      _
    $region5: #{lstmae_forward.1} parent=1 // pred_fallthru
      _
    // Predicated region
    $region6: #{lstmae_forward.1} parent=1 // pred_check
      _
    $region7: #{lstmae_forward.1} parent=1 // pred_check_branch
      %19 = sbr.rel (0) target = $region9
    $region8: #{lstmae_forward.1} parent=1 // pred_region
      _
    $region9: #{lstmae_forward.1} parent=1 // pred_fallthru
      _
    // Predicated region
    $region10: #{lstmae_forward.1} parent=1 // pred_check
      _
    $region11: #{lstmae_forward.1} parent=1 // pred_check_branch
      %21 = sbr.rel (0) target = $region13
    $region12: #{lstmae_forward.1} parent=1 // pred_region
      %23 = vsyncadd [#allocation3], 0
      %s24 = sshll.u32 %s2, 4
      %s25 = int_to_ptr.hbm [resolvable:$true] %s24
      %s26 = sshll.u32 [#allocation2], 4
      %s27 = int_to_ptr.vmem [resolvable:$true] %s26
      %32 = dma.hbm_to_vmem [thread:$0]  %s25, 4096, %s27, [#allocation3], 256, 256, 16
    $region13: #{lstmae_forward.1} parent=1 // pred_fallthru
      _
    // Predicated region
    $region14: #{lstmae_forward.1} parent=1 // pred_check
      _
    $region15: #{lstmae_forward.1} parent=1 // pred_check_branch
      %34 = sbr.rel (0) target = $region17
    $region16: #{lstmae_forward.1} parent=1 // pred_region
      _
    $region17: #{lstmae_forward.1} parent=1 // pred_fallthru
      _
    // Predicated region
    $region18: #{lstmae_forward.1} parent=1 // pred_check
      _
    $region19: #{lstmae_forward.1} parent=1 // pred_check_branch
      %36 = sbr.rel (0) target = $region21
    $region20: #{lstmae_forward.1} parent=1 // pred_region
      %38 = vsyncadd [#allocation5], 0
      %s39 = sshll.u32 %s4, 4
      %s40 = int_to_ptr.hbm [resolvable:$true] %s39
      %s41 = sshll.u32 [#allocation4], 4
      %s42 = int_to_ptr.vmem [resolvable:$true] %s41
      %47 = dma.hbm_to_vmem [thread:$0]  %s40, 512, %s42, [#allocation5], 256, 256, 16
    $region21: #{lstmae_forward.1} parent=1 // pred_fallthru
      _
    // Predicated region
    $region22: #{lstmae_forward.1} parent=1 // pred_check
      _
    $region23: #{lstmae_forward.1} parent=1 // pred_check_branch
      %49 = sbr.rel (0) target = $region25
    $region24: #{lstmae_forward.1} parent=1 // pred_region
      %51 = vsyncadd [#allocation5], 0
      %s52 = sshll.u32 %s5, 4
      %s53 = int_to_ptr.hbm [resolvable:$true] %s52
      %s54 = sshll.u32 [#allocation6], 4
      %s55 = int_to_ptr.vmem [resolvable:$true] %s54
      %60 = dma.hbm_to_vmem [thread:$0]  %s53, 4096, %s55, [#allocation5], 256, 256, 16
    $region25: #{lstmae_forward.1} parent=1 // pred_fallthru
      _
    // Predicated region
    $region26: #{lstmae_forward.1} parent=1 // pred_check
      _
    $region27: #{lstmae_forward.1} parent=1 // pred_check_branch
      %62 = sbr.rel (0) target = $region29
    $region28: #{lstmae_forward.1} parent=1 // pred_region
      %64 = vsyncadd [#allocation8], 0
      %s65 = sshll.u32 %s6, 4
      %s66 = int_to_ptr.hbm [resolvable:$true] %s65
      %s67 = sshll.u32 [#allocation7], 4
      %s68 = int_to_ptr.vmem [resolvable:$true] %s67
      %73 = dma.hbm_to_vmem [thread:$0]  %s66, 4096, %s68, [#allocation8], 256, 256, 16
    $region29: #{lstmae_forward.1} parent=1 // pred_fallthru
      _
    // Predicated region
    $region30: #{lstmae_forward.1} parent=1 // pred_check
      _
    $region31: #{lstmae_forward.1} parent=1 // pred_check_branch
      %75 = sbr.rel (0) target = $region33
    $region32: #{lstmae_forward.1} parent=1 // pred_region
      _
    $region33: #{lstmae_forward.1} parent=1 // pred_fallthru
      _
    // Predicated region
    $region34: #{lstmae_forward.1} parent=1 // pred_check
      _
    $region35: #{lstmae_forward.1} parent=1 // pred_check_branch
      %77 = sbr.rel (0) target = $region37
    $region36: #{lstmae_forward.1} parent=1 // pred_region
      %79 = dma.done [#allocation3], 4096
    $region37: #{lstmae_forward.1} parent=1 // pred_fallthru
      _
    // Predicated region
    $region38: #{lstmae_forward.1} parent=1 // pred_check
      _
    $region39: #{lstmae_forward.1} parent=1 // pred_check_branch
      %81 = sbr.rel (0) target = $region41
    $region40: #{lstmae_forward.1} parent=1 // pred_region
      %83 = dma.done [#allocation5], 512
    $region41: #{lstmae_forward.1} parent=1 // pred_fallthru
      _
    // Predicated region
    $region42: #{lstmae_forward.1} parent=1 // pred_check
      _
    $region43: #{lstmae_forward.1} parent=1 // pred_check_branch
      %85 = sbr.rel (0) target = $region45
    $region44: #{lstmae_forward.1} parent=1 // pred_region
      %87 = dma.done [#allocation5], 4096
    $region45: #{lstmae_forward.1} parent=1 // pred_fallthru
      _
    // Predicated region
    $region46: #{lstmae_forward.1} parent=1 // pred_check
      _
    $region47: #{lstmae_forward.1} parent=1 // pred_check_branch
      %89 = sbr.rel (0) target = $region49
    $region48: #{lstmae_forward.1} parent=1 // pred_region
      %91 = dma.done [#allocation8], 4096
    $region49: #{lstmae_forward.1} parent=1 // pred_fallthru
      _
    %v93 = vld [vmem:[%s0] sm:$0xf]
    %v94 = vld [vmem:[%s0 + $0x4] sm:$0xf]
    %v95 = vld [vmem:[%s1] sm:$0xff]
    %v96 = vld [vmem:[%s1 + $0x8] sm:$0xff]
    %v97 = vld [vmem:[%s1 + $0x10] sm:$0xff]
    %v98 = vld [vmem:[%s1 + $0x18] sm:$0xff]
    %v99 = vld [vmem:[%s3] sm:$0xf]
    %v101 = vperm.slane %v99, 0
    %v102 = vperm.slane %v99, 1
    %v103 = vperm.slane %v99, 2
    %v104 = vperm.slane %v99, 3
    %v111 = vunpack.c.l.b16 %v93
    %v112 = vunpack.c.l.b16 %v94
    %v113 = vpack.c.b16 %v112, %v111
    %v118 = vunpack.c.l.b16 %v95
    %v119 = vunpack.c.h.b16 %v95
    %v120 = vunpack.c.l.b16 %v96
    %v121 = vunpack.c.h.b16 %v96
    %v122 = vunpack.c.l.b16 %v97
    %v123 = vunpack.c.h.b16 %v97
    %v124 = vunpack.c.l.b16 %v98
    %v125 = vunpack.c.h.b16 %v98
    %v126 = vpack.c.b16 %v122, %v118
    %v127 = vpack.c.b16 %v123, %v119
    %v128 = vpack.c.b16 %v124, %v120
    %v129 = vpack.c.b16 %v125, %v121
    %vm134 = vcmask 130048
    %v136 = vsel %vm134, %v113, 0
    %138 = vmatpush.bf16.msra.mxu0 0
    %139 = vmatpush.bf16.msra.mxu0 0
    %140 = vmatpush.bf16.msra.mxu0 0
    %141 = vmatpush.bf16.msra.mxu0 0
    %142 = vmatpush.bf16.msra.mxu0 0
    %143 = vmatpush.bf16.msra.mxu0 0
    %144 = vmatpush.bf16.msra.mxu0 0
    %145 = vmatpush.bf16.msra.mxu0 %v126
    %146 = vmatmul.bf16.gmra.mxu0 %v136
    %v147 = vpop.f32.mrf.mxu0
    %v148 = vadd.f32 %v101, %v147
    %v149 = vpop.f32.mrf.mxu0
    %v150 = vadd.f32 %v101, %v149
    %151 = vdwg.mxu0
    %152 = vmatpush.bf16.msra.mxu0 0
    %153 = vmatpush.bf16.msra.mxu0 0
    %154 = vmatpush.bf16.msra.mxu0 0
    %155 = vmatpush.bf16.msra.mxu0 0
    %156 = vmatpush.bf16.msra.mxu0 0
    %157 = vmatpush.bf16.msra.mxu0 0
    %158 = vmatpush.bf16.msra.mxu0 0
    %159 = vmatpush.bf16.msra.mxu0 %v127
    %160 = vmatmul.bf16.gmra.mxu0 %v136
    %v161 = vpop.f32.mrf.mxu0
    %v162 = vadd.f32 %v102, %v161
    %v163 = vpop.f32.mrf.mxu0
    %v164 = vadd.f32 %v102, %v163
    %165 = vdwg.mxu0
    %166 = vmatpush.bf16.msra.mxu0 0
    %167 = vmatpush.bf16.msra.mxu0 0
    %168 = vmatpush.bf16.msra.mxu0 0
    %169 = vmatpush.bf16.msra.mxu0 0
    %170 = vmatpush.bf16.msra.mxu0 0
    %171 = vmatpush.bf16.msra.mxu0 0
    %172 = vmatpush.bf16.msra.mxu0 0
    %173 = vmatpush.bf16.msra.mxu0 %v128
    %174 = vmatmul.bf16.gmra.mxu0 %v136
    %v175 = vpop.f32.mrf.mxu0
    %v176 = vadd.f32 %v103, %v175
    %v177 = vpop.f32.mrf.mxu0
    %v178 = vadd.f32 %v103, %v177
    %179 = vdwg.mxu0
    %180 = vmatpush.bf16.msra.mxu0 0
    %181 = vmatpush.bf16.msra.mxu0 0
    %182 = vmatpush.bf16.msra.mxu0 0
    %183 = vmatpush.bf16.msra.mxu0 0
    %184 = vmatpush.bf16.msra.mxu0 0
    %185 = vmatpush.bf16.msra.mxu0 0
    %186 = vmatpush.bf16.msra.mxu0 0
    %187 = vmatpush.bf16.msra.mxu0 %v129
    %188 = vmatmul.bf16.gmra.mxu0 %v136
    %v189 = vpop.f32.mrf.mxu0
    %v190 = vadd.f32 %v104, %v189
    %v191 = vpop.f32.mrf.mxu0
    %v192 = vadd.f32 %v104, %v191
    %193 = vdwg.mxu0
    %v194 = vld [vmem:[#allocation4] sm:$0xff]
    %v195 = vld [vmem:[#allocation4 + $0x8] sm:$0xff]
    %v196 = vld [vmem:[#allocation4 + $0x10] sm:$0xff]
    %v197 = vld [vmem:[#allocation4 + $0x18] sm:$0xff]
    %v198 = vld [vmem:[%s7] sm:$0xf]
    %v200 = vperm.slane %v198, 0
    %v201 = vperm.slane %v198, 1
    %v202 = vperm.slane %v198, 2
    %v203 = vperm.slane %v198, 3
    %v212 = vunpack.c.l.b16 %v194
    %v213 = vunpack.c.h.b16 %v194
    %v214 = vunpack.c.l.b16 %v195
    %v215 = vunpack.c.h.b16 %v195
    %v216 = vunpack.c.l.b16 %v196
    %v217 = vunpack.c.h.b16 %v196
    %v218 = vunpack.c.l.b16 %v197
    %v219 = vunpack.c.h.b16 %v197
    %v220 = vpack.c.b16 %v216, %v212
    %v221 = vpack.c.b16 %v217, %v213
    %v222 = vpack.c.b16 %v218, %v214
    %v223 = vpack.c.b16 %v219, %v215
    %228 = vmatpush.bf16.msra.mxu0 0
    %229 = vmatpush.bf16.msra.mxu0 0
    %230 = vmatpush.bf16.msra.mxu0 0
    %231 = vmatpush.bf16.msra.mxu0 0
    %232 = vmatpush.bf16.msra.mxu0 0
    %233 = vmatpush.bf16.msra.mxu0 0
    %234 = vmatpush.bf16.msra.mxu0 0
    %235 = vmatpush.bf16.msra.mxu0 %v220
    %236 = vmatmul.bf16.gmra.mxu0 %v136
    %v237 = vpop.f32.mrf.mxu0
    %v238 = vadd.f32 %v200, %v237
    %v239 = vpop.f32.mrf.mxu0
    %v240 = vadd.f32 %v200, %v239
    %241 = vdwg.mxu0
    %242 = vmatpush.bf16.msra.mxu0 0
    %243 = vmatpush.bf16.msra.mxu0 0
    %244 = vmatpush.bf16.msra.mxu0 0
    %245 = vmatpush.bf16.msra.mxu0 0
    %246 = vmatpush.bf16.msra.mxu0 0
    %247 = vmatpush.bf16.msra.mxu0 0
    %248 = vmatpush.bf16.msra.mxu0 0
    %249 = vmatpush.bf16.msra.mxu0 %v221
    %250 = vmatmul.bf16.gmra.mxu0 %v136
    %v251 = vpop.f32.mrf.mxu0
    %v252 = vadd.f32 %v201, %v251
    %v253 = vpop.f32.mrf.mxu0
    %v254 = vadd.f32 %v201, %v253
    %255 = vdwg.mxu0
    %256 = vmatpush.bf16.msra.mxu0 0
    %257 = vmatpush.bf16.msra.mxu0 0
    %258 = vmatpush.bf16.msra.mxu0 0
    %259 = vmatpush.bf16.msra.mxu0 0
    %260 = vmatpush.bf16.msra.mxu0 0
    %261 = vmatpush.bf16.msra.mxu0 0
    %262 = vmatpush.bf16.msra.mxu0 0
    %263 = vmatpush.bf16.msra.mxu0 %v222
    %264 = vmatmul.bf16.gmra.mxu0 %v136
    %v265 = vpop.f32.mrf.mxu0
    %v266 = vadd.f32 %v202, %v265
    %v267 = vpop.f32.mrf.mxu0
    %v268 = vadd.f32 %v202, %v267
    %269 = vdwg.mxu0
    %270 = vmatpush.bf16.msra.mxu0 0
    %271 = vmatpush.bf16.msra.mxu0 0
    %272 = vmatpush.bf16.msra.mxu0 0
    %273 = vmatpush.bf16.msra.mxu0 0
    %274 = vmatpush.bf16.msra.mxu0 0
    %275 = vmatpush.bf16.msra.mxu0 0
    %276 = vmatpush.bf16.msra.mxu0 0
    %277 = vmatpush.bf16.msra.mxu0 %v223
    %278 = vmatmul.bf16.gmra.mxu0 %v136
    %v279 = vpop.f32.mrf.mxu0
    %v280 = vadd.f32 %v203, %v279
    %v281 = vpop.f32.mrf.mxu0
    %v282 = vadd.f32 %v203, %v281
    %283 = vdwg.mxu0
    %v284 = vld [vmem:[#allocation2] sm:$0xff]
    %v285 = vld [vmem:[#allocation2 + $0x8] sm:$0xff]
    %v286 = vld [vmem:[#allocation2 + $0x10] sm:$0xff]
    %v287 = vld [vmem:[#allocation2 + $0x18] sm:$0xff]
    %v288 = vld [vmem:[#allocation2 + $0x20] sm:$0xff]
    %v289 = vld [vmem:[#allocation2 + $0x28] sm:$0xff]
    %v290 = vld [vmem:[#allocation2 + $0x30] sm:$0xff]
    %v291 = vld [vmem:[#allocation2 + $0x38] sm:$0xff]
    %v292 = vld [vmem:[#allocation2 + $0x40] sm:$0xff]
    %v293 = vld [vmem:[#allocation2 + $0x48] sm:$0xff]
    %v294 = vld [vmem:[#allocation2 + $0x50] sm:$0xff]
    %v295 = vld [vmem:[#allocation2 + $0x58] sm:$0xff]
    %v296 = vld [vmem:[#allocation2 + $0x60] sm:$0xff]
    %v297 = vld [vmem:[#allocation2 + $0x68] sm:$0xff]
    %v298 = vld [vmem:[#allocation2 + $0x70] sm:$0xff]
    %v299 = vld [vmem:[#allocation2 + $0x78] sm:$0xff]
    %v300 = vld [vmem:[#allocation2 + $0x80] sm:$0xff]
    %v301 = vld [vmem:[#allocation2 + $0x88] sm:$0xff]
    %v302 = vld [vmem:[#allocation2 + $0x90] sm:$0xff]
    %v303 = vld [vmem:[#allocation2 + $0x98] sm:$0xff]
    %v304 = vld [vmem:[#allocation2 + $0xa0] sm:$0xff]
    %v305 = vld [vmem:[#allocation2 + $0xa8] sm:$0xff]
    %v306 = vld [vmem:[#allocation2 + $0xb0] sm:$0xff]
    %v307 = vld [vmem:[#allocation2 + $0xb8] sm:$0xff]
    %v308 = vld [vmem:[#allocation2 + $0xc0] sm:$0xff]
    %v309 = vld [vmem:[#allocation2 + $0xc8] sm:$0xff]
    %v310 = vld [vmem:[#allocation2 + $0xd0] sm:$0xff]
    %v311 = vld [vmem:[#allocation2 + $0xd8] sm:$0xff]
    %v312 = vld [vmem:[#allocation2 + $0xe0] sm:$0xff]
    %v313 = vld [vmem:[#allocation2 + $0xe8] sm:$0xff]
    %v314 = vld [vmem:[#allocation2 + $0xf0] sm:$0xff]
    %v315 = vld [vmem:[#allocation2 + $0xf8] sm:$0xff]
    %v316 = vld [vmem:[#allocation6] sm:$0xff]
    %v317 = vld [vmem:[#allocation6 + $0x8] sm:$0xff]
    %v318 = vld [vmem:[#allocation6 + $0x10] sm:$0xff]
    %v319 = vld [vmem:[#allocation6 + $0x18] sm:$0xff]
    %v320 = vld [vmem:[#allocation6 + $0x20] sm:$0xff]
    %v321 = vld [vmem:[#allocation6 + $0x28] sm:$0xff]
    %v322 = vld [vmem:[#allocation6 + $0x30] sm:$0xff]
    %v323 = vld [vmem:[#allocation6 + $0x38] sm:$0xff]
    %v324 = vld [vmem:[#allocation6 + $0x40] sm:$0xff]
    %v325 = vld [vmem:[#allocation6 + $0x48] sm:$0xff]
    %v326 = vld [vmem:[#allocation6 + $0x50] sm:$0xff]
    %v327 = vld [vmem:[#allocation6 + $0x58] sm:$0xff]
    %v328 = vld [vmem:[#allocation6 + $0x60] sm:$0xff]
    %v329 = vld [vmem:[#allocation6 + $0x68] sm:$0xff]
    %v330 = vld [vmem:[#allocation6 + $0x70] sm:$0xff]
    %v331 = vld [vmem:[#allocation6 + $0x78] sm:$0xff]
    %v332 = vld [vmem:[#allocation6 + $0x80] sm:$0xff]
    %v333 = vld [vmem:[#allocation6 + $0x88] sm:$0xff]
    %v334 = vld [vmem:[#allocation6 + $0x90] sm:$0xff]
    %v335 = vld [vmem:[#allocation6 + $0x98] sm:$0xff]
    %v336 = vld [vmem:[#allocation6 + $0xa0] sm:$0xff]
    %v337 = vld [vmem:[#allocation6 + $0xa8] sm:$0xff]
    %v338 = vld [vmem:[#allocation6 + $0xb0] sm:$0xff]
    %v339 = vld [vmem:[#allocation6 + $0xb8] sm:$0xff]
    %v340 = vld [vmem:[#allocation6 + $0xc0] sm:$0xff]
    %v341 = vld [vmem:[#allocation6 + $0xc8] sm:$0xff]
    %v342 = vld [vmem:[#allocation6 + $0xd0] sm:$0xff]
    %v343 = vld [vmem:[#allocation6 + $0xd8] sm:$0xff]
    %v344 = vld [vmem:[#allocation6 + $0xe0] sm:$0xff]
    %v345 = vld [vmem:[#allocation6 + $0xe8] sm:$0xff]
    %v346 = vld [vmem:[#allocation6 + $0xf0] sm:$0xff]
    %v347 = vld [vmem:[#allocation6 + $0xf8] sm:$0xff]
    %v348 = vld [vmem:[#allocation7] sm:$0xff]
    %v349 = vld [vmem:[#allocation7 + $0x8] sm:$0xff]
    %v350 = vld [vmem:[#allocation7 + $0x10] sm:$0xff]
    %v351 = vld [vmem:[#allocation7 + $0x18] sm:$0xff]
    %v352 = vld [vmem:[#allocation7 + $0x20] sm:$0xff]
    %v353 = vld [vmem:[#allocation7 + $0x28] sm:$0xff]
    %v354 = vld [vmem:[#allocation7 + $0x30] sm:$0xff]
    %v355 = vld [vmem:[#allocation7 + $0x38] sm:$0xff]
    %v356 = vld [vmem:[#allocation7 + $0x40] sm:$0xff]
    %v357 = vld [vmem:[#allocation7 + $0x48] sm:$0xff]
    %v358 = vld [vmem:[#allocation7 + $0x50] sm:$0xff]
    %v359 = vld [vmem:[#allocation7 + $0x58] sm:$0xff]
    %v360 = vld [vmem:[#allocation7 + $0x60] sm:$0xff]
    %v361 = vld [vmem:[#allocation7 + $0x68] sm:$0xff]
    %v362 = vld [vmem:[#allocation7 + $0x70] sm:$0xff]
    %v363 = vld [vmem:[#allocation7 + $0x78] sm:$0xff]
    %v364 = vld [vmem:[#allocation7 + $0x80] sm:$0xff]
    %v365 = vld [vmem:[#allocation7 + $0x88] sm:$0xff]
    %v366 = vld [vmem:[#allocation7 + $0x90] sm:$0xff]
    %v367 = vld [vmem:[#allocation7 + $0x98] sm:$0xff]
    %v368 = vld [vmem:[#allocation7 + $0xa0] sm:$0xff]
    %v369 = vld [vmem:[#allocation7 + $0xa8] sm:$0xff]
    %v370 = vld [vmem:[#allocation7 + $0xb0] sm:$0xff]
    %v371 = vld [vmem:[#allocation7 + $0xb8] sm:$0xff]
    %v372 = vld [vmem:[#allocation7 + $0xc0] sm:$0xff]
    %v373 = vld [vmem:[#allocation7 + $0xc8] sm:$0xff]
    %v374 = vld [vmem:[#allocation7 + $0xd0] sm:$0xff]
    %v375 = vld [vmem:[#allocation7 + $0xd8] sm:$0xff]
    %v376 = vld [vmem:[#allocation7 + $0xe0] sm:$0xff]
    %v377 = vld [vmem:[#allocation7 + $0xe8] sm:$0xff]
    %v378 = vld [vmem:[#allocation7 + $0xf0] sm:$0xff]
    %v379 = vld [vmem:[#allocation7 + $0xf8] sm:$0xff]
    %v412 = vunpack.c.l.b16 %v284
    %v413 = vunpack.c.h.b16 %v284
    %v414 = vunpack.c.l.b16 %v285
    %v415 = vunpack.c.h.b16 %v285
    %v416 = vunpack.c.l.b16 %v286
    %v417 = vunpack.c.h.b16 %v286
    %v418 = vunpack.c.l.b16 %v287
    %v419 = vunpack.c.h.b16 %v287
    %v420 = vunpack.c.l.b16 %v288
    %v421 = vunpack.c.h.b16 %v288
    %v422 = vunpack.c.l.b16 %v289
    %v423 = vunpack.c.h.b16 %v289
    %v424 = vunpack.c.l.b16 %v290
    %v425 = vunpack.c.h.b16 %v290
    %v426 = vunpack.c.l.b16 %v291
    %v427 = vunpack.c.h.b16 %v291
    %v428 = vunpack.c.l.b16 %v292
    %v429 = vunpack.c.h.b16 %v292
    %v430 = vunpack.c.l.b16 %v293
    %v431 = vunpack.c.h.b16 %v293
    %v432 = vunpack.c.l.b16 %v294
    %v433 = vunpack.c.h.b16 %v294
    %v434 = vunpack.c.l.b16 %v295
    %v435 = vunpack.c.h.b16 %v295
    %v436 = vunpack.c.l.b16 %v296
    %v437 = vunpack.c.h.b16 %v296
    %v438 = vunpack.c.l.b16 %v297
    %v439 = vunpack.c.h.b16 %v297
    %v440 = vunpack.c.l.b16 %v298
    %v441 = vunpack.c.h.b16 %v298
    %v442 = vunpack.c.l.b16 %v299
    %v443 = vunpack.c.h.b16 %v299
    %v444 = vunpack.c.l.b16 %v300
    %v445 = vunpack.c.h.b16 %v300
    %v446 = vunpack.c.l.b16 %v301
    %v447 = vunpack.c.h.b16 %v301
    %v448 = vunpack.c.l.b16 %v302
    %v449 = vunpack.c.h.b16 %v302
    %v450 = vunpack.c.l.b16 %v303
    %v451 = vunpack.c.h.b16 %v303
    %v452 = vunpack.c.l.b16 %v304
    %v453 = vunpack.c.h.b16 %v304
    %v454 = vunpack.c.l.b16 %v305
    %v455 = vunpack.c.h.b16 %v305
    %v456 = vunpack.c.l.b16 %v306
    %v457 = vunpack.c.h.b16 %v306
    %v458 = vunpack.c.l.b16 %v307
    %v459 = vunpack.c.h.b16 %v307
    %v460 = vunpack.c.l.b16 %v308
    %v461 = vunpack.c.h.b16 %v308
    %v462 = vunpack.c.l.b16 %v309
    %v463 = vunpack.c.h.b16 %v309
    %v464 = vunpack.c.l.b16 %v310
    %v465 = vunpack.c.h.b16 %v310
    %v466 = vunpack.c.l.b16 %v311
    %v467 = vunpack.c.h.b16 %v311
    %v468 = vunpack.c.l.b16 %v312
    %v469 = vunpack.c.h.b16 %v312
    %v470 = vunpack.c.l.b16 %v313
    %v471 = vunpack.c.h.b16 %v313
    %v472 = vunpack.c.l.b16 %v314
    %v473 = vunpack.c.h.b16 %v314
    %v474 = vunpack.c.l.b16 %v315
    %v475 = vunpack.c.h.b16 %v315
    %v476 = vpack.c.b16 %v416, %v412
    %v477 = vpack.c.b16 %v417, %v413
    %v478 = vpack.c.b16 %v418, %v414
    %v479 = vpack.c.b16 %v419, %v415
    %v480 = vpack.c.b16 %v424, %v420
    %v481 = vpack.c.b16 %v425, %v421
    %v482 = vpack.c.b16 %v426, %v422
    %v483 = vpack.c.b16 %v427, %v423
    %v484 = vpack.c.b16 %v432, %v428
    %v485 = vpack.c.b16 %v433, %v429
    %v486 = vpack.c.b16 %v434, %v430
    %v487 = vpack.c.b16 %v435, %v431
    %v488 = vpack.c.b16 %v440, %v436
    %v489 = vpack.c.b16 %v441, %v437
    %v490 = vpack.c.b16 %v442, %v438
    %v491 = vpack.c.b16 %v443, %v439
    %v492 = vpack.c.b16 %v448, %v444
    %v493 = vpack.c.b16 %v449, %v445
    %v494 = vpack.c.b16 %v450, %v446
    %v495 = vpack.c.b16 %v451, %v447
    %v496 = vpack.c.b16 %v456, %v452
    %v497 = vpack.c.b16 %v457, %v453
    %v498 = vpack.c.b16 %v458, %v454
    %v499 = vpack.c.b16 %v459, %v455
    %v500 = vpack.c.b16 %v464, %v460
    %v501 = vpack.c.b16 %v465, %v461
    %v502 = vpack.c.b16 %v466, %v462
    %v503 = vpack.c.b16 %v467, %v463
    %v504 = vpack.c.b16 %v472, %v468
    %v505 = vpack.c.b16 %v473, %v469
    %v506 = vpack.c.b16 %v474, %v470
    %v507 = vpack.c.b16 %v475, %v471
    %540 = vmatpush.bf16.msra.mxu0 %v504
    %541 = vmatpush.bf16.msra.mxu0 %v500
    %542 = vmatpush.bf16.msra.mxu0 %v496
    %543 = vmatpush.bf16.msra.mxu0 %v492
    %544 = vmatpush.bf16.msra.mxu0 %v488
    %545 = vmatpush.bf16.msra.mxu0 %v484
    %546 = vmatpush.bf16.msra.mxu0 %v480
    %547 = vmatpush.bf16.msra.mxu0 %v476
    %548 = vmatmul.bf16.gmra.mxu0 0
    %v549 = vpop.f32.mrf.mxu0
    %v550 = vadd.f32 0.0, %v549
    %v551 = vpop.f32.mrf.mxu0
    %552 = vdwg.mxu0
    %553 = vmatpush.bf16.msra.mxu0 %v505
    %554 = vmatpush.bf16.msra.mxu0 %v501
    %555 = vmatpush.bf16.msra.mxu0 %v497
    %556 = vmatpush.bf16.msra.mxu0 %v493
    %557 = vmatpush.bf16.msra.mxu0 %v489
    %558 = vmatpush.bf16.msra.mxu0 %v485
    %559 = vmatpush.bf16.msra.mxu0 %v481
    %560 = vmatpush.bf16.msra.mxu0 %v477
    %561 = vmatmul.bf16.gmra.mxu0 0
    %v562 = vpop.f32.mrf.mxu0
    %v563 = vadd.f32 0.0, %v562
    %v564 = vpop.f32.mrf.mxu0
    %565 = vdwg.mxu0
    %566 = vmatpush.bf16.msra.mxu0 %v506
    %567 = vmatpush.bf16.msra.mxu0 %v502
    %568 = vmatpush.bf16.msra.mxu0 %v498
    %569 = vmatpush.bf16.msra.mxu0 %v494
    %570 = vmatpush.bf16.msra.mxu0 %v490
    %571 = vmatpush.bf16.msra.mxu0 %v486
    %572 = vmatpush.bf16.msra.mxu0 %v482
    %573 = vmatpush.bf16.msra.mxu0 %v478
    %574 = vmatmul.bf16.gmra.mxu0 0
    %v575 = vpop.f32.mrf.mxu0
    %v576 = vadd.f32 0.0, %v575
    %v577 = vpop.f32.mrf.mxu0
    %578 = vdwg.mxu0
    %579 = vmatpush.bf16.msra.mxu0 %v507
    %580 = vmatpush.bf16.msra.mxu0 %v503
    %581 = vmatpush.bf16.msra.mxu0 %v499
    %582 = vmatpush.bf16.msra.mxu0 %v495
    %583 = vmatpush.bf16.msra.mxu0 %v491
    %584 = vmatpush.bf16.msra.mxu0 %v487
    %585 = vmatpush.bf16.msra.mxu0 %v483
    %586 = vmatpush.bf16.msra.mxu0 %v479
    %587 = vmatmul.bf16.gmra.mxu0 0
    %v588 = vpop.f32.mrf.mxu0
    %v589 = vadd.f32 0.0, %v588
    %v590 = vpop.f32.mrf.mxu0
    %591 = vdwg.mxu0
    %v592 = vadd.f32 %v148, %v550
    %v593 = vadd.f32 %v162, %v563
    %v594 = vadd.f32 %v176, %v576
    %v595 = vadd.f32 %v190, %v589
    %v596 = vxor.u32 %v592, 2147483648
    %v597 = vmul.f32 %v596, 1.442695
    %v598 = vpow.pop %v597
    %v599 = vadd.f32 %v598, 1.0
    %v600 = vrcp.pop %v599
    %v601 = vmul.f32 %v599, %v600
    %v602 = vsub.f32 1.0, %v601
    %v603 = vmul.f32 %v600, %v602
    %v604 = vadd.f32 %v600, %v603
    %vm605 = vweird.f32 %v599
    %vm606 = vweird.f32 %v600
    %vm607 = vmor %vm605, %vm606
    %v608 = vsel %vm607, %v600, %v604
    %v609 = vand.u32 2147483647, %v599
    %vm610 = vcmp.eq.f32.partialorder %v609, 8.507059e+37
    %v611 = vand.u32 %v599, 2147483648
    %v612 = vor.u32 1.1754944e-38, %v611
    %v613 = vsel %vm610, %v612, %v608
    %v614 = vmul.f32 1.0, %v613
    %v615 = vxor.u32 %v593, 2147483648
    %v616 = vmul.f32 %v615, 1.442695
    %v617 = vpow.pop %v616
    %v618 = vadd.f32 %v617, 1.0
    %v619 = vrcp.pop %v618
    %v620 = vmul.f32 %v618, %v619
    %v621 = vsub.f32 1.0, %v620
    %v622 = vmul.f32 %v619, %v621
    %v623 = vadd.f32 %v619, %v622
    %vm624 = vweird.f32 %v618
    %vm625 = vweird.f32 %v619
    %vm626 = vmor %vm624, %vm625
    %v627 = vsel %vm626, %v619, %v623
    %v628 = vand.u32 2147483647, %v618
    %vm629 = vcmp.eq.f32.partialorder %v628, 8.507059e+37
    %v630 = vand.u32 %v618, 2147483648
    %v631 = vor.u32 1.1754944e-38, %v630
    %v632 = vsel %vm629, %v631, %v627
    %v633 = vmul.f32 1.0, %v632
    %v634 = vtanh.pop %v594
    %v635 = vxor.u32 %v595, 2147483648
    %v636 = vmul.f32 %v635, 1.442695
    %v637 = vpow.pop %v636
    %v638 = vadd.f32 %v637, 1.0
    %v639 = vrcp.pop %v638
    %v640 = vmul.f32 %v638, %v639
    %v641 = vsub.f32 1.0, %v640
    %v642 = vmul.f32 %v639, %v641
    %v643 = vadd.f32 %v639, %v642
    %vm644 = vweird.f32 %v638
    %vm645 = vweird.f32 %v639
    %vm646 = vmor %vm644, %vm645
    %v647 = vsel %vm646, %v639, %v643
    %v648 = vand.u32 2147483647, %v638
    %vm649 = vcmp.eq.f32.partialorder %v648, 8.507059e+37
    %v650 = vand.u32 %v638, 2147483648
    %v651 = vor.u32 1.1754944e-38, %v650
    %v652 = vsel %vm649, %v651, %v647
    %v653 = vmul.f32 1.0, %v652
    %v654 = vmul.f32 %v633, 0.0
    %v655 = vmul.f32 %v614, %v634
    %v656 = vadd.f32 %v654, %v655
    %v657 = vtanh.pop %v656
    %v658 = vmul.f32 %v653, %v657
    %v659 = vmax.f32 %v658, 0.0
    %v660 = vpack.c.bf16 %v659, %v659
    %v693 = vunpack.c.l.b16 %v316
    %v694 = vunpack.c.h.b16 %v316
    %v695 = vunpack.c.l.b16 %v317
    %v696 = vunpack.c.h.b16 %v317
    %v697 = vunpack.c.l.b16 %v318
    %v698 = vunpack.c.h.b16 %v318
    %v699 = vunpack.c.l.b16 %v319
    %v700 = vunpack.c.h.b16 %v319
    %v701 = vunpack.c.l.b16 %v320
    %v702 = vunpack.c.h.b16 %v320
    %v703 = vunpack.c.l.b16 %v321
    %v704 = vunpack.c.h.b16 %v321
    %v705 = vunpack.c.l.b16 %v322
    %v706 = vunpack.c.h.b16 %v322
    %v707 = vunpack.c.l.b16 %v323
    %v708 = vunpack.c.h.b16 %v323
    %v709 = vunpack.c.l.b16 %v324
    %v710 = vunpack.c.h.b16 %v324
    %v711 = vunpack.c.l.b16 %v325
    %v712 = vunpack.c.h.b16 %v325
    %v713 = vunpack.c.l.b16 %v326
    %v714 = vunpack.c.h.b16 %v326
    %v715 = vunpack.c.l.b16 %v327
    %v716 = vunpack.c.h.b16 %v327
    %v717 = vunpack.c.l.b16 %v328
    %v718 = vunpack.c.h.b16 %v328
    %v719 = vunpack.c.l.b16 %v329
    %v720 = vunpack.c.h.b16 %v329
    %v721 = vunpack.c.l.b16 %v330
    %v722 = vunpack.c.h.b16 %v330
    %v723 = vunpack.c.l.b16 %v331
    %v724 = vunpack.c.h.b16 %v331
    %v725 = vunpack.c.l.b16 %v332
    %v726 = vunpack.c.h.b16 %v332
    %v727 = vunpack.c.l.b16 %v333
    %v728 = vunpack.c.h.b16 %v333
    %v729 = vunpack.c.l.b16 %v334
    %v730 = vunpack.c.h.b16 %v334
    %v731 = vunpack.c.l.b16 %v335
    %v732 = vunpack.c.h.b16 %v335
    %v733 = vunpack.c.l.b16 %v336
    %v734 = vunpack.c.h.b16 %v336
    %v735 = vunpack.c.l.b16 %v337
    %v736 = vunpack.c.h.b16 %v337
    %v737 = vunpack.c.l.b16 %v338
    %v738 = vunpack.c.h.b16 %v338
    %v739 = vunpack.c.l.b16 %v339
    %v740 = vunpack.c.h.b16 %v339
    %v741 = vunpack.c.l.b16 %v340
    %v742 = vunpack.c.h.b16 %v340
    %v743 = vunpack.c.l.b16 %v341
    %v744 = vunpack.c.h.b16 %v341
    %v745 = vunpack.c.l.b16 %v342
    %v746 = vunpack.c.h.b16 %v342
    %v747 = vunpack.c.l.b16 %v343
    %v748 = vunpack.c.h.b16 %v343
    %v749 = vunpack.c.l.b16 %v344
    %v750 = vunpack.c.h.b16 %v344
    %v751 = vunpack.c.l.b16 %v345
    %v752 = vunpack.c.h.b16 %v345
    %v753 = vunpack.c.l.b16 %v346
    %v754 = vunpack.c.h.b16 %v346
    %v755 = vunpack.c.l.b16 %v347
    %v756 = vunpack.c.h.b16 %v347
    %v757 = vpack.c.b16 %v697, %v693
    %v758 = vpack.c.b16 %v698, %v694
    %v759 = vpack.c.b16 %v699, %v695
    %v760 = vpack.c.b16 %v700, %v696
    %v761 = vpack.c.b16 %v705, %v701
    %v762 = vpack.c.b16 %v706, %v702
    %v763 = vpack.c.b16 %v707, %v703
    %v764 = vpack.c.b16 %v708, %v704
    %v765 = vpack.c.b16 %v713, %v709
    %v766 = vpack.c.b16 %v714, %v710
    %v767 = vpack.c.b16 %v715, %v711
    %v768 = vpack.c.b16 %v716, %v712
    %v769 = vpack.c.b16 %v721, %v717
    %v770 = vpack.c.b16 %v722, %v718
    %v771 = vpack.c.b16 %v723, %v719
    %v772 = vpack.c.b16 %v724, %v720
    %v773 = vpack.c.b16 %v729, %v725
    %v774 = vpack.c.b16 %v730, %v726
    %v775 = vpack.c.b16 %v731, %v727
    %v776 = vpack.c.b16 %v732, %v728
    %v777 = vpack.c.b16 %v737, %v733
    %v778 = vpack.c.b16 %v738, %v734
    %v779 = vpack.c.b16 %v739, %v735
    %v780 = vpack.c.b16 %v740, %v736
    %v781 = vpack.c.b16 %v745, %v741
    %v782 = vpack.c.b16 %v746, %v742
    %v783 = vpack.c.b16 %v747, %v743
    %v784 = vpack.c.b16 %v748, %v744
    %v785 = vpack.c.b16 %v753, %v749
    %v786 = vpack.c.b16 %v754, %v750
    %v787 = vpack.c.b16 %v755, %v751
    %v788 = vpack.c.b16 %v756, %v752
    %821 = vmatpush.bf16.msra.mxu0 %v785
    %822 = vmatpush.bf16.msra.mxu0 %v781
    %823 = vmatpush.bf16.msra.mxu0 %v777
    %824 = vmatpush.bf16.msra.mxu0 %v773
    %825 = vmatpush.bf16.msra.mxu0 %v769
    %826 = vmatpush.bf16.msra.mxu0 %v765
    %827 = vmatpush.bf16.msra.mxu0 %v761
    %828 = vmatpush.bf16.msra.mxu0 %v757
    %829 = vmatmul.bf16.gmra.mxu0 %v660
    %v830 = vpop.f32.mrf.mxu0
    %v831 = vadd.f32 0.0, %v830
    %v832 = vpop.f32.mrf.mxu0
    %833 = vdwg.mxu0
    %834 = vmatpush.bf16.msra.mxu0 %v786
    %835 = vmatpush.bf16.msra.mxu0 %v782
    %836 = vmatpush.bf16.msra.mxu0 %v778
    %837 = vmatpush.bf16.msra.mxu0 %v774
    %838 = vmatpush.bf16.msra.mxu0 %v770
    %839 = vmatpush.bf16.msra.mxu0 %v766
    %840 = vmatpush.bf16.msra.mxu0 %v762
    %841 = vmatpush.bf16.msra.mxu0 %v758
    %842 = vmatmul.bf16.gmra.mxu0 %v660
    %v843 = vpop.f32.mrf.mxu0
    %v844 = vadd.f32 0.0, %v843
    %v845 = vpop.f32.mrf.mxu0
    %846 = vdwg.mxu0
    %847 = vmatpush.bf16.msra.mxu0 %v787
    %848 = vmatpush.bf16.msra.mxu0 %v783
    %849 = vmatpush.bf16.msra.mxu0 %v779
    %850 = vmatpush.bf16.msra.mxu0 %v775
    %851 = vmatpush.bf16.msra.mxu0 %v771
    %852 = vmatpush.bf16.msra.mxu0 %v767
    %853 = vmatpush.bf16.msra.mxu0 %v763
    %854 = vmatpush.bf16.msra.mxu0 %v759
    %855 = vmatmul.bf16.gmra.mxu0 %v660
    %v856 = vpop.f32.mrf.mxu0
    %v857 = vadd.f32 0.0, %v856
    %v858 = vpop.f32.mrf.mxu0
    %859 = vdwg.mxu0
    %860 = vmatpush.bf16.msra.mxu0 %v788
    %861 = vmatpush.bf16.msra.mxu0 %v784
    %862 = vmatpush.bf16.msra.mxu0 %v780
    %863 = vmatpush.bf16.msra.mxu0 %v776
    %864 = vmatpush.bf16.msra.mxu0 %v772
    %865 = vmatpush.bf16.msra.mxu0 %v768
    %866 = vmatpush.bf16.msra.mxu0 %v764
    %867 = vmatpush.bf16.msra.mxu0 %v760
    %868 = vmatmul.bf16.gmra.mxu0 %v660
    %v869 = vpop.f32.mrf.mxu0
    %v870 = vadd.f32 0.0, %v869
    %v871 = vpop.f32.mrf.mxu0
    %872 = vdwg.mxu0
    %v873 = vadd.f32 %v238, %v831
    %v874 = vadd.f32 %v252, %v844
    %v875 = vadd.f32 %v266, %v857
    %v876 = vadd.f32 %v280, %v870
    %v909 = vunpack.c.l.b16 %v348
    %v910 = vunpack.c.h.b16 %v348
    %v911 = vunpack.c.l.b16 %v349
    %v912 = vunpack.c.h.b16 %v349
    %v913 = vunpack.c.l.b16 %v350
    %v914 = vunpack.c.h.b16 %v350
    %v915 = vunpack.c.l.b16 %v351
    %v916 = vunpack.c.h.b16 %v351
    %v917 = vunpack.c.l.b16 %v352
    %v918 = vunpack.c.h.b16 %v352
    %v919 = vunpack.c.l.b16 %v353
    %v920 = vunpack.c.h.b16 %v353
    %v921 = vunpack.c.l.b16 %v354
    %v922 = vunpack.c.h.b16 %v354
    %v923 = vunpack.c.l.b16 %v355
    %v924 = vunpack.c.h.b16 %v355
    %v925 = vunpack.c.l.b16 %v356
    %v926 = vunpack.c.h.b16 %v356
    %v927 = vunpack.c.l.b16 %v357
    %v928 = vunpack.c.h.b16 %v357
    %v929 = vunpack.c.l.b16 %v358
    %v930 = vunpack.c.h.b16 %v358
    %v931 = vunpack.c.l.b16 %v359
    %v932 = vunpack.c.h.b16 %v359
    %v933 = vunpack.c.l.b16 %v360
    %v934 = vunpack.c.h.b16 %v360
    %v935 = vunpack.c.l.b16 %v361
    %v936 = vunpack.c.h.b16 %v361
    %v937 = vunpack.c.l.b16 %v362
    %v938 = vunpack.c.h.b16 %v362
    %v939 = vunpack.c.l.b16 %v363
    %v940 = vunpack.c.h.b16 %v363
    %v941 = vunpack.c.l.b16 %v364
    %v942 = vunpack.c.h.b16 %v364
    %v943 = vunpack.c.l.b16 %v365
    %v944 = vunpack.c.h.b16 %v365
    %v945 = vunpack.c.l.b16 %v366
    %v946 = vunpack.c.h.b16 %v366
    %v947 = vunpack.c.l.b16 %v367
    %v948 = vunpack.c.h.b16 %v367
    %v949 = vunpack.c.l.b16 %v368
    %v950 = vunpack.c.h.b16 %v368
    %v951 = vunpack.c.l.b16 %v369
    %v952 = vunpack.c.h.b16 %v369
    %v953 = vunpack.c.l.b16 %v370
    %v954 = vunpack.c.h.b16 %v370
    %v955 = vunpack.c.l.b16 %v371
    %v956 = vunpack.c.h.b16 %v371
    %v957 = vunpack.c.l.b16 %v372
    %v958 = vunpack.c.h.b16 %v372
    %v959 = vunpack.c.l.b16 %v373
    %v960 = vunpack.c.h.b16 %v373
    %v961 = vunpack.c.l.b16 %v374
    %v962 = vunpack.c.h.b16 %v374
    %v963 = vunpack.c.l.b16 %v375
    %v964 = vunpack.c.h.b16 %v375
    %v965 = vunpack.c.l.b16 %v376
    %v966 = vunpack.c.h.b16 %v376
    %v967 = vunpack.c.l.b16 %v377
    %v968 = vunpack.c.h.b16 %v377
    %v969 = vunpack.c.l.b16 %v378
    %v970 = vunpack.c.h.b16 %v378
    %v971 = vunpack.c.l.b16 %v379
    %v972 = vunpack.c.h.b16 %v379
    %v973 = vpack.c.b16 %v913, %v909
    %v974 = vpack.c.b16 %v914, %v910
    %v975 = vpack.c.b16 %v915, %v911
    %v976 = vpack.c.b16 %v916, %v912
    %v977 = vpack.c.b16 %v921, %v917
    %v978 = vpack.c.b16 %v922, %v918
    %v979 = vpack.c.b16 %v923, %v919
    %v980 = vpack.c.b16 %v924, %v920
    %v981 = vpack.c.b16 %v929, %v925
    %v982 = vpack.c.b16 %v930, %v926
    %v983 = vpack.c.b16 %v931, %v927
    %v984 = vpack.c.b16 %v932, %v928
    %v985 = vpack.c.b16 %v937, %v933
    %v986 = vpack.c.b16 %v938, %v934
    %v987 = vpack.c.b16 %v939, %v935
    %v988 = vpack.c.b16 %v940, %v936
    %v989 = vpack.c.b16 %v945, %v941
    %v990 = vpack.c.b16 %v946, %v942
    %v991 = vpack.c.b16 %v947, %v943
    %v992 = vpack.c.b16 %v948, %v944
    %v993 = vpack.c.b16 %v953, %v949
    %v994 = vpack.c.b16 %v954, %v950
    %v995 = vpack.c.b16 %v955, %v951
    %v996 = vpack.c.b16 %v956, %v952
    %v997 = vpack.c.b16 %v961, %v957
    %v998 = vpack.c.b16 %v962, %v958
    %v999 = vpack.c.b16 %v963, %v959
    %v1000 = vpack.c.b16 %v964, %v960
    %v1001 = vpack.c.b16 %v969, %v965
    %v1002 = vpack.c.b16 %v970, %v966
    %v1003 = vpack.c.b16 %v971, %v967
    %v1004 = vpack.c.b16 %v972, %v968
    %1037 = vmatpush.bf16.msra.mxu0 %v1001
    %1038 = vmatpush.bf16.msra.mxu0 %v997
    %1039 = vmatpush.bf16.msra.mxu0 %v993
    %1040 = vmatpush.bf16.msra.mxu0 %v989
    %1041 = vmatpush.bf16.msra.mxu0 %v985
    %1042 = vmatpush.bf16.msra.mxu0 %v981
    %1043 = vmatpush.bf16.msra.mxu0 %v977
    %1044 = vmatpush.bf16.msra.mxu0 %v973
    %1045 = vmatmul.bf16.gmra.mxu0 0
    %v1046 = vpop.f32.mrf.mxu0
    %v1047 = vadd.f32 0.0, %v1046
    %v1048 = vpop.f32.mrf.mxu0
    %1049 = vdwg.mxu0
    %1050 = vmatpush.bf16.msra.mxu0 %v1002
    %1051 = vmatpush.bf16.msra.mxu0 %v998
    %1052 = vmatpush.bf16.msra.mxu0 %v994
    %1053 = vmatpush.bf16.msra.mxu0 %v990
    %1054 = vmatpush.bf16.msra.mxu0 %v986
    %1055 = vmatpush.bf16.msra.mxu0 %v982
    %1056 = vmatpush.bf16.msra.mxu0 %v978
    %1057 = vmatpush.bf16.msra.mxu0 %v974
    %1058 = vmatmul.bf16.gmra.mxu0 0
    %v1059 = vpop.f32.mrf.mxu0
    %v1060 = vadd.f32 0.0, %v1059
    %v1061 = vpop.f32.mrf.mxu0
    %1062 = vdwg.mxu0
    %1063 = vmatpush.bf16.msra.mxu0 %v1003
    %1064 = vmatpush.bf16.msra.mxu0 %v999
    %1065 = vmatpush.bf16.msra.mxu0 %v995
    %1066 = vmatpush.bf16.msra.mxu0 %v991
    %1067 = vmatpush.bf16.msra.mxu0 %v987
    %1068 = vmatpush.bf16.msra.mxu0 %v983
    %1069 = vmatpush.bf16.msra.mxu0 %v979
    %1070 = vmatpush.bf16.msra.mxu0 %v975
    %1071 = vmatmul.bf16.gmra.mxu0 0
    %v1072 = vpop.f32.mrf.mxu0
    %v1073 = vadd.f32 0.0, %v1072
    %v1074 = vpop.f32.mrf.mxu0
    %1075 = vdwg.mxu0
    %1076 = vmatpush.bf16.msra.mxu0 %v1004
    %1077 = vmatpush.bf16.msra.mxu0 %v1000
    %1078 = vmatpush.bf16.msra.mxu0 %v996
    %1079 = vmatpush.bf16.msra.mxu0 %v992
    %1080 = vmatpush.bf16.msra.mxu0 %v988
    %1081 = vmatpush.bf16.msra.mxu0 %v984
    %1082 = vmatpush.bf16.msra.mxu0 %v980
    %1083 = vmatpush.bf16.msra.mxu0 %v976
    %1084 = vmatmul.bf16.gmra.mxu0 0
    %v1085 = vpop.f32.mrf.mxu0
    %v1086 = vadd.f32 0.0, %v1085
    %v1087 = vpop.f32.mrf.mxu0
    %1088 = vdwg.mxu0
    %v1089 = vadd.f32 %v873, %v1047
    %v1090 = vadd.f32 %v874, %v1060
    %v1091 = vadd.f32 %v875, %v1073
    %v1092 = vadd.f32 %v876, %v1086
    %v1093 = vxor.u32 %v1089, 2147483648
    %v1094 = vmul.f32 %v1093, 1.442695
    %v1095 = vpow.pop %v1094
    %v1096 = vadd.f32 %v1095, 1.0
    %v1097 = vrcp.pop %v1096
    %v1098 = vmul.f32 %v1096, %v1097
    %v1099 = vsub.f32 1.0, %v1098
    %v1100 = vmul.f32 %v1097, %v1099
    %v1101 = vadd.f32 %v1097, %v1100
    %vm1102 = vweird.f32 %v1096
    %vm1103 = vweird.f32 %v1097
    %vm1104 = vmor %vm1102, %vm1103
    %v1105 = vsel %vm1104, %v1097, %v1101
    %v1106 = vand.u32 2147483647, %v1096
    %vm1107 = vcmp.eq.f32.partialorder %v1106, 8.507059e+37
    %v1108 = vand.u32 %v1096, 2147483648
    %v1109 = vor.u32 1.1754944e-38, %v1108
    %v1110 = vsel %vm1107, %v1109, %v1105
    %v1111 = vmul.f32 1.0, %v1110
    %v1112 = vxor.u32 %v1090, 2147483648
    %v1113 = vmul.f32 %v1112, 1.442695
    %v1114 = vpow.pop %v1113
    %v1115 = vadd.f32 %v1114, 1.0
    %v1116 = vrcp.pop %v1115
    %v1117 = vmul.f32 %v1115, %v1116
    %v1118 = vsub.f32 1.0, %v1117
    %v1119 = vmul.f32 %v1116, %v1118
    %v1120 = vadd.f32 %v1116, %v1119
    %vm1121 = vweird.f32 %v1115
    %vm1122 = vweird.f32 %v1116
    %vm1123 = vmor %vm1121, %vm1122
    %v1124 = vsel %vm1123, %v1116, %v1120
    %v1125 = vand.u32 2147483647, %v1115
    %vm1126 = vcmp.eq.f32.partialorder %v1125, 8.507059e+37
    %v1127 = vand.u32 %v1115, 2147483648
    %v1128 = vor.u32 1.1754944e-38, %v1127
    %v1129 = vsel %vm1126, %v1128, %v1124
    %v1130 = vmul.f32 1.0, %v1129
    %v1131 = vtanh.pop %v1091
    %v1132 = vxor.u32 %v1092, 2147483648
    %v1133 = vmul.f32 %v1132, 1.442695
    %v1134 = vpow.pop %v1133
    %v1135 = vadd.f32 %v1134, 1.0
    %v1136 = vrcp.pop %v1135
    %v1137 = vmul.f32 %v1135, %v1136
    %v1138 = vsub.f32 1.0, %v1137
    %v1139 = vmul.f32 %v1136, %v1138
    %v1140 = vadd.f32 %v1136, %v1139
    %vm1141 = vweird.f32 %v1135
    %vm1142 = vweird.f32 %v1136
    %vm1143 = vmor %vm1141, %vm1142
    %v1144 = vsel %vm1143, %v1136, %v1140
    %v1145 = vand.u32 2147483647, %v1135
    %vm1146 = vcmp.eq.f32.partialorder %v1145, 8.507059e+37
    %v1147 = vand.u32 %v1135, 2147483648
    %v1148 = vor.u32 1.1754944e-38, %v1147
    %v1149 = vsel %vm1146, %v1148, %v1144
    %v1150 = vmul.f32 1.0, %v1149
    %v1151 = vmul.f32 %v1130, 0.0
    %v1152 = vmul.f32 %v1111, %v1131
    %v1153 = vadd.f32 %v1151, %v1152
    %v1154 = vtanh.pop %v1153
    %v1155 = vmul.f32 %v1150, %v1154
    %v1156 = vmax.f32 %v1155, 0.0
    %v1157 = vpack.c.bf16 %v658, %v658
    %1158 = vmatpush.bf16.msra.mxu0 %v504
    %1159 = vmatpush.bf16.msra.mxu0 %v500
    %1160 = vmatpush.bf16.msra.mxu0 %v496
    %1161 = vmatpush.bf16.msra.mxu0 %v492
    %1162 = vmatpush.bf16.msra.mxu0 %v488
    %1163 = vmatpush.bf16.msra.mxu0 %v484
    %1164 = vmatpush.bf16.msra.mxu0 %v480
    %1165 = vmatpush.bf16.msra.mxu0 %v476
    %1166 = vmatmul.bf16.gmra.mxu0 %v1157
    %v1167 = vpop.f32.mrf.mxu0
    %v1168 = vadd.f32 0.0, %v1167
    %v1169 = vpop.f32.mrf.mxu0
    %1170 = vdwg.mxu0
    %1171 = vmatpush.bf16.msra.mxu0 %v505
    %1172 = vmatpush.bf16.msra.mxu0 %v501
    %1173 = vmatpush.bf16.msra.mxu0 %v497
    %1174 = vmatpush.bf16.msra.mxu0 %v493
    %1175 = vmatpush.bf16.msra.mxu0 %v489
    %1176 = vmatpush.bf16.msra.mxu0 %v485
    %1177 = vmatpush.bf16.msra.mxu0 %v481
    %1178 = vmatpush.bf16.msra.mxu0 %v477
    %1179 = vmatmul.bf16.gmra.mxu0 %v1157
    %v1180 = vpop.f32.mrf.mxu0
    %v1181 = vadd.f32 0.0, %v1180
    %v1182 = vpop.f32.mrf.mxu0
    %1183 = vdwg.mxu0
    %1184 = vmatpush.bf16.msra.mxu0 %v506
    %1185 = vmatpush.bf16.msra.mxu0 %v502
    %1186 = vmatpush.bf16.msra.mxu0 %v498
    %1187 = vmatpush.bf16.msra.mxu0 %v494
    %1188 = vmatpush.bf16.msra.mxu0 %v490
    %1189 = vmatpush.bf16.msra.mxu0 %v486
    %1190 = vmatpush.bf16.msra.mxu0 %v482
    %1191 = vmatpush.bf16.msra.mxu0 %v478
    %1192 = vmatmul.bf16.gmra.mxu0 %v1157
    %v1193 = vpop.f32.mrf.mxu0
    %v1194 = vadd.f32 0.0, %v1193
    %v1195 = vpop.f32.mrf.mxu0
    %1196 = vdwg.mxu0
    %1197 = vmatpush.bf16.msra.mxu0 %v507
    %1198 = vmatpush.bf16.msra.mxu0 %v503
    %1199 = vmatpush.bf16.msra.mxu0 %v499
    %1200 = vmatpush.bf16.msra.mxu0 %v495
    %1201 = vmatpush.bf16.msra.mxu0 %v491
    %1202 = vmatpush.bf16.msra.mxu0 %v487
    %1203 = vmatpush.bf16.msra.mxu0 %v483
    %1204 = vmatpush.bf16.msra.mxu0 %v479
    %1205 = vmatmul.bf16.gmra.mxu0 %v1157
    %v1206 = vpop.f32.mrf.mxu0
    %v1207 = vadd.f32 0.0, %v1206
    %v1208 = vpop.f32.mrf.mxu0
    %1209 = vdwg.mxu0
    %v1214 = vrot.slane %v1168, 6
    %v1215 = vrot.slane %v1181, 6
    %v1216 = vrot.slane %v1194, 6
    %v1217 = vrot.slane %v1207, 6
    %v1222 = vadd.f32 %v148, %v1214
    %v1223 = vadd.f32 %v162, %v1215
    %v1224 = vadd.f32 %v176, %v1216
    %v1225 = vadd.f32 %v190, %v1217
    %v1226 = vxor.u32 %v1222, 2147483648
    %v1227 = vmul.f32 %v1226, 1.442695
    %v1228 = vpow.pop %v1227
    %v1229 = vadd.f32 %v1228, 1.0
    %v1230 = vrcp.pop %v1229
    %v1231 = vmul.f32 %v1229, %v1230
    %v1232 = vsub.f32 1.0, %v1231
    %v1233 = vmul.f32 %v1230, %v1232
    %v1234 = vadd.f32 %v1230, %v1233
    %vm1235 = vweird.f32 %v1229
    %vm1236 = vweird.f32 %v1230
    %vm1237 = vmor %vm1235, %vm1236
    %v1238 = vsel %vm1237, %v1230, %v1234
    %v1239 = vand.u32 2147483647, %v1229
    %vm1240 = vcmp.eq.f32.partialorder %v1239, 8.507059e+37
    %v1241 = vand.u32 %v1229, 2147483648
    %v1242 = vor.u32 1.1754944e-38, %v1241
    %v1243 = vsel %vm1240, %v1242, %v1238
    %v1244 = vmul.f32 1.0, %v1243
    %v1245 = vxor.u32 %v1223, 2147483648
    %v1246 = vmul.f32 %v1245, 1.442695
    %v1247 = vpow.pop %v1246
    %v1248 = vadd.f32 %v1247, 1.0
    %v1249 = vrcp.pop %v1248
    %v1250 = vmul.f32 %v1248, %v1249
    %v1251 = vsub.f32 1.0, %v1250
    %v1252 = vmul.f32 %v1249, %v1251
    %v1253 = vadd.f32 %v1249, %v1252
    %vm1254 = vweird.f32 %v1248
    %vm1255 = vweird.f32 %v1249
    %vm1256 = vmor %vm1254, %vm1255
    %v1257 = vsel %vm1256, %v1249, %v1253
    %v1258 = vand.u32 2147483647, %v1248
    %vm1259 = vcmp.eq.f32.partialorder %v1258, 8.507059e+37
    %v1260 = vand.u32 %v1248, 2147483648
    %v1261 = vor.u32 1.1754944e-38, %v1260
    %v1262 = vsel %vm1259, %v1261, %v1257
    %v1263 = vmul.f32 1.0, %v1262
    %v1264 = vtanh.pop %v1224
    %v1265 = vxor.u32 %v1225, 2147483648
    %v1266 = vmul.f32 %v1265, 1.442695
    %v1267 = vpow.pop %v1266
    %v1268 = vadd.f32 %v1267, 1.0
    %v1269 = vrcp.pop %v1268
    %v1270 = vmul.f32 %v1268, %v1269
    %v1271 = vsub.f32 1.0, %v1270
    %v1272 = vmul.f32 %v1269, %v1271
    %v1273 = vadd.f32 %v1269, %v1272
    %vm1274 = vweird.f32 %v1268
    %vm1275 = vweird.f32 %v1269
    %vm1276 = vmor %vm1274, %vm1275
    %v1277 = vsel %vm1276, %v1269, %v1273
    %v1278 = vand.u32 2147483647, %v1268
    %vm1279 = vcmp.eq.f32.partialorder %v1278, 8.507059e+37
    %v1280 = vand.u32 %v1268, 2147483648
    %v1281 = vor.u32 1.1754944e-38, %v1280
    %v1282 = vsel %vm1279, %v1281, %v1277
    %v1283 = vmul.f32 1.0, %v1282
    %v1285 = vrot.slane %v656, 6
    %v1287 = vmul.f32 %v1263, %v1285
    %v1288 = vmul.f32 %v1244, %v1264
    %v1289 = vadd.f32 %v1287, %v1288
    %v1290 = vtanh.pop %v1289
    %v1291 = vmul.f32 %v1283, %v1290
    %v1292 = vmax.f32 %v1291, 0.0
    %v1293 = vpack.c.bf16 %v1292, %v1292
    %v1295 = vrot.slane %v1293, 1
    %1297 = vmatpush.bf16.msra.mxu0 %v785
    %1298 = vmatpush.bf16.msra.mxu0 %v781
    %1299 = vmatpush.bf16.msra.mxu0 %v777
    %1300 = vmatpush.bf16.msra.mxu0 %v773
    %1301 = vmatpush.bf16.msra.mxu0 %v769
    %1302 = vmatpush.bf16.msra.mxu0 %v765
    %1303 = vmatpush.bf16.msra.mxu0 %v761
    %1304 = vmatpush.bf16.msra.mxu0 %v757
    %1305 = vmatmul.bf16.gmra.mxu0 %v1295
    %v1306 = vpop.f32.mrf.mxu0
    %v1307 = vadd.f32 0.0, %v1306
    %v1308 = vpop.f32.mrf.mxu0
    %1309 = vdwg.mxu0
    %1310 = vmatpush.bf16.msra.mxu0 %v786
    %1311 = vmatpush.bf16.msra.mxu0 %v782
    %1312 = vmatpush.bf16.msra.mxu0 %v778
    %1313 = vmatpush.bf16.msra.mxu0 %v774
    %1314 = vmatpush.bf16.msra.mxu0 %v770
    %1315 = vmatpush.bf16.msra.mxu0 %v766
    %1316 = vmatpush.bf16.msra.mxu0 %v762
    %1317 = vmatpush.bf16.msra.mxu0 %v758
    %1318 = vmatmul.bf16.gmra.mxu0 %v1295
    %v1319 = vpop.f32.mrf.mxu0
    %v1320 = vadd.f32 0.0, %v1319
    %v1321 = vpop.f32.mrf.mxu0
    %1322 = vdwg.mxu0
    %1323 = vmatpush.bf16.msra.mxu0 %v787
    %1324 = vmatpush.bf16.msra.mxu0 %v783
    %1325 = vmatpush.bf16.msra.mxu0 %v779
    %1326 = vmatpush.bf16.msra.mxu0 %v775
    %1327 = vmatpush.bf16.msra.mxu0 %v771
    %1328 = vmatpush.bf16.msra.mxu0 %v767
    %1329 = vmatpush.bf16.msra.mxu0 %v763
    %1330 = vmatpush.bf16.msra.mxu0 %v759
    %1331 = vmatmul.bf16.gmra.mxu0 %v1295
    %v1332 = vpop.f32.mrf.mxu0
    %v1333 = vadd.f32 0.0, %v1332
    %v1334 = vpop.f32.mrf.mxu0
    %1335 = vdwg.mxu0
    %1336 = vmatpush.bf16.msra.mxu0 %v788
    %1337 = vmatpush.bf16.msra.mxu0 %v784
    %1338 = vmatpush.bf16.msra.mxu0 %v780
    %1339 = vmatpush.bf16.msra.mxu0 %v776
    %1340 = vmatpush.bf16.msra.mxu0 %v772
    %1341 = vmatpush.bf16.msra.mxu0 %v768
    %1342 = vmatpush.bf16.msra.mxu0 %v764
    %1343 = vmatpush.bf16.msra.mxu0 %v760
    %1344 = vmatmul.bf16.gmra.mxu0 %v1295
    %v1345 = vpop.f32.mrf.mxu0
    %v1346 = vadd.f32 0.0, %v1345
    %v1347 = vpop.f32.mrf.mxu0
    %1348 = vdwg.mxu0
    %v1353 = vrot.slane %v1307, 6
    %v1354 = vrot.slane %v1320, 6
    %v1355 = vrot.slane %v1333, 6
    %v1356 = vrot.slane %v1346, 6
    %v1361 = vadd.f32 %v238, %v1353
    %v1362 = vadd.f32 %v252, %v1354
    %v1363 = vadd.f32 %v266, %v1355
    %v1364 = vadd.f32 %v280, %v1356
    %v1365 = vpack.c.bf16 %v1155, %v1155
    %1366 = vmatpush.bf16.msra.mxu0 %v1001
    %1367 = vmatpush.bf16.msra.mxu0 %v997
    %1368 = vmatpush.bf16.msra.mxu0 %v993
    %1369 = vmatpush.bf16.msra.mxu0 %v989
    %1370 = vmatpush.bf16.msra.mxu0 %v985
    %1371 = vmatpush.bf16.msra.mxu0 %v981
    %1372 = vmatpush.bf16.msra.mxu0 %v977
    %1373 = vmatpush.bf16.msra.mxu0 %v973
    %1374 = vmatmul.bf16.gmra.mxu0 %v1365
    %v1375 = vpop.f32.mrf.mxu0
    %v1376 = vadd.f32 0.0, %v1375
    %v1377 = vpop.f32.mrf.mxu0
    %1378 = vdwg.mxu0
    %1379 = vmatpush.bf16.msra.mxu0 %v1002
    %1380 = vmatpush.bf16.msra.mxu0 %v998
    %1381 = vmatpush.bf16.msra.mxu0 %v994
    %1382 = vmatpush.bf16.msra.mxu0 %v990
    %1383 = vmatpush.bf16.msra.mxu0 %v986
    %1384 = vmatpush.bf16.msra.mxu0 %v982
    %1385 = vmatpush.bf16.msra.mxu0 %v978
    %1386 = vmatpush.bf16.msra.mxu0 %v974
    %1387 = vmatmul.bf16.gmra.mxu0 %v1365
    %v1388 = vpop.f32.mrf.mxu0
    %v1389 = vadd.f32 0.0, %v1388
    %v1390 = vpop.f32.mrf.mxu0
    %1391 = vdwg.mxu0
    %1392 = vmatpush.bf16.msra.mxu0 %v1003
    %1393 = vmatpush.bf16.msra.mxu0 %v999
    %1394 = vmatpush.bf16.msra.mxu0 %v995
    %1395 = vmatpush.bf16.msra.mxu0 %v991
    %1396 = vmatpush.bf16.msra.mxu0 %v987
    %1397 = vmatpush.bf16.msra.mxu0 %v983
    %1398 = vmatpush.bf16.msra.mxu0 %v979
    %1399 = vmatpush.bf16.msra.mxu0 %v975
    %1400 = vmatmul.bf16.gmra.mxu0 %v1365
    %v1401 = vpop.f32.mrf.mxu0
    %v1402 = vadd.f32 0.0, %v1401
    %v1403 = vpop.f32.mrf.mxu0
    %1404 = vdwg.mxu0
    %1405 = vmatpush.bf16.msra.mxu0 %v1004
    %1406 = vmatpush.bf16.msra.mxu0 %v1000
    %1407 = vmatpush.bf16.msra.mxu0 %v996
    %1408 = vmatpush.bf16.msra.mxu0 %v992
    %1409 = vmatpush.bf16.msra.mxu0 %v988
    %1410 = vmatpush.bf16.msra.mxu0 %v984
    %1411 = vmatpush.bf16.msra.mxu0 %v980
    %1412 = vmatpush.bf16.msra.mxu0 %v976
    %1413 = vmatmul.bf16.gmra.mxu0 %v1365
    %v1414 = vpop.f32.mrf.mxu0
    %v1415 = vadd.f32 0.0, %v1414
    %v1416 = vpop.f32.mrf.mxu0
    %1417 = vdwg.mxu0
    %v1422 = vrot.slane %v1376, 6
    %v1423 = vrot.slane %v1389, 6
    %v1424 = vrot.slane %v1402, 6
    %v1425 = vrot.slane %v1415, 6
    %v1430 = vadd.f32 %v1361, %v1422
    %v1431 = vadd.f32 %v1362, %v1423
    %v1432 = vadd.f32 %v1363, %v1424
    %v1433 = vadd.f32 %v1364, %v1425
    %v1434 = vxor.u32 %v1430, 2147483648
    %v1435 = vmul.f32 %v1434, 1.442695
    %v1436 = vpow.pop %v1435
    %v1437 = vadd.f32 %v1436, 1.0
    %v1438 = vrcp.pop %v1437
    %v1439 = vmul.f32 %v1437, %v1438
    %v1440 = vsub.f32 1.0, %v1439
    %v1441 = vmul.f32 %v1438, %v1440
    %v1442 = vadd.f32 %v1438, %v1441
    %vm1443 = vweird.f32 %v1437
    %vm1444 = vweird.f32 %v1438
    %vm1445 = vmor %vm1443, %vm1444
    %v1446 = vsel %vm1445, %v1438, %v1442
    %v1447 = vand.u32 2147483647, %v1437
    %vm1448 = vcmp.eq.f32.partialorder %v1447, 8.507059e+37
    %v1449 = vand.u32 %v1437, 2147483648
    %v1450 = vor.u32 1.1754944e-38, %v1449
    %v1451 = vsel %vm1448, %v1450, %v1446
    %v1452 = vmul.f32 1.0, %v1451
    %v1453 = vxor.u32 %v1431, 2147483648
    %v1454 = vmul.f32 %v1453, 1.442695
    %v1455 = vpow.pop %v1454
    %v1456 = vadd.f32 %v1455, 1.0
    %v1457 = vrcp.pop %v1456
    %v1458 = vmul.f32 %v1456, %v1457
    %v1459 = vsub.f32 1.0, %v1458
    %v1460 = vmul.f32 %v1457, %v1459
    %v1461 = vadd.f32 %v1457, %v1460
    %vm1462 = vweird.f32 %v1456
    %vm1463 = vweird.f32 %v1457
    %vm1464 = vmor %vm1462, %vm1463
    %v1465 = vsel %vm1464, %v1457, %v1461
    %v1466 = vand.u32 2147483647, %v1456
    %vm1467 = vcmp.eq.f32.partialorder %v1466, 8.507059e+37
    %v1468 = vand.u32 %v1456, 2147483648
    %v1469 = vor.u32 1.1754944e-38, %v1468
    %v1470 = vsel %vm1467, %v1469, %v1465
    %v1471 = vmul.f32 1.0, %v1470
    %v1472 = vtanh.pop %v1432
    %v1473 = vxor.u32 %v1433, 2147483648
    %v1474 = vmul.f32 %v1473, 1.442695
    %v1475 = vpow.pop %v1474
    %v1476 = vadd.f32 %v1475, 1.0
    %v1477 = vrcp.pop %v1476
    %v1478 = vmul.f32 %v1476, %v1477
    %v1479 = vsub.f32 1.0, %v1478
    %v1480 = vmul.f32 %v1477, %v1479
    %v1481 = vadd.f32 %v1477, %v1480
    %vm1482 = vweird.f32 %v1476
    %vm1483 = vweird.f32 %v1477
    %vm1484 = vmor %vm1482, %vm1483
    %v1485 = vsel %vm1484, %v1477, %v1481
    %v1486 = vand.u32 2147483647, %v1476
    %vm1487 = vcmp.eq.f32.partialorder %v1486, 8.507059e+37
    %v1488 = vand.u32 %v1476, 2147483648
    %v1489 = vor.u32 1.1754944e-38, %v1488
    %v1490 = vsel %vm1487, %v1489, %v1485
    %v1491 = vmul.f32 1.0, %v1490
    %v1493 = vrot.slane %v1153, 6
    %v1495 = vmul.f32 %v1471, %v1493
    %v1496 = vmul.f32 %v1452, %v1472
    %v1497 = vadd.f32 %v1495, %v1496
    %v1498 = vtanh.pop %v1497
    %v1499 = vmul.f32 %v1491, %v1498
    %v1500 = vmax.f32 %v1499, 0.0
    %v1501 = vpack.c.bf16 %v1291, %v1291
    %v1503 = vrot.slane %v1501, 1
    %1505 = vmatpush.bf16.msra.mxu0 %v504
    %1506 = vmatpush.bf16.msra.mxu0 %v500
    %1507 = vmatpush.bf16.msra.mxu0 %v496
    %1508 = vmatpush.bf16.msra.mxu0 %v492
    %1509 = vmatpush.bf16.msra.mxu0 %v488
    %1510 = vmatpush.bf16.msra.mxu0 %v484
    %1511 = vmatpush.bf16.msra.mxu0 %v480
    %1512 = vmatpush.bf16.msra.mxu0 %v476
    %1513 = vmatmul.bf16.gmra.mxu0 %v1503
    %v1514 = vpop.f32.mrf.mxu0
    %v1515 = vadd.f32 0.0, %v1514
    %v1516 = vpop.f32.mrf.mxu0
    %1517 = vdwg.mxu0
    %1518 = vmatpush.bf16.msra.mxu0 %v505
    %1519 = vmatpush.bf16.msra.mxu0 %v501
    %1520 = vmatpush.bf16.msra.mxu0 %v497
    %1521 = vmatpush.bf16.msra.mxu0 %v493
    %1522 = vmatpush.bf16.msra.mxu0 %v489
    %1523 = vmatpush.bf16.msra.mxu0 %v485
    %1524 = vmatpush.bf16.msra.mxu0 %v481
    %1525 = vmatpush.bf16.msra.mxu0 %v477
    %1526 = vmatmul.bf16.gmra.mxu0 %v1503
    %v1527 = vpop.f32.mrf.mxu0
    %v1528 = vadd.f32 0.0, %v1527
    %v1529 = vpop.f32.mrf.mxu0
    %1530 = vdwg.mxu0
    %1531 = vmatpush.bf16.msra.mxu0 %v506
    %1532 = vmatpush.bf16.msra.mxu0 %v502
    %1533 = vmatpush.bf16.msra.mxu0 %v498
    %1534 = vmatpush.bf16.msra.mxu0 %v494
    %1535 = vmatpush.bf16.msra.mxu0 %v490
    %1536 = vmatpush.bf16.msra.mxu0 %v486
    %1537 = vmatpush.bf16.msra.mxu0 %v482
    %1538 = vmatpush.bf16.msra.mxu0 %v478
    %1539 = vmatmul.bf16.gmra.mxu0 %v1503
    %v1540 = vpop.f32.mrf.mxu0
    %v1541 = vadd.f32 0.0, %v1540
    %v1542 = vpop.f32.mrf.mxu0
    %1543 = vdwg.mxu0
    %1544 = vmatpush.bf16.msra.mxu0 %v507
    %1545 = vmatpush.bf16.msra.mxu0 %v503
    %1546 = vmatpush.bf16.msra.mxu0 %v499
    %1547 = vmatpush.bf16.msra.mxu0 %v495
    %1548 = vmatpush.bf16.msra.mxu0 %v491
    %1549 = vmatpush.bf16.msra.mxu0 %v487
    %1550 = vmatpush.bf16.msra.mxu0 %v483
    %1551 = vmatpush.bf16.msra.mxu0 %v479
    %1552 = vmatmul.bf16.gmra.mxu0 %v1503
    %v1553 = vpop.f32.mrf.mxu0
    %v1554 = vadd.f32 0.0, %v1553
    %v1555 = vpop.f32.mrf.mxu0
    %1556 = vdwg.mxu0
    %v1561 = vrot.slane %v1515, 4
    %v1562 = vrot.slane %v1528, 4
    %v1563 = vrot.slane %v1541, 4
    %v1564 = vrot.slane %v1554, 4
    %v1569 = vadd.f32 %v148, %v1561
    %v1570 = vadd.f32 %v162, %v1562
    %v1571 = vadd.f32 %v176, %v1563
    %v1572 = vadd.f32 %v190, %v1564
    %v1573 = vxor.u32 %v1569, 2147483648
    %v1574 = vmul.f32 %v1573, 1.442695
    %v1575 = vpow.pop %v1574
    %v1576 = vadd.f32 %v1575, 1.0
    %v1577 = vrcp.pop %v1576
    %v1578 = vmul.f32 %v1576, %v1577
    %v1579 = vsub.f32 1.0, %v1578
    %v1580 = vmul.f32 %v1577, %v1579
    %v1581 = vadd.f32 %v1577, %v1580
    %vm1582 = vweird.f32 %v1576
    %vm1583 = vweird.f32 %v1577
    %vm1584 = vmor %vm1582, %vm1583
    %v1585 = vsel %vm1584, %v1577, %v1581
    %v1586 = vand.u32 2147483647, %v1576
    %vm1587 = vcmp.eq.f32.partialorder %v1586, 8.507059e+37
    %v1588 = vand.u32 %v1576, 2147483648
    %v1589 = vor.u32 1.1754944e-38, %v1588
    %v1590 = vsel %vm1587, %v1589, %v1585
    %v1591 = vmul.f32 1.0, %v1590
    %v1592 = vxor.u32 %v1570, 2147483648
    %v1593 = vmul.f32 %v1592, 1.442695
    %v1594 = vpow.pop %v1593
    %v1595 = vadd.f32 %v1594, 1.0
    %v1596 = vrcp.pop %v1595
    %v1597 = vmul.f32 %v1595, %v1596
    %v1598 = vsub.f32 1.0, %v1597
    %v1599 = vmul.f32 %v1596, %v1598
    %v1600 = vadd.f32 %v1596, %v1599
    %vm1601 = vweird.f32 %v1595
    %vm1602 = vweird.f32 %v1596
    %vm1603 = vmor %vm1601, %vm1602
    %v1604 = vsel %vm1603, %v1596, %v1600
    %v1605 = vand.u32 2147483647, %v1595
    %vm1606 = vcmp.eq.f32.partialorder %v1605, 8.507059e+37
    %v1607 = vand.u32 %v1595, 2147483648
    %v1608 = vor.u32 1.1754944e-38, %v1607
    %v1609 = vsel %vm1606, %v1608, %v1604
    %v1610 = vmul.f32 1.0, %v1609
    %v1611 = vtanh.pop %v1571
    %v1612 = vxor.u32 %v1572, 2147483648
    %v1613 = vmul.f32 %v1612, 1.442695
    %v1614 = vpow.pop %v1613
    %v1615 = vadd.f32 %v1614, 1.0
    %v1616 = vrcp.pop %v1615
    %v1617 = vmul.f32 %v1615, %v1616
    %v1618 = vsub.f32 1.0, %v1617
    %v1619 = vmul.f32 %v1616, %v1618
    %v1620 = vadd.f32 %v1616, %v1619
    %vm1621 = vweird.f32 %v1615
    %vm1622 = vweird.f32 %v1616
    %vm1623 = vmor %vm1621, %vm1622
    %v1624 = vsel %vm1623, %v1616, %v1620
    %v1625 = vand.u32 2147483647, %v1615
    %vm1626 = vcmp.eq.f32.partialorder %v1625, 8.507059e+37
    %v1627 = vand.u32 %v1615, 2147483648
    %v1628 = vor.u32 1.1754944e-38, %v1627
    %v1629 = vsel %vm1626, %v1628, %v1624
    %v1630 = vmul.f32 1.0, %v1629
    %v1632 = vrot.slane %v1289, 6
    %v1634 = vmul.f32 %v1610, %v1632
    %v1635 = vmul.f32 %v1591, %v1611
    %v1636 = vadd.f32 %v1634, %v1635
    %v1637 = vtanh.pop %v1636
    %v1638 = vmul.f32 %v1630, %v1637
    %v1639 = vmax.f32 %v1638, 0.0
    %v1640 = vpack.c.bf16 %v1639, %v1639
    %v1642 = vrot.slane %v1640, 2
    %1644 = vmatpush.bf16.msra.mxu0 %v785
    %1645 = vmatpush.bf16.msra.mxu0 %v781
    %1646 = vmatpush.bf16.msra.mxu0 %v777
    %1647 = vmatpush.bf16.msra.mxu0 %v773
    %1648 = vmatpush.bf16.msra.mxu0 %v769
    %1649 = vmatpush.bf16.msra.mxu0 %v765
    %1650 = vmatpush.bf16.msra.mxu0 %v761
    %1651 = vmatpush.bf16.msra.mxu0 %v757
    %1652 = vmatmul.bf16.gmra.mxu0 %v1642
    %v1653 = vpop.f32.mrf.mxu0
    %v1654 = vadd.f32 0.0, %v1653
    %v1655 = vpop.f32.mrf.mxu0
    %1656 = vdwg.mxu0
    %1657 = vmatpush.bf16.msra.mxu0 %v786
    %1658 = vmatpush.bf16.msra.mxu0 %v782
    %1659 = vmatpush.bf16.msra.mxu0 %v778
    %1660 = vmatpush.bf16.msra.mxu0 %v774
    %1661 = vmatpush.bf16.msra.mxu0 %v770
    %1662 = vmatpush.bf16.msra.mxu0 %v766
    %1663 = vmatpush.bf16.msra.mxu0 %v762
    %1664 = vmatpush.bf16.msra.mxu0 %v758
    %1665 = vmatmul.bf16.gmra.mxu0 %v1642
    %v1666 = vpop.f32.mrf.mxu0
    %v1667 = vadd.f32 0.0, %v1666
    %v1668 = vpop.f32.mrf.mxu0
    %1669 = vdwg.mxu0
    %1670 = vmatpush.bf16.msra.mxu0 %v787
    %1671 = vmatpush.bf16.msra.mxu0 %v783
    %1672 = vmatpush.bf16.msra.mxu0 %v779
    %1673 = vmatpush.bf16.msra.mxu0 %v775
    %1674 = vmatpush.bf16.msra.mxu0 %v771
    %1675 = vmatpush.bf16.msra.mxu0 %v767
    %1676 = vmatpush.bf16.msra.mxu0 %v763
    %1677 = vmatpush.bf16.msra.mxu0 %v759
    %1678 = vmatmul.bf16.gmra.mxu0 %v1642
    %v1679 = vpop.f32.mrf.mxu0
    %v1680 = vadd.f32 0.0, %v1679
    %v1681 = vpop.f32.mrf.mxu0
    %1682 = vdwg.mxu0
    %1683 = vmatpush.bf16.msra.mxu0 %v788
    %1684 = vmatpush.bf16.msra.mxu0 %v784
    %1685 = vmatpush.bf16.msra.mxu0 %v780
    %1686 = vmatpush.bf16.msra.mxu0 %v776
    %1687 = vmatpush.bf16.msra.mxu0 %v772
    %1688 = vmatpush.bf16.msra.mxu0 %v768
    %1689 = vmatpush.bf16.msra.mxu0 %v764
    %1690 = vmatpush.bf16.msra.mxu0 %v760
    %1691 = vmatmul.bf16.gmra.mxu0 %v1642
    %v1692 = vpop.f32.mrf.mxu0
    %v1693 = vadd.f32 0.0, %v1692
    %v1694 = vpop.f32.mrf.mxu0
    %1695 = vdwg.mxu0
    %v1700 = vrot.slane %v1654, 4
    %v1701 = vrot.slane %v1667, 4
    %v1702 = vrot.slane %v1680, 4
    %v1703 = vrot.slane %v1693, 4
    %v1708 = vadd.f32 %v238, %v1700
    %v1709 = vadd.f32 %v252, %v1701
    %v1710 = vadd.f32 %v266, %v1702
    %v1711 = vadd.f32 %v280, %v1703
    %v1712 = vpack.c.bf16 %v1499, %v1499
    %v1714 = vrot.slane %v1712, 1
    %1716 = vmatpush.bf16.msra.mxu0 %v1001
    %1717 = vmatpush.bf16.msra.mxu0 %v997
    %1718 = vmatpush.bf16.msra.mxu0 %v993
    %1719 = vmatpush.bf16.msra.mxu0 %v989
    %1720 = vmatpush.bf16.msra.mxu0 %v985
    %1721 = vmatpush.bf16.msra.mxu0 %v981
    %1722 = vmatpush.bf16.msra.mxu0 %v977
    %1723 = vmatpush.bf16.msra.mxu0 %v973
    %1724 = vmatmul.bf16.gmra.mxu0 %v1714
    %v1725 = vpop.f32.mrf.mxu0
    %v1726 = vadd.f32 0.0, %v1725
    %v1727 = vpop.f32.mrf.mxu0
    %1728 = vdwg.mxu0
    %1729 = vmatpush.bf16.msra.mxu0 %v1002
    %1730 = vmatpush.bf16.msra.mxu0 %v998
    %1731 = vmatpush.bf16.msra.mxu0 %v994
    %1732 = vmatpush.bf16.msra.mxu0 %v990
    %1733 = vmatpush.bf16.msra.mxu0 %v986
    %1734 = vmatpush.bf16.msra.mxu0 %v982
    %1735 = vmatpush.bf16.msra.mxu0 %v978
    %1736 = vmatpush.bf16.msra.mxu0 %v974
    %1737 = vmatmul.bf16.gmra.mxu0 %v1714
    %v1738 = vpop.f32.mrf.mxu0
    %v1739 = vadd.f32 0.0, %v1738
    %v1740 = vpop.f32.mrf.mxu0
    %1741 = vdwg.mxu0
    %1742 = vmatpush.bf16.msra.mxu0 %v1003
    %1743 = vmatpush.bf16.msra.mxu0 %v999
    %1744 = vmatpush.bf16.msra.mxu0 %v995
    %1745 = vmatpush.bf16.msra.mxu0 %v991
    %1746 = vmatpush.bf16.msra.mxu0 %v987
    %1747 = vmatpush.bf16.msra.mxu0 %v983
    %1748 = vmatpush.bf16.msra.mxu0 %v979
    %1749 = vmatpush.bf16.msra.mxu0 %v975
    %1750 = vmatmul.bf16.gmra.mxu0 %v1714
    %v1751 = vpop.f32.mrf.mxu0
    %v1752 = vadd.f32 0.0, %v1751
    %v1753 = vpop.f32.mrf.mxu0
    %1754 = vdwg.mxu0
    %1755 = vmatpush.bf16.msra.mxu0 %v1004
    %1756 = vmatpush.bf16.msra.mxu0 %v1000
    %1757 = vmatpush.bf16.msra.mxu0 %v996
    %1758 = vmatpush.bf16.msra.mxu0 %v992
    %1759 = vmatpush.bf16.msra.mxu0 %v988
    %1760 = vmatpush.bf16.msra.mxu0 %v984
    %1761 = vmatpush.bf16.msra.mxu0 %v980
    %1762 = vmatpush.bf16.msra.mxu0 %v976
    %1763 = vmatmul.bf16.gmra.mxu0 %v1714
    %v1764 = vpop.f32.mrf.mxu0
    %v1765 = vadd.f32 0.0, %v1764
    %v1766 = vpop.f32.mrf.mxu0
    %1767 = vdwg.mxu0
    %v1772 = vrot.slane %v1726, 4
    %v1773 = vrot.slane %v1739, 4
    %v1774 = vrot.slane %v1752, 4
    %v1775 = vrot.slane %v1765, 4
    %v1780 = vadd.f32 %v1708, %v1772
    %v1781 = vadd.f32 %v1709, %v1773
    %v1782 = vadd.f32 %v1710, %v1774
    %v1783 = vadd.f32 %v1711, %v1775
    %v1784 = vxor.u32 %v1780, 2147483648
    %v1785 = vmul.f32 %v1784, 1.442695
    %v1786 = vpow.pop %v1785
    %v1787 = vadd.f32 %v1786, 1.0
    %v1788 = vrcp.pop %v1787
    %v1789 = vmul.f32 %v1787, %v1788
    %v1790 = vsub.f32 1.0, %v1789
    %v1791 = vmul.f32 %v1788, %v1790
    %v1792 = vadd.f32 %v1788, %v1791
    %vm1793 = vweird.f32 %v1787
    %vm1794 = vweird.f32 %v1788
    %vm1795 = vmor %vm1793, %vm1794
    %v1796 = vsel %vm1795, %v1788, %v1792
    %v1797 = vand.u32 2147483647, %v1787
    %vm1798 = vcmp.eq.f32.partialorder %v1797, 8.507059e+37
    %v1799 = vand.u32 %v1787, 2147483648
    %v1800 = vor.u32 1.1754944e-38, %v1799
    %v1801 = vsel %vm1798, %v1800, %v1796
    %v1802 = vmul.f32 1.0, %v1801
    %v1803 = vxor.u32 %v1781, 2147483648
    %v1804 = vmul.f32 %v1803, 1.442695
    %v1805 = vpow.pop %v1804
    %v1806 = vadd.f32 %v1805, 1.0
    %v1807 = vrcp.pop %v1806
    %v1808 = vmul.f32 %v1806, %v1807
    %v1809 = vsub.f32 1.0, %v1808
    %v1810 = vmul.f32 %v1807, %v1809
    %v1811 = vadd.f32 %v1807, %v1810
    %vm1812 = vweird.f32 %v1806
    %vm1813 = vweird.f32 %v1807
    %vm1814 = vmor %vm1812, %vm1813
    %v1815 = vsel %vm1814, %v1807, %v1811
    %v1816 = vand.u32 2147483647, %v1806
    %vm1817 = vcmp.eq.f32.partialorder %v1816, 8.507059e+37
    %v1818 = vand.u32 %v1806, 2147483648
    %v1819 = vor.u32 1.1754944e-38, %v1818
    %v1820 = vsel %vm1817, %v1819, %v1815
    %v1821 = vmul.f32 1.0, %v1820
    %v1822 = vtanh.pop %v1782
    %v1823 = vxor.u32 %v1783, 2147483648
    %v1824 = vmul.f32 %v1823, 1.442695
    %v1825 = vpow.pop %v1824
    %v1826 = vadd.f32 %v1825, 1.0
    %v1827 = vrcp.pop %v1826
    %v1828 = vmul.f32 %v1826, %v1827
    %v1829 = vsub.f32 1.0, %v1828
    %v1830 = vmul.f32 %v1827, %v1829
    %v1831 = vadd.f32 %v1827, %v1830
    %vm1832 = vweird.f32 %v1826
    %vm1833 = vweird.f32 %v1827
    %vm1834 = vmor %vm1832, %vm1833
    %v1835 = vsel %vm1834, %v1827, %v1831
    %v1836 = vand.u32 2147483647, %v1826
    %vm1837 = vcmp.eq.f32.partialorder %v1836, 8.507059e+37
    %v1838 = vand.u32 %v1826, 2147483648
    %v1839 = vor.u32 1.1754944e-38, %v1838
    %v1840 = vsel %vm1837, %v1839, %v1835
    %v1841 = vmul.f32 1.0, %v1840
    %v1843 = vrot.slane %v1497, 6
    %v1845 = vmul.f32 %v1821, %v1843
    %v1846 = vmul.f32 %v1802, %v1822
    %v1847 = vadd.f32 %v1845, %v1846
    %v1848 = vtanh.pop %v1847
    %v1849 = vmul.f32 %v1841, %v1848
    %v1850 = vmax.f32 %v1849, 0.0
    %v1851 = vpack.c.bf16 %v1638, %v1638
    %v1853 = vrot.slane %v1851, 2
    %1855 = vmatpush.bf16.msra.mxu0 %v504
    %1856 = vmatpush.bf16.msra.mxu0 %v500
    %1857 = vmatpush.bf16.msra.mxu0 %v496
    %1858 = vmatpush.bf16.msra.mxu0 %v492
    %1859 = vmatpush.bf16.msra.mxu0 %v488
    %1860 = vmatpush.bf16.msra.mxu0 %v484
    %1861 = vmatpush.bf16.msra.mxu0 %v480
    %1862 = vmatpush.bf16.msra.mxu0 %v476
    %1863 = vmatmul.bf16.gmra.mxu0 %v1853
    %v1864 = vpop.f32.mrf.mxu0
    %v1865 = vadd.f32 0.0, %v1864
    %v1866 = vpop.f32.mrf.mxu0
    %1867 = vdwg.mxu0
    %1868 = vmatpush.bf16.msra.mxu0 %v505
    %1869 = vmatpush.bf16.msra.mxu0 %v501
    %1870 = vmatpush.bf16.msra.mxu0 %v497
    %1871 = vmatpush.bf16.msra.mxu0 %v493
    %1872 = vmatpush.bf16.msra.mxu0 %v489
    %1873 = vmatpush.bf16.msra.mxu0 %v485
    %1874 = vmatpush.bf16.msra.mxu0 %v481
    %1875 = vmatpush.bf16.msra.mxu0 %v477
    %1876 = vmatmul.bf16.gmra.mxu0 %v1853
    %v1877 = vpop.f32.mrf.mxu0
    %v1878 = vadd.f32 0.0, %v1877
    %v1879 = vpop.f32.mrf.mxu0
    %1880 = vdwg.mxu0
    %1881 = vmatpush.bf16.msra.mxu0 %v506
    %1882 = vmatpush.bf16.msra.mxu0 %v502
    %1883 = vmatpush.bf16.msra.mxu0 %v498
    %1884 = vmatpush.bf16.msra.mxu0 %v494
    %1885 = vmatpush.bf16.msra.mxu0 %v490
    %1886 = vmatpush.bf16.msra.mxu0 %v486
    %1887 = vmatpush.bf16.msra.mxu0 %v482
    %1888 = vmatpush.bf16.msra.mxu0 %v478
    %1889 = vmatmul.bf16.gmra.mxu0 %v1853
    %v1890 = vpop.f32.mrf.mxu0
    %v1891 = vadd.f32 0.0, %v1890
    %v1892 = vpop.f32.mrf.mxu0
    %1893 = vdwg.mxu0
    %1894 = vmatpush.bf16.msra.mxu0 %v507
    %1895 = vmatpush.bf16.msra.mxu0 %v503
    %1896 = vmatpush.bf16.msra.mxu0 %v499
    %1897 = vmatpush.bf16.msra.mxu0 %v495
    %1898 = vmatpush.bf16.msra.mxu0 %v491
    %1899 = vmatpush.bf16.msra.mxu0 %v487
    %1900 = vmatpush.bf16.msra.mxu0 %v483
    %1901 = vmatpush.bf16.msra.mxu0 %v479
    %1902 = vmatmul.bf16.gmra.mxu0 %v1853
    %v1903 = vpop.f32.mrf.mxu0
    %v1904 = vadd.f32 0.0, %v1903
    %v1905 = vpop.f32.mrf.mxu0
    %1906 = vdwg.mxu0
    %v1911 = vrot.slane %v1865, 2
    %v1912 = vrot.slane %v1878, 2
    %v1913 = vrot.slane %v1891, 2
    %v1914 = vrot.slane %v1904, 2
    %v1919 = vadd.f32 %v148, %v1911
    %v1920 = vadd.f32 %v162, %v1912
    %v1921 = vadd.f32 %v176, %v1913
    %v1922 = vadd.f32 %v190, %v1914
    %v1923 = vxor.u32 %v1919, 2147483648
    %v1924 = vmul.f32 %v1923, 1.442695
    %v1925 = vpow.pop %v1924
    %v1926 = vadd.f32 %v1925, 1.0
    %v1927 = vrcp.pop %v1926
    %v1928 = vmul.f32 %v1926, %v1927
    %v1929 = vsub.f32 1.0, %v1928
    %v1930 = vmul.f32 %v1927, %v1929
    %v1931 = vadd.f32 %v1927, %v1930
    %vm1932 = vweird.f32 %v1926
    %vm1933 = vweird.f32 %v1927
    %vm1934 = vmor %vm1932, %vm1933
    %v1935 = vsel %vm1934, %v1927, %v1931
    %v1936 = vand.u32 2147483647, %v1926
    %vm1937 = vcmp.eq.f32.partialorder %v1936, 8.507059e+37
    %v1938 = vand.u32 %v1926, 2147483648
    %v1939 = vor.u32 1.1754944e-38, %v1938
    %v1940 = vsel %vm1937, %v1939, %v1935
    %v1941 = vmul.f32 1.0, %v1940
    %v1942 = vxor.u32 %v1920, 2147483648
    %v1943 = vmul.f32 %v1942, 1.442695
    %v1944 = vpow.pop %v1943
    %v1945 = vadd.f32 %v1944, 1.0
    %v1946 = vrcp.pop %v1945
    %v1947 = vmul.f32 %v1945, %v1946
    %v1948 = vsub.f32 1.0, %v1947
    %v1949 = vmul.f32 %v1946, %v1948
    %v1950 = vadd.f32 %v1946, %v1949
    %vm1951 = vweird.f32 %v1945
    %vm1952 = vweird.f32 %v1946
    %vm1953 = vmor %vm1951, %vm1952
    %v1954 = vsel %vm1953, %v1946, %v1950
    %v1955 = vand.u32 2147483647, %v1945
    %vm1956 = vcmp.eq.f32.partialorder %v1955, 8.507059e+37
    %v1957 = vand.u32 %v1945, 2147483648
    %v1958 = vor.u32 1.1754944e-38, %v1957
    %v1959 = vsel %vm1956, %v1958, %v1954
    %v1960 = vmul.f32 1.0, %v1959
    %v1961 = vtanh.pop %v1921
    %v1962 = vxor.u32 %v1922, 2147483648
    %v1963 = vmul.f32 %v1962, 1.442695
    %v1964 = vpow.pop %v1963
    %v1965 = vadd.f32 %v1964, 1.0
    %v1966 = vrcp.pop %v1965
    %v1967 = vmul.f32 %v1965, %v1966
    %v1968 = vsub.f32 1.0, %v1967
    %v1969 = vmul.f32 %v1966, %v1968
    %v1970 = vadd.f32 %v1966, %v1969
    %vm1971 = vweird.f32 %v1965
    %vm1972 = vweird.f32 %v1966
    %vm1973 = vmor %vm1971, %vm1972
    %v1974 = vsel %vm1973, %v1966, %v1970
    %v1975 = vand.u32 2147483647, %v1965
    %vm1976 = vcmp.eq.f32.partialorder %v1975, 8.507059e+37
    %v1977 = vand.u32 %v1965, 2147483648
    %v1978 = vor.u32 1.1754944e-38, %v1977
    %v1979 = vsel %vm1976, %v1978, %v1974
    %v1980 = vmul.f32 1.0, %v1979
    %v1982 = vrot.slane %v1636, 6
    %v1984 = vmul.f32 %v1960, %v1982
    %v1985 = vmul.f32 %v1941, %v1961
    %v1986 = vadd.f32 %v1984, %v1985
    %v1987 = vtanh.pop %v1986
    %v1988 = vmul.f32 %v1980, %v1987
    %v1989 = vmax.f32 %v1988, 0.0
    %v1990 = vpack.c.bf16 %v1989, %v1989
    %v1992 = vrot.slane %v1990, 3
    %1994 = vmatpush.bf16.msra.mxu0 %v785
    %1995 = vmatpush.bf16.msra.mxu0 %v781
    %1996 = vmatpush.bf16.msra.mxu0 %v777
    %1997 = vmatpush.bf16.msra.mxu0 %v773
    %1998 = vmatpush.bf16.msra.mxu0 %v769
    %1999 = vmatpush.bf16.msra.mxu0 %v765
    %2000 = vmatpush.bf16.msra.mxu0 %v761
    %2001 = vmatpush.bf16.msra.mxu0 %v757
    %2002 = vmatmul.bf16.gmra.mxu0 %v1992
    %v2003 = vpop.f32.mrf.mxu0
    %v2004 = vadd.f32 0.0, %v2003
    %v2005 = vpop.f32.mrf.mxu0
    %2006 = vdwg.mxu0
    %2007 = vmatpush.bf16.msra.mxu0 %v786
    %2008 = vmatpush.bf16.msra.mxu0 %v782
    %2009 = vmatpush.bf16.msra.mxu0 %v778
    %2010 = vmatpush.bf16.msra.mxu0 %v774
    %2011 = vmatpush.bf16.msra.mxu0 %v770
    %2012 = vmatpush.bf16.msra.mxu0 %v766
    %2013 = vmatpush.bf16.msra.mxu0 %v762
    %2014 = vmatpush.bf16.msra.mxu0 %v758
    %2015 = vmatmul.bf16.gmra.mxu0 %v1992
    %v2016 = vpop.f32.mrf.mxu0
    %v2017 = vadd.f32 0.0, %v2016
    %v2018 = vpop.f32.mrf.mxu0
    %2019 = vdwg.mxu0
    %2020 = vmatpush.bf16.msra.mxu0 %v787
    %2021 = vmatpush.bf16.msra.mxu0 %v783
    %2022 = vmatpush.bf16.msra.mxu0 %v779
    %2023 = vmatpush.bf16.msra.mxu0 %v775
    %2024 = vmatpush.bf16.msra.mxu0 %v771
    %2025 = vmatpush.bf16.msra.mxu0 %v767
    %2026 = vmatpush.bf16.msra.mxu0 %v763
    %2027 = vmatpush.bf16.msra.mxu0 %v759
    %2028 = vmatmul.bf16.gmra.mxu0 %v1992
    %v2029 = vpop.f32.mrf.mxu0
    %v2030 = vadd.f32 0.0, %v2029
    %v2031 = vpop.f32.mrf.mxu0
    %2032 = vdwg.mxu0
    %2033 = vmatpush.bf16.msra.mxu0 %v788
    %2034 = vmatpush.bf16.msra.mxu0 %v784
    %2035 = vmatpush.bf16.msra.mxu0 %v780
    %2036 = vmatpush.bf16.msra.mxu0 %v776
    %2037 = vmatpush.bf16.msra.mxu0 %v772
    %2038 = vmatpush.bf16.msra.mxu0 %v768
    %2039 = vmatpush.bf16.msra.mxu0 %v764
    %2040 = vmatpush.bf16.msra.mxu0 %v760
    %2041 = vmatmul.bf16.gmra.mxu0 %v1992
    %v2042 = vpop.f32.mrf.mxu0
    %v2043 = vadd.f32 0.0, %v2042
    %v2044 = vpop.f32.mrf.mxu0
    %2045 = vdwg.mxu0
    %v2050 = vrot.slane %v2004, 2
    %v2051 = vrot.slane %v2017, 2
    %v2052 = vrot.slane %v2030, 2
    %v2053 = vrot.slane %v2043, 2
    %v2058 = vadd.f32 %v238, %v2050
    %v2059 = vadd.f32 %v252, %v2051
    %v2060 = vadd.f32 %v266, %v2052
    %v2061 = vadd.f32 %v280, %v2053
    %v2062 = vpack.c.bf16 %v1849, %v1849
    %v2064 = vrot.slane %v2062, 2
    %2066 = vmatpush.bf16.msra.mxu0 %v1001
    %2067 = vmatpush.bf16.msra.mxu0 %v997
    %2068 = vmatpush.bf16.msra.mxu0 %v993
    %2069 = vmatpush.bf16.msra.mxu0 %v989
    %2070 = vmatpush.bf16.msra.mxu0 %v985
    %2071 = vmatpush.bf16.msra.mxu0 %v981
    %2072 = vmatpush.bf16.msra.mxu0 %v977
    %2073 = vmatpush.bf16.msra.mxu0 %v973
    %2074 = vmatmul.bf16.gmra.mxu0 %v2064
    %v2075 = vpop.f32.mrf.mxu0
    %v2076 = vadd.f32 0.0, %v2075
    %v2077 = vpop.f32.mrf.mxu0
    %2078 = vdwg.mxu0
    %2079 = vmatpush.bf16.msra.mxu0 %v1002
    %2080 = vmatpush.bf16.msra.mxu0 %v998
    %2081 = vmatpush.bf16.msra.mxu0 %v994
    %2082 = vmatpush.bf16.msra.mxu0 %v990
    %2083 = vmatpush.bf16.msra.mxu0 %v986
    %2084 = vmatpush.bf16.msra.mxu0 %v982
    %2085 = vmatpush.bf16.msra.mxu0 %v978
    %2086 = vmatpush.bf16.msra.mxu0 %v974
    %2087 = vmatmul.bf16.gmra.mxu0 %v2064
    %v2088 = vpop.f32.mrf.mxu0
    %v2089 = vadd.f32 0.0, %v2088
    %v2090 = vpop.f32.mrf.mxu0
    %2091 = vdwg.mxu0
    %2092 = vmatpush.bf16.msra.mxu0 %v1003
    %2093 = vmatpush.bf16.msra.mxu0 %v999
    %2094 = vmatpush.bf16.msra.mxu0 %v995
    %2095 = vmatpush.bf16.msra.mxu0 %v991
    %2096 = vmatpush.bf16.msra.mxu0 %v987
    %2097 = vmatpush.bf16.msra.mxu0 %v983
    %2098 = vmatpush.bf16.msra.mxu0 %v979
    %2099 = vmatpush.bf16.msra.mxu0 %v975
    %2100 = vmatmul.bf16.gmra.mxu0 %v2064
    %v2101 = vpop.f32.mrf.mxu0
    %v2102 = vadd.f32 0.0, %v2101
    %v2103 = vpop.f32.mrf.mxu0
    %2104 = vdwg.mxu0
    %2105 = vmatpush.bf16.msra.mxu0 %v1004
    %2106 = vmatpush.bf16.msra.mxu0 %v1000
    %2107 = vmatpush.bf16.msra.mxu0 %v996
    %2108 = vmatpush.bf16.msra.mxu0 %v992
    %2109 = vmatpush.bf16.msra.mxu0 %v988
    %2110 = vmatpush.bf16.msra.mxu0 %v984
    %2111 = vmatpush.bf16.msra.mxu0 %v980
    %2112 = vmatpush.bf16.msra.mxu0 %v976
    %2113 = vmatmul.bf16.gmra.mxu0 %v2064
    %v2114 = vpop.f32.mrf.mxu0
    %v2115 = vadd.f32 0.0, %v2114
    %v2116 = vpop.f32.mrf.mxu0
    %2117 = vdwg.mxu0
    %v2122 = vrot.slane %v2076, 2
    %v2123 = vrot.slane %v2089, 2
    %v2124 = vrot.slane %v2102, 2
    %v2125 = vrot.slane %v2115, 2
    %v2130 = vadd.f32 %v2058, %v2122
    %v2131 = vadd.f32 %v2059, %v2123
    %v2132 = vadd.f32 %v2060, %v2124
    %v2133 = vadd.f32 %v2061, %v2125
    %v2134 = vxor.u32 %v2130, 2147483648
    %v2135 = vmul.f32 %v2134, 1.442695
    %v2136 = vpow.pop %v2135
    %v2137 = vadd.f32 %v2136, 1.0
    %v2138 = vrcp.pop %v2137
    %v2139 = vmul.f32 %v2137, %v2138
    %v2140 = vsub.f32 1.0, %v2139
    %v2141 = vmul.f32 %v2138, %v2140
    %v2142 = vadd.f32 %v2138, %v2141
    %vm2143 = vweird.f32 %v2137
    %vm2144 = vweird.f32 %v2138
    %vm2145 = vmor %vm2143, %vm2144
    %v2146 = vsel %vm2145, %v2138, %v2142
    %v2147 = vand.u32 2147483647, %v2137
    %vm2148 = vcmp.eq.f32.partialorder %v2147, 8.507059e+37
    %v2149 = vand.u32 %v2137, 2147483648
    %v2150 = vor.u32 1.1754944e-38, %v2149
    %v2151 = vsel %vm2148, %v2150, %v2146
    %v2152 = vmul.f32 1.0, %v2151
    %v2153 = vxor.u32 %v2131, 2147483648
    %v2154 = vmul.f32 %v2153, 1.442695
    %v2155 = vpow.pop %v2154
    %v2156 = vadd.f32 %v2155, 1.0
    %v2157 = vrcp.pop %v2156
    %v2158 = vmul.f32 %v2156, %v2157
    %v2159 = vsub.f32 1.0, %v2158
    %v2160 = vmul.f32 %v2157, %v2159
    %v2161 = vadd.f32 %v2157, %v2160
    %vm2162 = vweird.f32 %v2156
    %vm2163 = vweird.f32 %v2157
    %vm2164 = vmor %vm2162, %vm2163
    %v2165 = vsel %vm2164, %v2157, %v2161
    %v2166 = vand.u32 2147483647, %v2156
    %vm2167 = vcmp.eq.f32.partialorder %v2166, 8.507059e+37
    %v2168 = vand.u32 %v2156, 2147483648
    %v2169 = vor.u32 1.1754944e-38, %v2168
    %v2170 = vsel %vm2167, %v2169, %v2165
    %v2171 = vmul.f32 1.0, %v2170
    %v2172 = vtanh.pop %v2132
    %v2173 = vxor.u32 %v2133, 2147483648
    %v2174 = vmul.f32 %v2173, 1.442695
    %v2175 = vpow.pop %v2174
    %v2176 = vadd.f32 %v2175, 1.0
    %v2177 = vrcp.pop %v2176
    %v2178 = vmul.f32 %v2176, %v2177
    %v2179 = vsub.f32 1.0, %v2178
    %v2180 = vmul.f32 %v2177, %v2179
    %v2181 = vadd.f32 %v2177, %v2180
    %vm2182 = vweird.f32 %v2176
    %vm2183 = vweird.f32 %v2177
    %vm2184 = vmor %vm2182, %vm2183
    %v2185 = vsel %vm2184, %v2177, %v2181
    %v2186 = vand.u32 2147483647, %v2176
    %vm2187 = vcmp.eq.f32.partialorder %v2186, 8.507059e+37
    %v2188 = vand.u32 %v2176, 2147483648
    %v2189 = vor.u32 1.1754944e-38, %v2188
    %v2190 = vsel %vm2187, %v2189, %v2185
    %v2191 = vmul.f32 1.0, %v2190
    %v2193 = vrot.slane %v1847, 6
    %v2195 = vmul.f32 %v2171, %v2193
    %v2196 = vmul.f32 %v2152, %v2172
    %v2197 = vadd.f32 %v2195, %v2196
    %v2198 = vtanh.pop %v2197
    %v2199 = vmul.f32 %v2191, %v2198
    %v2200 = vmax.f32 %v2199, 0.0
    %v2201 = vpack.c.bf16 %v1988, %v1988
    %v2203 = vrot.slane %v2201, 3
    %2205 = vmatpush.bf16.msra.mxu0 %v504
    %2206 = vmatpush.bf16.msra.mxu0 %v500
    %2207 = vmatpush.bf16.msra.mxu0 %v496
    %2208 = vmatpush.bf16.msra.mxu0 %v492
    %2209 = vmatpush.bf16.msra.mxu0 %v488
    %2210 = vmatpush.bf16.msra.mxu0 %v484
    %2211 = vmatpush.bf16.msra.mxu0 %v480
    %2212 = vmatpush.bf16.msra.mxu0 %v476
    %2213 = vmatmul.bf16.gmra.mxu0 %v2203
    %v2214 = vpop.f32.mrf.mxu0
    %v2215 = vadd.f32 0.0, %v2214
    %v2216 = vpop.f32.mrf.mxu0
    %2217 = vdwg.mxu0
    %2218 = vmatpush.bf16.msra.mxu0 %v505
    %2219 = vmatpush.bf16.msra.mxu0 %v501
    %2220 = vmatpush.bf16.msra.mxu0 %v497
    %2221 = vmatpush.bf16.msra.mxu0 %v493
    %2222 = vmatpush.bf16.msra.mxu0 %v489
    %2223 = vmatpush.bf16.msra.mxu0 %v485
    %2224 = vmatpush.bf16.msra.mxu0 %v481
    %2225 = vmatpush.bf16.msra.mxu0 %v477
    %2226 = vmatmul.bf16.gmra.mxu0 %v2203
    %v2227 = vpop.f32.mrf.mxu0
    %v2228 = vadd.f32 0.0, %v2227
    %v2229 = vpop.f32.mrf.mxu0
    %2230 = vdwg.mxu0
    %2231 = vmatpush.bf16.msra.mxu0 %v506
    %2232 = vmatpush.bf16.msra.mxu0 %v502
    %2233 = vmatpush.bf16.msra.mxu0 %v498
    %2234 = vmatpush.bf16.msra.mxu0 %v494
    %2235 = vmatpush.bf16.msra.mxu0 %v490
    %2236 = vmatpush.bf16.msra.mxu0 %v486
    %2237 = vmatpush.bf16.msra.mxu0 %v482
    %2238 = vmatpush.bf16.msra.mxu0 %v478
    %2239 = vmatmul.bf16.gmra.mxu0 %v2203
    %v2240 = vpop.f32.mrf.mxu0
    %v2241 = vadd.f32 0.0, %v2240
    %v2242 = vpop.f32.mrf.mxu0
    %2243 = vdwg.mxu0
    %2244 = vmatpush.bf16.msra.mxu0 %v507
    %2245 = vmatpush.bf16.msra.mxu0 %v503
    %2246 = vmatpush.bf16.msra.mxu0 %v499
    %2247 = vmatpush.bf16.msra.mxu0 %v495
    %2248 = vmatpush.bf16.msra.mxu0 %v491
    %2249 = vmatpush.bf16.msra.mxu0 %v487
    %2250 = vmatpush.bf16.msra.mxu0 %v483
    %2251 = vmatpush.bf16.msra.mxu0 %v479
    %2252 = vmatmul.bf16.gmra.mxu0 %v2203
    %v2253 = vpop.f32.mrf.mxu0
    %v2254 = vadd.f32 0.0, %v2253
    %v2255 = vpop.f32.mrf.mxu0
    %2256 = vdwg.mxu0
    %v2257 = vadd.f32 %v150, %v2215
    %v2258 = vadd.f32 %v164, %v2228
    %v2259 = vadd.f32 %v178, %v2241
    %v2260 = vadd.f32 %v192, %v2254
    %v2261 = vxor.u32 %v2257, 2147483648
    %v2262 = vmul.f32 %v2261, 1.442695
    %v2263 = vpow.pop %v2262
    %v2264 = vadd.f32 %v2263, 1.0
    %v2265 = vrcp.pop %v2264
    %v2266 = vmul.f32 %v2264, %v2265
    %v2267 = vsub.f32 1.0, %v2266
    %v2268 = vmul.f32 %v2265, %v2267
    %v2269 = vadd.f32 %v2265, %v2268
    %vm2270 = vweird.f32 %v2264
    %vm2271 = vweird.f32 %v2265
    %vm2272 = vmor %vm2270, %vm2271
    %v2273 = vsel %vm2272, %v2265, %v2269
    %v2274 = vand.u32 2147483647, %v2264
    %vm2275 = vcmp.eq.f32.partialorder %v2274, 8.507059e+37
    %v2276 = vand.u32 %v2264, 2147483648
    %v2277 = vor.u32 1.1754944e-38, %v2276
    %v2278 = vsel %vm2275, %v2277, %v2273
    %v2279 = vmul.f32 1.0, %v2278
    %v2280 = vxor.u32 %v2258, 2147483648
    %v2281 = vmul.f32 %v2280, 1.442695
    %v2282 = vpow.pop %v2281
    %v2283 = vadd.f32 %v2282, 1.0
    %v2284 = vrcp.pop %v2283
    %v2285 = vmul.f32 %v2283, %v2284
    %v2286 = vsub.f32 1.0, %v2285
    %v2287 = vmul.f32 %v2284, %v2286
    %v2288 = vadd.f32 %v2284, %v2287
    %vm2289 = vweird.f32 %v2283
    %vm2290 = vweird.f32 %v2284
    %vm2291 = vmor %vm2289, %vm2290
    %v2292 = vsel %vm2291, %v2284, %v2288
    %v2293 = vand.u32 2147483647, %v2283
    %vm2294 = vcmp.eq.f32.partialorder %v2293, 8.507059e+37
    %v2295 = vand.u32 %v2283, 2147483648
    %v2296 = vor.u32 1.1754944e-38, %v2295
    %v2297 = vsel %vm2294, %v2296, %v2292
    %v2298 = vmul.f32 1.0, %v2297
    %v2299 = vtanh.pop %v2259
    %v2300 = vxor.u32 %v2260, 2147483648
    %v2301 = vmul.f32 %v2300, 1.442695
    %v2302 = vpow.pop %v2301
    %v2303 = vadd.f32 %v2302, 1.0
    %v2304 = vrcp.pop %v2303
    %v2305 = vmul.f32 %v2303, %v2304
    %v2306 = vsub.f32 1.0, %v2305
    %v2307 = vmul.f32 %v2304, %v2306
    %v2308 = vadd.f32 %v2304, %v2307
    %vm2309 = vweird.f32 %v2303
    %vm2310 = vweird.f32 %v2304
    %vm2311 = vmor %vm2309, %vm2310
    %v2312 = vsel %vm2311, %v2304, %v2308
    %v2313 = vand.u32 2147483647, %v2303
    %vm2314 = vcmp.eq.f32.partialorder %v2313, 8.507059e+37
    %v2315 = vand.u32 %v2303, 2147483648
    %v2316 = vor.u32 1.1754944e-38, %v2315
    %v2317 = vsel %vm2314, %v2316, %v2312
    %v2318 = vmul.f32 1.0, %v2317
    %v2320 = vrot.slane %v1986, 6
    %v2322 = vmul.f32 %v2298, %v2320
    %v2323 = vmul.f32 %v2279, %v2299
    %v2324 = vadd.f32 %v2322, %v2323
    %v2325 = vtanh.pop %v2324
    %v2326 = vmul.f32 %v2318, %v2325
    %v2327 = vmax.f32 %v2326, 0.0
    %v2328 = vpack.c.bf16 %v2327, %v2327
    %2329 = vmatpush.bf16.msra.mxu0 %v785
    %2330 = vmatpush.bf16.msra.mxu0 %v781
    %2331 = vmatpush.bf16.msra.mxu0 %v777
    %2332 = vmatpush.bf16.msra.mxu0 %v773
    %2333 = vmatpush.bf16.msra.mxu0 %v769
    %2334 = vmatpush.bf16.msra.mxu0 %v765
    %2335 = vmatpush.bf16.msra.mxu0 %v761
    %2336 = vmatpush.bf16.msra.mxu0 %v757
    %2337 = vmatmul.bf16.gmra.mxu0 %v2328
    %v2338 = vpop.f32.mrf.mxu0
    %v2339 = vadd.f32 0.0, %v2338
    %v2340 = vpop.f32.mrf.mxu0
    %2341 = vdwg.mxu0
    %2342 = vmatpush.bf16.msra.mxu0 %v786
    %2343 = vmatpush.bf16.msra.mxu0 %v782
    %2344 = vmatpush.bf16.msra.mxu0 %v778
    %2345 = vmatpush.bf16.msra.mxu0 %v774
    %2346 = vmatpush.bf16.msra.mxu0 %v770
    %2347 = vmatpush.bf16.msra.mxu0 %v766
    %2348 = vmatpush.bf16.msra.mxu0 %v762
    %2349 = vmatpush.bf16.msra.mxu0 %v758
    %2350 = vmatmul.bf16.gmra.mxu0 %v2328
    %v2351 = vpop.f32.mrf.mxu0
    %v2352 = vadd.f32 0.0, %v2351
    %v2353 = vpop.f32.mrf.mxu0
    %2354 = vdwg.mxu0
    %2355 = vmatpush.bf16.msra.mxu0 %v787
    %2356 = vmatpush.bf16.msra.mxu0 %v783
    %2357 = vmatpush.bf16.msra.mxu0 %v779
    %2358 = vmatpush.bf16.msra.mxu0 %v775
    %2359 = vmatpush.bf16.msra.mxu0 %v771
    %2360 = vmatpush.bf16.msra.mxu0 %v767
    %2361 = vmatpush.bf16.msra.mxu0 %v763
    %2362 = vmatpush.bf16.msra.mxu0 %v759
    %2363 = vmatmul.bf16.gmra.mxu0 %v2328
    %v2364 = vpop.f32.mrf.mxu0
    %v2365 = vadd.f32 0.0, %v2364
    %v2366 = vpop.f32.mrf.mxu0
    %2367 = vdwg.mxu0
    %2368 = vmatpush.bf16.msra.mxu0 %v788
    %2369 = vmatpush.bf16.msra.mxu0 %v784
    %2370 = vmatpush.bf16.msra.mxu0 %v780
    %2371 = vmatpush.bf16.msra.mxu0 %v776
    %2372 = vmatpush.bf16.msra.mxu0 %v772
    %2373 = vmatpush.bf16.msra.mxu0 %v768
    %2374 = vmatpush.bf16.msra.mxu0 %v764
    %2375 = vmatpush.bf16.msra.mxu0 %v760
    %2376 = vmatmul.bf16.gmra.mxu0 %v2328
    %v2377 = vpop.f32.mrf.mxu0
    %v2378 = vadd.f32 0.0, %v2377
    %v2379 = vpop.f32.mrf.mxu0
    %2380 = vdwg.mxu0
    %v2381 = vadd.f32 %v240, %v2339
    %v2382 = vadd.f32 %v254, %v2352
    %v2383 = vadd.f32 %v268, %v2365
    %v2384 = vadd.f32 %v282, %v2378
    %v2385 = vpack.c.bf16 %v2199, %v2199
    %v2387 = vrot.slane %v2385, 3
    %2389 = vmatpush.bf16.msra.mxu0 %v1001
    %2390 = vmatpush.bf16.msra.mxu0 %v997
    %2391 = vmatpush.bf16.msra.mxu0 %v993
    %2392 = vmatpush.bf16.msra.mxu0 %v989
    %2393 = vmatpush.bf16.msra.mxu0 %v985
    %2394 = vmatpush.bf16.msra.mxu0 %v981
    %2395 = vmatpush.bf16.msra.mxu0 %v977
    %2396 = vmatpush.bf16.msra.mxu0 %v973
    %2397 = vmatmul.bf16.gmra.mxu0 %v2387
    %v2398 = vpop.f32.mrf.mxu0
    %v2399 = vadd.f32 0.0, %v2398
    %v2400 = vpop.f32.mrf.mxu0
    %2401 = vdwg.mxu0
    %2402 = vmatpush.bf16.msra.mxu0 %v1002
    %2403 = vmatpush.bf16.msra.mxu0 %v998
    %2404 = vmatpush.bf16.msra.mxu0 %v994
    %2405 = vmatpush.bf16.msra.mxu0 %v990
    %2406 = vmatpush.bf16.msra.mxu0 %v986
    %2407 = vmatpush.bf16.msra.mxu0 %v982
    %2408 = vmatpush.bf16.msra.mxu0 %v978
    %2409 = vmatpush.bf16.msra.mxu0 %v974
    %2410 = vmatmul.bf16.gmra.mxu0 %v2387
    %v2411 = vpop.f32.mrf.mxu0
    %v2412 = vadd.f32 0.0, %v2411
    %v2413 = vpop.f32.mrf.mxu0
    %2414 = vdwg.mxu0
    %2415 = vmatpush.bf16.msra.mxu0 %v1003
    %2416 = vmatpush.bf16.msra.mxu0 %v999
    %2417 = vmatpush.bf16.msra.mxu0 %v995
    %2418 = vmatpush.bf16.msra.mxu0 %v991
    %2419 = vmatpush.bf16.msra.mxu0 %v987
    %2420 = vmatpush.bf16.msra.mxu0 %v983
    %2421 = vmatpush.bf16.msra.mxu0 %v979
    %2422 = vmatpush.bf16.msra.mxu0 %v975
    %2423 = vmatmul.bf16.gmra.mxu0 %v2387
    %v2424 = vpop.f32.mrf.mxu0
    %v2425 = vadd.f32 0.0, %v2424
    %v2426 = vpop.f32.mrf.mxu0
    %2427 = vdwg.mxu0
    %2428 = vmatpush.bf16.msra.mxu0 %v1004
    %2429 = vmatpush.bf16.msra.mxu0 %v1000
    %2430 = vmatpush.bf16.msra.mxu0 %v996
    %2431 = vmatpush.bf16.msra.mxu0 %v992
    %2432 = vmatpush.bf16.msra.mxu0 %v988
    %2433 = vmatpush.bf16.msra.mxu0 %v984
    %2434 = vmatpush.bf16.msra.mxu0 %v980
    %2435 = vmatpush.bf16.msra.mxu0 %v976
    %2436 = vmatmul.bf16.gmra.mxu0 %v2387
    %v2437 = vpop.f32.mrf.mxu0
    %v2438 = vadd.f32 0.0, %v2437
    %v2439 = vpop.f32.mrf.mxu0
    %2440 = vdwg.mxu0
    %v2441 = vadd.f32 %v2381, %v2399
    %v2442 = vadd.f32 %v2382, %v2412
    %v2443 = vadd.f32 %v2383, %v2425
    %v2444 = vadd.f32 %v2384, %v2438
    %v2445 = vxor.u32 %v2441, 2147483648
    %v2446 = vmul.f32 %v2445, 1.442695
    %v2447 = vpow.pop %v2446
    %v2448 = vadd.f32 %v2447, 1.0
    %v2449 = vrcp.pop %v2448
    %v2450 = vmul.f32 %v2448, %v2449
    %v2451 = vsub.f32 1.0, %v2450
    %v2452 = vmul.f32 %v2449, %v2451
    %v2453 = vadd.f32 %v2449, %v2452
    %vm2454 = vweird.f32 %v2448
    %vm2455 = vweird.f32 %v2449
    %vm2456 = vmor %vm2454, %vm2455
    %v2457 = vsel %vm2456, %v2449, %v2453
    %v2458 = vand.u32 2147483647, %v2448
    %vm2459 = vcmp.eq.f32.partialorder %v2458, 8.507059e+37
    %v2460 = vand.u32 %v2448, 2147483648
    %v2461 = vor.u32 1.1754944e-38, %v2460
    %v2462 = vsel %vm2459, %v2461, %v2457
    %v2463 = vmul.f32 1.0, %v2462
    %v2464 = vxor.u32 %v2442, 2147483648
    %v2465 = vmul.f32 %v2464, 1.442695
    %v2466 = vpow.pop %v2465
    %v2467 = vadd.f32 %v2466, 1.0
    %v2468 = vrcp.pop %v2467
    %v2469 = vmul.f32 %v2467, %v2468
    %v2470 = vsub.f32 1.0, %v2469
    %v2471 = vmul.f32 %v2468, %v2470
    %v2472 = vadd.f32 %v2468, %v2471
    %vm2473 = vweird.f32 %v2467
    %vm2474 = vweird.f32 %v2468
    %vm2475 = vmor %vm2473, %vm2474
    %v2476 = vsel %vm2475, %v2468, %v2472
    %v2477 = vand.u32 2147483647, %v2467
    %vm2478 = vcmp.eq.f32.partialorder %v2477, 8.507059e+37
    %v2479 = vand.u32 %v2467, 2147483648
    %v2480 = vor.u32 1.1754944e-38, %v2479
    %v2481 = vsel %vm2478, %v2480, %v2476
    %v2482 = vmul.f32 1.0, %v2481
    %v2483 = vtanh.pop %v2443
    %v2484 = vxor.u32 %v2444, 2147483648
    %v2485 = vmul.f32 %v2484, 1.442695
    %v2486 = vpow.pop %v2485
    %v2487 = vadd.f32 %v2486, 1.0
    %v2488 = vrcp.pop %v2487
    %v2489 = vmul.f32 %v2487, %v2488
    %v2490 = vsub.f32 1.0, %v2489
    %v2491 = vmul.f32 %v2488, %v2490
    %v2492 = vadd.f32 %v2488, %v2491
    %vm2493 = vweird.f32 %v2487
    %vm2494 = vweird.f32 %v2488
    %vm2495 = vmor %vm2493, %vm2494
    %v2496 = vsel %vm2495, %v2488, %v2492
    %v2497 = vand.u32 2147483647, %v2487
    %vm2498 = vcmp.eq.f32.partialorder %v2497, 8.507059e+37
    %v2499 = vand.u32 %v2487, 2147483648
    %v2500 = vor.u32 1.1754944e-38, %v2499
    %v2501 = vsel %vm2498, %v2500, %v2496
    %v2502 = vmul.f32 1.0, %v2501
    %v2504 = vrot.slane %v2197, 6
    %v2506 = vmul.f32 %v2482, %v2504
    %v2507 = vmul.f32 %v2463, %v2483
    %v2508 = vadd.f32 %v2506, %v2507
    %v2509 = vtanh.pop %v2508
    %v2510 = vmul.f32 %v2502, %v2509
    %v2511 = vmax.f32 %v2510, 0.0
    %v2512 = vpack.c.bf16 %v2326, %v2326
    %2513 = vmatpush.bf16.msra.mxu0 %v504
    %2514 = vmatpush.bf16.msra.mxu0 %v500
    %2515 = vmatpush.bf16.msra.mxu0 %v496
    %2516 = vmatpush.bf16.msra.mxu0 %v492
    %2517 = vmatpush.bf16.msra.mxu0 %v488
    %2518 = vmatpush.bf16.msra.mxu0 %v484
    %2519 = vmatpush.bf16.msra.mxu0 %v480
    %2520 = vmatpush.bf16.msra.mxu0 %v476
    %2521 = vmatmul.bf16.gmra.mxu0 %v2512
    %v2522 = vpop.f32.mrf.mxu0
    %v2523 = vadd.f32 0.0, %v2522
    %v2524 = vpop.f32.mrf.mxu0
    %2525 = vdwg.mxu0
    %2526 = vmatpush.bf16.msra.mxu0 %v505
    %2527 = vmatpush.bf16.msra.mxu0 %v501
    %2528 = vmatpush.bf16.msra.mxu0 %v497
    %2529 = vmatpush.bf16.msra.mxu0 %v493
    %2530 = vmatpush.bf16.msra.mxu0 %v489
    %2531 = vmatpush.bf16.msra.mxu0 %v485
    %2532 = vmatpush.bf16.msra.mxu0 %v481
    %2533 = vmatpush.bf16.msra.mxu0 %v477
    %2534 = vmatmul.bf16.gmra.mxu0 %v2512
    %v2535 = vpop.f32.mrf.mxu0
    %v2536 = vadd.f32 0.0, %v2535
    %v2537 = vpop.f32.mrf.mxu0
    %2538 = vdwg.mxu0
    %2539 = vmatpush.bf16.msra.mxu0 %v506
    %2540 = vmatpush.bf16.msra.mxu0 %v502
    %2541 = vmatpush.bf16.msra.mxu0 %v498
    %2542 = vmatpush.bf16.msra.mxu0 %v494
    %2543 = vmatpush.bf16.msra.mxu0 %v490
    %2544 = vmatpush.bf16.msra.mxu0 %v486
    %2545 = vmatpush.bf16.msra.mxu0 %v482
    %2546 = vmatpush.bf16.msra.mxu0 %v478
    %2547 = vmatmul.bf16.gmra.mxu0 %v2512
    %v2548 = vpop.f32.mrf.mxu0
    %v2549 = vadd.f32 0.0, %v2548
    %v2550 = vpop.f32.mrf.mxu0
    %2551 = vdwg.mxu0
    %2552 = vmatpush.bf16.msra.mxu0 %v507
    %2553 = vmatpush.bf16.msra.mxu0 %v503
    %2554 = vmatpush.bf16.msra.mxu0 %v499
    %2555 = vmatpush.bf16.msra.mxu0 %v495
    %2556 = vmatpush.bf16.msra.mxu0 %v491
    %2557 = vmatpush.bf16.msra.mxu0 %v487
    %2558 = vmatpush.bf16.msra.mxu0 %v483
    %2559 = vmatpush.bf16.msra.mxu0 %v479
    %2560 = vmatmul.bf16.gmra.mxu0 %v2512
    %v2561 = vpop.f32.mrf.mxu0
    %v2562 = vadd.f32 0.0, %v2561
    %v2563 = vpop.f32.mrf.mxu0
    %2564 = vdwg.mxu0
    %v2569 = vrot.slane %v2523, 6
    %v2570 = vrot.slane %v2536, 6
    %v2571 = vrot.slane %v2549, 6
    %v2572 = vrot.slane %v2562, 6
    %v2577 = vadd.f32 %v150, %v2569
    %v2578 = vadd.f32 %v164, %v2570
    %v2579 = vadd.f32 %v178, %v2571
    %v2580 = vadd.f32 %v192, %v2572
    %v2581 = vxor.u32 %v2577, 2147483648
    %v2582 = vmul.f32 %v2581, 1.442695
    %v2583 = vpow.pop %v2582
    %v2584 = vadd.f32 %v2583, 1.0
    %v2585 = vrcp.pop %v2584
    %v2586 = vmul.f32 %v2584, %v2585
    %v2587 = vsub.f32 1.0, %v2586
    %v2588 = vmul.f32 %v2585, %v2587
    %v2589 = vadd.f32 %v2585, %v2588
    %vm2590 = vweird.f32 %v2584
    %vm2591 = vweird.f32 %v2585
    %vm2592 = vmor %vm2590, %vm2591
    %v2593 = vsel %vm2592, %v2585, %v2589
    %v2594 = vand.u32 2147483647, %v2584
    %vm2595 = vcmp.eq.f32.partialorder %v2594, 8.507059e+37
    %v2596 = vand.u32 %v2584, 2147483648
    %v2597 = vor.u32 1.1754944e-38, %v2596
    %v2598 = vsel %vm2595, %v2597, %v2593
    %v2599 = vmul.f32 1.0, %v2598
    %v2600 = vxor.u32 %v2578, 2147483648
    %v2601 = vmul.f32 %v2600, 1.442695
    %v2602 = vpow.pop %v2601
    %v2603 = vadd.f32 %v2602, 1.0
    %v2604 = vrcp.pop %v2603
    %v2605 = vmul.f32 %v2603, %v2604
    %v2606 = vsub.f32 1.0, %v2605
    %v2607 = vmul.f32 %v2604, %v2606
    %v2608 = vadd.f32 %v2604, %v2607
    %vm2609 = vweird.f32 %v2603
    %vm2610 = vweird.f32 %v2604
    %vm2611 = vmor %vm2609, %vm2610
    %v2612 = vsel %vm2611, %v2604, %v2608
    %v2613 = vand.u32 2147483647, %v2603
    %vm2614 = vcmp.eq.f32.partialorder %v2613, 8.507059e+37
    %v2615 = vand.u32 %v2603, 2147483648
    %v2616 = vor.u32 1.1754944e-38, %v2615
    %v2617 = vsel %vm2614, %v2616, %v2612
    %v2618 = vmul.f32 1.0, %v2617
    %v2619 = vtanh.pop %v2579
    %v2620 = vxor.u32 %v2580, 2147483648
    %v2621 = vmul.f32 %v2620, 1.442695
    %v2622 = vpow.pop %v2621
    %v2623 = vadd.f32 %v2622, 1.0
    %v2624 = vrcp.pop %v2623
    %v2625 = vmul.f32 %v2623, %v2624
    %v2626 = vsub.f32 1.0, %v2625
    %v2627 = vmul.f32 %v2624, %v2626
    %v2628 = vadd.f32 %v2624, %v2627
    %vm2629 = vweird.f32 %v2623
    %vm2630 = vweird.f32 %v2624
    %vm2631 = vmor %vm2629, %vm2630
    %v2632 = vsel %vm2631, %v2624, %v2628
    %v2633 = vand.u32 2147483647, %v2623
    %vm2634 = vcmp.eq.f32.partialorder %v2633, 8.507059e+37
    %v2635 = vand.u32 %v2623, 2147483648
    %v2636 = vor.u32 1.1754944e-38, %v2635
    %v2637 = vsel %vm2634, %v2636, %v2632
    %v2638 = vmul.f32 1.0, %v2637
    %v2640 = vrot.slane %v2324, 6
    %v2642 = vmul.f32 %v2618, %v2640
    %v2643 = vmul.f32 %v2599, %v2619
    %v2644 = vadd.f32 %v2642, %v2643
    %v2645 = vtanh.pop %v2644
    %v2646 = vmul.f32 %v2638, %v2645
    %v2647 = vmax.f32 %v2646, 0.0
    %v2648 = vpack.c.bf16 %v2647, %v2647
    %v2650 = vrot.slane %v2648, 1
    %2652 = vmatpush.bf16.msra.mxu0 %v785
    %2653 = vmatpush.bf16.msra.mxu0 %v781
    %2654 = vmatpush.bf16.msra.mxu0 %v777
    %2655 = vmatpush.bf16.msra.mxu0 %v773
    %2656 = vmatpush.bf16.msra.mxu0 %v769
    %2657 = vmatpush.bf16.msra.mxu0 %v765
    %2658 = vmatpush.bf16.msra.mxu0 %v761
    %2659 = vmatpush.bf16.msra.mxu0 %v757
    %2660 = vmatmul.bf16.gmra.mxu0 %v2650
    %v2661 = vpop.f32.mrf.mxu0
    %v2662 = vadd.f32 0.0, %v2661
    %v2663 = vpop.f32.mrf.mxu0
    %2664 = vdwg.mxu0
    %2665 = vmatpush.bf16.msra.mxu0 %v786
    %2666 = vmatpush.bf16.msra.mxu0 %v782
    %2667 = vmatpush.bf16.msra.mxu0 %v778
    %2668 = vmatpush.bf16.msra.mxu0 %v774
    %2669 = vmatpush.bf16.msra.mxu0 %v770
    %2670 = vmatpush.bf16.msra.mxu0 %v766
    %2671 = vmatpush.bf16.msra.mxu0 %v762
    %2672 = vmatpush.bf16.msra.mxu0 %v758
    %2673 = vmatmul.bf16.gmra.mxu0 %v2650
    %v2674 = vpop.f32.mrf.mxu0
    %v2675 = vadd.f32 0.0, %v2674
    %v2676 = vpop.f32.mrf.mxu0
    %2677 = vdwg.mxu0
    %2678 = vmatpush.bf16.msra.mxu0 %v787
    %2679 = vmatpush.bf16.msra.mxu0 %v783
    %2680 = vmatpush.bf16.msra.mxu0 %v779
    %2681 = vmatpush.bf16.msra.mxu0 %v775
    %2682 = vmatpush.bf16.msra.mxu0 %v771
    %2683 = vmatpush.bf16.msra.mxu0 %v767
    %2684 = vmatpush.bf16.msra.mxu0 %v763
    %2685 = vmatpush.bf16.msra.mxu0 %v759
    %2686 = vmatmul.bf16.gmra.mxu0 %v2650
    %v2687 = vpop.f32.mrf.mxu0
    %v2688 = vadd.f32 0.0, %v2687
    %v2689 = vpop.f32.mrf.mxu0
    %2690 = vdwg.mxu0
    %2691 = vmatpush.bf16.msra.mxu0 %v788
    %2692 = vmatpush.bf16.msra.mxu0 %v784
    %2693 = vmatpush.bf16.msra.mxu0 %v780
    %2694 = vmatpush.bf16.msra.mxu0 %v776
    %2695 = vmatpush.bf16.msra.mxu0 %v772
    %2696 = vmatpush.bf16.msra.mxu0 %v768
    %2697 = vmatpush.bf16.msra.mxu0 %v764
    %2698 = vmatpush.bf16.msra.mxu0 %v760
    %2699 = vmatmul.bf16.gmra.mxu0 %v2650
    %v2700 = vpop.f32.mrf.mxu0
    %v2701 = vadd.f32 0.0, %v2700
    %v2702 = vpop.f32.mrf.mxu0
    %2703 = vdwg.mxu0
    %v2708 = vrot.slane %v2662, 6
    %v2709 = vrot.slane %v2675, 6
    %v2710 = vrot.slane %v2688, 6
    %v2711 = vrot.slane %v2701, 6
    %v2716 = vadd.f32 %v240, %v2708
    %v2717 = vadd.f32 %v254, %v2709
    %v2718 = vadd.f32 %v268, %v2710
    %v2719 = vadd.f32 %v282, %v2711
    %v2720 = vpack.c.bf16 %v2510, %v2510
    %2721 = vmatpush.bf16.msra.mxu0 %v1001
    %2722 = vmatpush.bf16.msra.mxu0 %v997
    %2723 = vmatpush.bf16.msra.mxu0 %v993
    %2724 = vmatpush.bf16.msra.mxu0 %v989
    %2725 = vmatpush.bf16.msra.mxu0 %v985
    %2726 = vmatpush.bf16.msra.mxu0 %v981
    %2727 = vmatpush.bf16.msra.mxu0 %v977
    %2728 = vmatpush.bf16.msra.mxu0 %v973
    %2729 = vmatmul.bf16.gmra.mxu0 %v2720
    %v2730 = vpop.f32.mrf.mxu0
    %v2731 = vadd.f32 0.0, %v2730
    %v2732 = vpop.f32.mrf.mxu0
    %2733 = vdwg.mxu0
    %2734 = vmatpush.bf16.msra.mxu0 %v1002
    %2735 = vmatpush.bf16.msra.mxu0 %v998
    %2736 = vmatpush.bf16.msra.mxu0 %v994
    %2737 = vmatpush.bf16.msra.mxu0 %v990
    %2738 = vmatpush.bf16.msra.mxu0 %v986
    %2739 = vmatpush.bf16.msra.mxu0 %v982
    %2740 = vmatpush.bf16.msra.mxu0 %v978
    %2741 = vmatpush.bf16.msra.mxu0 %v974
    %2742 = vmatmul.bf16.gmra.mxu0 %v2720
    %v2743 = vpop.f32.mrf.mxu0
    %v2744 = vadd.f32 0.0, %v2743
    %v2745 = vpop.f32.mrf.mxu0
    %2746 = vdwg.mxu0
    %2747 = vmatpush.bf16.msra.mxu0 %v1003
    %2748 = vmatpush.bf16.msra.mxu0 %v999
    %2749 = vmatpush.bf16.msra.mxu0 %v995
    %2750 = vmatpush.bf16.msra.mxu0 %v991
    %2751 = vmatpush.bf16.msra.mxu0 %v987
    %2752 = vmatpush.bf16.msra.mxu0 %v983
    %2753 = vmatpush.bf16.msra.mxu0 %v979
    %2754 = vmatpush.bf16.msra.mxu0 %v975
    %2755 = vmatmul.bf16.gmra.mxu0 %v2720
    %v2756 = vpop.f32.mrf.mxu0
    %v2757 = vadd.f32 0.0, %v2756
    %v2758 = vpop.f32.mrf.mxu0
    %2759 = vdwg.mxu0
    %2760 = vmatpush.bf16.msra.mxu0 %v1004
    %2761 = vmatpush.bf16.msra.mxu0 %v1000
    %2762 = vmatpush.bf16.msra.mxu0 %v996
    %2763 = vmatpush.bf16.msra.mxu0 %v992
    %2764 = vmatpush.bf16.msra.mxu0 %v988
    %2765 = vmatpush.bf16.msra.mxu0 %v984
    %2766 = vmatpush.bf16.msra.mxu0 %v980
    %2767 = vmatpush.bf16.msra.mxu0 %v976
    %2768 = vmatmul.bf16.gmra.mxu0 %v2720
    %v2769 = vpop.f32.mrf.mxu0
    %v2770 = vadd.f32 0.0, %v2769
    %v2771 = vpop.f32.mrf.mxu0
    %2772 = vdwg.mxu0
    %v2777 = vrot.slane %v2731, 6
    %v2778 = vrot.slane %v2744, 6
    %v2779 = vrot.slane %v2757, 6
    %v2780 = vrot.slane %v2770, 6
    %v2785 = vadd.f32 %v2716, %v2777
    %v2786 = vadd.f32 %v2717, %v2778
    %v2787 = vadd.f32 %v2718, %v2779
    %v2788 = vadd.f32 %v2719, %v2780
    %v2789 = vxor.u32 %v2785, 2147483648
    %v2790 = vmul.f32 %v2789, 1.442695
    %v2791 = vpow.pop %v2790
    %v2792 = vadd.f32 %v2791, 1.0
    %v2793 = vrcp.pop %v2792
    %v2794 = vmul.f32 %v2792, %v2793
    %v2795 = vsub.f32 1.0, %v2794
    %v2796 = vmul.f32 %v2793, %v2795
    %v2797 = vadd.f32 %v2793, %v2796
    %vm2798 = vweird.f32 %v2792
    %vm2799 = vweird.f32 %v2793
    %vm2800 = vmor %vm2798, %vm2799
    %v2801 = vsel %vm2800, %v2793, %v2797
    %v2802 = vand.u32 2147483647, %v2792
    %vm2803 = vcmp.eq.f32.partialorder %v2802, 8.507059e+37
    %v2804 = vand.u32 %v2792, 2147483648
    %v2805 = vor.u32 1.1754944e-38, %v2804
    %v2806 = vsel %vm2803, %v2805, %v2801
    %v2807 = vmul.f32 1.0, %v2806
    %v2808 = vxor.u32 %v2786, 2147483648
    %v2809 = vmul.f32 %v2808, 1.442695
    %v2810 = vpow.pop %v2809
    %v2811 = vadd.f32 %v2810, 1.0
    %v2812 = vrcp.pop %v2811
    %v2813 = vmul.f32 %v2811, %v2812
    %v2814 = vsub.f32 1.0, %v2813
    %v2815 = vmul.f32 %v2812, %v2814
    %v2816 = vadd.f32 %v2812, %v2815
    %vm2817 = vweird.f32 %v2811
    %vm2818 = vweird.f32 %v2812
    %vm2819 = vmor %vm2817, %vm2818
    %v2820 = vsel %vm2819, %v2812, %v2816
    %v2821 = vand.u32 2147483647, %v2811
    %vm2822 = vcmp.eq.f32.partialorder %v2821, 8.507059e+37
    %v2823 = vand.u32 %v2811, 2147483648
    %v2824 = vor.u32 1.1754944e-38, %v2823
    %v2825 = vsel %vm2822, %v2824, %v2820
    %v2826 = vmul.f32 1.0, %v2825
    %v2827 = vtanh.pop %v2787
    %v2828 = vxor.u32 %v2788, 2147483648
    %v2829 = vmul.f32 %v2828, 1.442695
    %v2830 = vpow.pop %v2829
    %v2831 = vadd.f32 %v2830, 1.0
    %v2832 = vrcp.pop %v2831
    %v2833 = vmul.f32 %v2831, %v2832
    %v2834 = vsub.f32 1.0, %v2833
    %v2835 = vmul.f32 %v2832, %v2834
    %v2836 = vadd.f32 %v2832, %v2835
    %vm2837 = vweird.f32 %v2831
    %vm2838 = vweird.f32 %v2832
    %vm2839 = vmor %vm2837, %vm2838
    %v2840 = vsel %vm2839, %v2832, %v2836
    %v2841 = vand.u32 2147483647, %v2831
    %vm2842 = vcmp.eq.f32.partialorder %v2841, 8.507059e+37
    %v2843 = vand.u32 %v2831, 2147483648
    %v2844 = vor.u32 1.1754944e-38, %v2843
    %v2845 = vsel %vm2842, %v2844, %v2840
    %v2846 = vmul.f32 1.0, %v2845
    %v2848 = vrot.slane %v2508, 6
    %v2850 = vmul.f32 %v2826, %v2848
    %v2851 = vmul.f32 %v2807, %v2827
    %v2852 = vadd.f32 %v2850, %v2851
    %v2853 = vtanh.pop %v2852
    %v2854 = vmul.f32 %v2846, %v2853
    %v2855 = vmax.f32 %v2854, 0.0
    %v2856 = vpack.c.bf16 %v2646, %v2646
    %v2858 = vrot.slane %v2856, 1
    %2860 = vmatpush.bf16.msra.mxu0 %v504
    %2861 = vmatpush.bf16.msra.mxu0 %v500
    %2862 = vmatpush.bf16.msra.mxu0 %v496
    %2863 = vmatpush.bf16.msra.mxu0 %v492
    %2864 = vmatpush.bf16.msra.mxu0 %v488
    %2865 = vmatpush.bf16.msra.mxu0 %v484
    %2866 = vmatpush.bf16.msra.mxu0 %v480
    %2867 = vmatpush.bf16.msra.mxu0 %v476
    %2868 = vmatmul.bf16.gmra.mxu0 %v2858
    %v2869 = vpop.f32.mrf.mxu0
    %v2870 = vadd.f32 0.0, %v2869
    %v2871 = vpop.f32.mrf.mxu0
    %2872 = vdwg.mxu0
    %2873 = vmatpush.bf16.msra.mxu0 %v505
    %2874 = vmatpush.bf16.msra.mxu0 %v501
    %2875 = vmatpush.bf16.msra.mxu0 %v497
    %2876 = vmatpush.bf16.msra.mxu0 %v493
    %2877 = vmatpush.bf16.msra.mxu0 %v489
    %2878 = vmatpush.bf16.msra.mxu0 %v485
    %2879 = vmatpush.bf16.msra.mxu0 %v481
    %2880 = vmatpush.bf16.msra.mxu0 %v477
    %2881 = vmatmul.bf16.gmra.mxu0 %v2858
    %v2882 = vpop.f32.mrf.mxu0
    %v2883 = vadd.f32 0.0, %v2882
    %v2884 = vpop.f32.mrf.mxu0
    %2885 = vdwg.mxu0
    %2886 = vmatpush.bf16.msra.mxu0 %v506
    %2887 = vmatpush.bf16.msra.mxu0 %v502
    %2888 = vmatpush.bf16.msra.mxu0 %v498
    %2889 = vmatpush.bf16.msra.mxu0 %v494
    %2890 = vmatpush.bf16.msra.mxu0 %v490
    %2891 = vmatpush.bf16.msra.mxu0 %v486
    %2892 = vmatpush.bf16.msra.mxu0 %v482
    %2893 = vmatpush.bf16.msra.mxu0 %v478
    %2894 = vmatmul.bf16.gmra.mxu0 %v2858
    %v2895 = vpop.f32.mrf.mxu0
    %v2896 = vadd.f32 0.0, %v2895
    %v2897 = vpop.f32.mrf.mxu0
    %2898 = vdwg.mxu0
    %2899 = vmatpush.bf16.msra.mxu0 %v507
    %2900 = vmatpush.bf16.msra.mxu0 %v503
    %2901 = vmatpush.bf16.msra.mxu0 %v499
    %2902 = vmatpush.bf16.msra.mxu0 %v495
    %2903 = vmatpush.bf16.msra.mxu0 %v491
    %2904 = vmatpush.bf16.msra.mxu0 %v487
    %2905 = vmatpush.bf16.msra.mxu0 %v483
    %2906 = vmatpush.bf16.msra.mxu0 %v479
    %2907 = vmatmul.bf16.gmra.mxu0 %v2858
    %v2908 = vpop.f32.mrf.mxu0
    %v2909 = vadd.f32 0.0, %v2908
    %v2910 = vpop.f32.mrf.mxu0
    %2911 = vdwg.mxu0
    %v2916 = vrot.slane %v2870, 4
    %v2917 = vrot.slane %v2883, 4
    %v2918 = vrot.slane %v2896, 4
    %v2919 = vrot.slane %v2909, 4
    %v2924 = vadd.f32 %v150, %v2916
    %v2925 = vadd.f32 %v164, %v2917
    %v2926 = vadd.f32 %v178, %v2918
    %v2927 = vadd.f32 %v192, %v2919
    %v2928 = vxor.u32 %v2924, 2147483648
    %v2929 = vmul.f32 %v2928, 1.442695
    %v2930 = vpow.pop %v2929
    %v2931 = vadd.f32 %v2930, 1.0
    %v2932 = vrcp.pop %v2931
    %v2933 = vmul.f32 %v2931, %v2932
    %v2934 = vsub.f32 1.0, %v2933
    %v2935 = vmul.f32 %v2932, %v2934
    %v2936 = vadd.f32 %v2932, %v2935
    %vm2937 = vweird.f32 %v2931
    %vm2938 = vweird.f32 %v2932
    %vm2939 = vmor %vm2937, %vm2938
    %v2940 = vsel %vm2939, %v2932, %v2936
    %v2941 = vand.u32 2147483647, %v2931
    %vm2942 = vcmp.eq.f32.partialorder %v2941, 8.507059e+37
    %v2943 = vand.u32 %v2931, 2147483648
    %v2944 = vor.u32 1.1754944e-38, %v2943
    %v2945 = vsel %vm2942, %v2944, %v2940
    %v2946 = vmul.f32 1.0, %v2945
    %v2947 = vxor.u32 %v2925, 2147483648
    %v2948 = vmul.f32 %v2947, 1.442695
    %v2949 = vpow.pop %v2948
    %v2950 = vadd.f32 %v2949, 1.0
    %v2951 = vrcp.pop %v2950
    %v2952 = vmul.f32 %v2950, %v2951
    %v2953 = vsub.f32 1.0, %v2952
    %v2954 = vmul.f32 %v2951, %v2953
    %v2955 = vadd.f32 %v2951, %v2954
    %vm2956 = vweird.f32 %v2950
    %vm2957 = vweird.f32 %v2951
    %vm2958 = vmor %vm2956, %vm2957
    %v2959 = vsel %vm2958, %v2951, %v2955
    %v2960 = vand.u32 2147483647, %v2950
    %vm2961 = vcmp.eq.f32.partialorder %v2960, 8.507059e+37
    %v2962 = vand.u32 %v2950, 2147483648
    %v2963 = vor.u32 1.1754944e-38, %v2962
    %v2964 = vsel %vm2961, %v2963, %v2959
    %v2965 = vmul.f32 1.0, %v2964
    %v2966 = vtanh.pop %v2926
    %v2967 = vxor.u32 %v2927, 2147483648
    %v2968 = vmul.f32 %v2967, 1.442695
    %v2969 = vpow.pop %v2968
    %v2970 = vadd.f32 %v2969, 1.0
    %v2971 = vrcp.pop %v2970
    %v2972 = vmul.f32 %v2970, %v2971
    %v2973 = vsub.f32 1.0, %v2972
    %v2974 = vmul.f32 %v2971, %v2973
    %v2975 = vadd.f32 %v2971, %v2974
    %vm2976 = vweird.f32 %v2970
    %vm2977 = vweird.f32 %v2971
    %vm2978 = vmor %vm2976, %vm2977
    %v2979 = vsel %vm2978, %v2971, %v2975
    %v2980 = vand.u32 2147483647, %v2970
    %vm2981 = vcmp.eq.f32.partialorder %v2980, 8.507059e+37
    %v2982 = vand.u32 %v2970, 2147483648
    %v2983 = vor.u32 1.1754944e-38, %v2982
    %v2984 = vsel %vm2981, %v2983, %v2979
    %v2985 = vmul.f32 1.0, %v2984
    %v2987 = vrot.slane %v2644, 6
    %v2989 = vmul.f32 %v2965, %v2987
    %v2990 = vmul.f32 %v2946, %v2966
    %v2991 = vadd.f32 %v2989, %v2990
    %v2992 = vtanh.pop %v2991
    %v2993 = vmul.f32 %v2985, %v2992
    %v2994 = vmax.f32 %v2993, 0.0
    %v2995 = vpack.c.bf16 %v2994, %v2994
    %v2997 = vrot.slane %v2995, 2
    %2999 = vmatpush.bf16.msra.mxu0 %v785
    %3000 = vmatpush.bf16.msra.mxu0 %v781
    %3001 = vmatpush.bf16.msra.mxu0 %v777
    %3002 = vmatpush.bf16.msra.mxu0 %v773
    %3003 = vmatpush.bf16.msra.mxu0 %v769
    %3004 = vmatpush.bf16.msra.mxu0 %v765
    %3005 = vmatpush.bf16.msra.mxu0 %v761
    %3006 = vmatpush.bf16.msra.mxu0 %v757
    %3007 = vmatmul.bf16.gmra.mxu0 %v2997
    %v3008 = vpop.f32.mrf.mxu0
    %v3009 = vadd.f32 0.0, %v3008
    %v3010 = vpop.f32.mrf.mxu0
    %3011 = vdwg.mxu0
    %3012 = vmatpush.bf16.msra.mxu0 %v786
    %3013 = vmatpush.bf16.msra.mxu0 %v782
    %3014 = vmatpush.bf16.msra.mxu0 %v778
    %3015 = vmatpush.bf16.msra.mxu0 %v774
    %3016 = vmatpush.bf16.msra.mxu0 %v770
    %3017 = vmatpush.bf16.msra.mxu0 %v766
    %3018 = vmatpush.bf16.msra.mxu0 %v762
    %3019 = vmatpush.bf16.msra.mxu0 %v758
    %3020 = vmatmul.bf16.gmra.mxu0 %v2997
    %v3021 = vpop.f32.mrf.mxu0
    %v3022 = vadd.f32 0.0, %v3021
    %v3023 = vpop.f32.mrf.mxu0
    %3024 = vdwg.mxu0
    %3025 = vmatpush.bf16.msra.mxu0 %v787
    %3026 = vmatpush.bf16.msra.mxu0 %v783
    %3027 = vmatpush.bf16.msra.mxu0 %v779
    %3028 = vmatpush.bf16.msra.mxu0 %v775
    %3029 = vmatpush.bf16.msra.mxu0 %v771
    %3030 = vmatpush.bf16.msra.mxu0 %v767
    %3031 = vmatpush.bf16.msra.mxu0 %v763
    %3032 = vmatpush.bf16.msra.mxu0 %v759
    %3033 = vmatmul.bf16.gmra.mxu0 %v2997
    %v3034 = vpop.f32.mrf.mxu0
    %v3035 = vadd.f32 0.0, %v3034
    %v3036 = vpop.f32.mrf.mxu0
    %3037 = vdwg.mxu0
    %3038 = vmatpush.bf16.msra.mxu0 %v788
    %3039 = vmatpush.bf16.msra.mxu0 %v784
    %3040 = vmatpush.bf16.msra.mxu0 %v780
    %3041 = vmatpush.bf16.msra.mxu0 %v776
    %3042 = vmatpush.bf16.msra.mxu0 %v772
    %3043 = vmatpush.bf16.msra.mxu0 %v768
    %3044 = vmatpush.bf16.msra.mxu0 %v764
    %3045 = vmatpush.bf16.msra.mxu0 %v760
    %3046 = vmatmul.bf16.gmra.mxu0 %v2997
    %v3047 = vpop.f32.mrf.mxu0
    %v3048 = vadd.f32 0.0, %v3047
    %v3049 = vpop.f32.mrf.mxu0
    %3050 = vdwg.mxu0
    %v3055 = vrot.slane %v3009, 4
    %v3056 = vrot.slane %v3022, 4
    %v3057 = vrot.slane %v3035, 4
    %v3058 = vrot.slane %v3048, 4
    %v3063 = vadd.f32 %v240, %v3055
    %v3064 = vadd.f32 %v254, %v3056
    %v3065 = vadd.f32 %v268, %v3057
    %v3066 = vadd.f32 %v282, %v3058
    %v3067 = vpack.c.bf16 %v2854, %v2854
    %v3069 = vrot.slane %v3067, 1
    %3071 = vmatpush.bf16.msra.mxu0 %v1001
    %3072 = vmatpush.bf16.msra.mxu0 %v997
    %3073 = vmatpush.bf16.msra.mxu0 %v993
    %3074 = vmatpush.bf16.msra.mxu0 %v989
    %3075 = vmatpush.bf16.msra.mxu0 %v985
    %3076 = vmatpush.bf16.msra.mxu0 %v981
    %3077 = vmatpush.bf16.msra.mxu0 %v977
    %3078 = vmatpush.bf16.msra.mxu0 %v973
    %3079 = vmatmul.bf16.gmra.mxu0 %v3069
    %v3080 = vpop.f32.mrf.mxu0
    %v3081 = vadd.f32 0.0, %v3080
    %v3082 = vpop.f32.mrf.mxu0
    %3083 = vdwg.mxu0
    %3084 = vmatpush.bf16.msra.mxu0 %v1002
    %3085 = vmatpush.bf16.msra.mxu0 %v998
    %3086 = vmatpush.bf16.msra.mxu0 %v994
    %3087 = vmatpush.bf16.msra.mxu0 %v990
    %3088 = vmatpush.bf16.msra.mxu0 %v986
    %3089 = vmatpush.bf16.msra.mxu0 %v982
    %3090 = vmatpush.bf16.msra.mxu0 %v978
    %3091 = vmatpush.bf16.msra.mxu0 %v974
    %3092 = vmatmul.bf16.gmra.mxu0 %v3069
    %v3093 = vpop.f32.mrf.mxu0
    %v3094 = vadd.f32 0.0, %v3093
    %v3095 = vpop.f32.mrf.mxu0
    %3096 = vdwg.mxu0
    %3097 = vmatpush.bf16.msra.mxu0 %v1003
    %3098 = vmatpush.bf16.msra.mxu0 %v999
    %3099 = vmatpush.bf16.msra.mxu0 %v995
    %3100 = vmatpush.bf16.msra.mxu0 %v991
    %3101 = vmatpush.bf16.msra.mxu0 %v987
    %3102 = vmatpush.bf16.msra.mxu0 %v983
    %3103 = vmatpush.bf16.msra.mxu0 %v979
    %3104 = vmatpush.bf16.msra.mxu0 %v975
    %3105 = vmatmul.bf16.gmra.mxu0 %v3069
    %v3106 = vpop.f32.mrf.mxu0
    %v3107 = vadd.f32 0.0, %v3106
    %v3108 = vpop.f32.mrf.mxu0
    %3109 = vdwg.mxu0
    %3110 = vmatpush.bf16.msra.mxu0 %v1004
    %3111 = vmatpush.bf16.msra.mxu0 %v1000
    %3112 = vmatpush.bf16.msra.mxu0 %v996
    %3113 = vmatpush.bf16.msra.mxu0 %v992
    %3114 = vmatpush.bf16.msra.mxu0 %v988
    %3115 = vmatpush.bf16.msra.mxu0 %v984
    %3116 = vmatpush.bf16.msra.mxu0 %v980
    %3117 = vmatpush.bf16.msra.mxu0 %v976
    %3118 = vmatmul.bf16.gmra.mxu0 %v3069
    %v3119 = vpop.f32.mrf.mxu0
    %v3120 = vadd.f32 0.0, %v3119
    %v3121 = vpop.f32.mrf.mxu0
    %3122 = vdwg.mxu0
    %v3127 = vrot.slane %v3081, 4
    %v3128 = vrot.slane %v3094, 4
    %v3129 = vrot.slane %v3107, 4
    %v3130 = vrot.slane %v3120, 4
    %v3135 = vadd.f32 %v3063, %v3127
    %v3136 = vadd.f32 %v3064, %v3128
    %v3137 = vadd.f32 %v3065, %v3129
    %v3138 = vadd.f32 %v3066, %v3130
    %v3139 = vxor.u32 %v3135, 2147483648
    %v3140 = vmul.f32 %v3139, 1.442695
    %v3141 = vpow.pop %v3140
    %v3142 = vadd.f32 %v3141, 1.0
    %v3143 = vrcp.pop %v3142
    %v3144 = vmul.f32 %v3142, %v3143
    %v3145 = vsub.f32 1.0, %v3144
    %v3146 = vmul.f32 %v3143, %v3145
    %v3147 = vadd.f32 %v3143, %v3146
    %vm3148 = vweird.f32 %v3142
    %vm3149 = vweird.f32 %v3143
    %vm3150 = vmor %vm3148, %vm3149
    %v3151 = vsel %vm3150, %v3143, %v3147
    %v3152 = vand.u32 2147483647, %v3142
    %vm3153 = vcmp.eq.f32.partialorder %v3152, 8.507059e+37
    %v3154 = vand.u32 %v3142, 2147483648
    %v3155 = vor.u32 1.1754944e-38, %v3154
    %v3156 = vsel %vm3153, %v3155, %v3151
    %v3157 = vmul.f32 1.0, %v3156
    %v3158 = vxor.u32 %v3136, 2147483648
    %v3159 = vmul.f32 %v3158, 1.442695
    %v3160 = vpow.pop %v3159
    %v3161 = vadd.f32 %v3160, 1.0
    %v3162 = vrcp.pop %v3161
    %v3163 = vmul.f32 %v3161, %v3162
    %v3164 = vsub.f32 1.0, %v3163
    %v3165 = vmul.f32 %v3162, %v3164
    %v3166 = vadd.f32 %v3162, %v3165
    %vm3167 = vweird.f32 %v3161
    %vm3168 = vweird.f32 %v3162
    %vm3169 = vmor %vm3167, %vm3168
    %v3170 = vsel %vm3169, %v3162, %v3166
    %v3171 = vand.u32 2147483647, %v3161
    %vm3172 = vcmp.eq.f32.partialorder %v3171, 8.507059e+37
    %v3173 = vand.u32 %v3161, 2147483648
    %v3174 = vor.u32 1.1754944e-38, %v3173
    %v3175 = vsel %vm3172, %v3174, %v3170
    %v3176 = vmul.f32 1.0, %v3175
    %v3177 = vtanh.pop %v3137
    %v3178 = vxor.u32 %v3138, 2147483648
    %v3179 = vmul.f32 %v3178, 1.442695
    %v3180 = vpow.pop %v3179
    %v3181 = vadd.f32 %v3180, 1.0
    %v3182 = vrcp.pop %v3181
    %v3183 = vmul.f32 %v3181, %v3182
    %v3184 = vsub.f32 1.0, %v3183
    %v3185 = vmul.f32 %v3182, %v3184
    %v3186 = vadd.f32 %v3182, %v3185
    %vm3187 = vweird.f32 %v3181
    %vm3188 = vweird.f32 %v3182
    %vm3189 = vmor %vm3187, %vm3188
    %v3190 = vsel %vm3189, %v3182, %v3186
    %v3191 = vand.u32 2147483647, %v3181
    %vm3192 = vcmp.eq.f32.partialorder %v3191, 8.507059e+37
    %v3193 = vand.u32 %v3181, 2147483648
    %v3194 = vor.u32 1.1754944e-38, %v3193
    %v3195 = vsel %vm3192, %v3194, %v3190
    %v3196 = vmul.f32 1.0, %v3195
    %v3198 = vrot.slane %v2852, 6
    %v3200 = vmul.f32 %v3176, %v3198
    %v3201 = vmul.f32 %v3157, %v3177
    %v3202 = vadd.f32 %v3200, %v3201
    %v3203 = vtanh.pop %v3202
    %v3204 = vmul.f32 %v3196, %v3203
    %v3205 = vmax.f32 %v3204, 0.0
    %v3206 = vpack.c.bf16 %v2993, %v2993
    %v3208 = vrot.slane %v3206, 2
    %3210 = vmatpush.bf16.msra.mxu0 %v504
    %3211 = vmatpush.bf16.msra.mxu0 %v500
    %3212 = vmatpush.bf16.msra.mxu0 %v496
    %3213 = vmatpush.bf16.msra.mxu0 %v492
    %3214 = vmatpush.bf16.msra.mxu0 %v488
    %3215 = vmatpush.bf16.msra.mxu0 %v484
    %3216 = vmatpush.bf16.msra.mxu0 %v480
    %3217 = vmatpush.bf16.msra.mxu0 %v476
    %3218 = vmatmul.bf16.gmra.mxu0 %v3208
    %v3219 = vpop.f32.mrf.mxu0
    %v3220 = vadd.f32 0.0, %v3219
    %v3221 = vpop.f32.mrf.mxu0
    %3222 = vdwg.mxu0
    %3223 = vmatpush.bf16.msra.mxu0 %v505
    %3224 = vmatpush.bf16.msra.mxu0 %v501
    %3225 = vmatpush.bf16.msra.mxu0 %v497
    %3226 = vmatpush.bf16.msra.mxu0 %v493
    %3227 = vmatpush.bf16.msra.mxu0 %v489
    %3228 = vmatpush.bf16.msra.mxu0 %v485
    %3229 = vmatpush.bf16.msra.mxu0 %v481
    %3230 = vmatpush.bf16.msra.mxu0 %v477
    %3231 = vmatmul.bf16.gmra.mxu0 %v3208
    %v3232 = vpop.f32.mrf.mxu0
    %v3233 = vadd.f32 0.0, %v3232
    %v3234 = vpop.f32.mrf.mxu0
    %3235 = vdwg.mxu0
    %3236 = vmatpush.bf16.msra.mxu0 %v506
    %3237 = vmatpush.bf16.msra.mxu0 %v502
    %3238 = vmatpush.bf16.msra.mxu0 %v498
    %3239 = vmatpush.bf16.msra.mxu0 %v494
    %3240 = vmatpush.bf16.msra.mxu0 %v490
    %3241 = vmatpush.bf16.msra.mxu0 %v486
    %3242 = vmatpush.bf16.msra.mxu0 %v482
    %3243 = vmatpush.bf16.msra.mxu0 %v478
    %3244 = vmatmul.bf16.gmra.mxu0 %v3208
    %v3245 = vpop.f32.mrf.mxu0
    %v3246 = vadd.f32 0.0, %v3245
    %v3247 = vpop.f32.mrf.mxu0
    %3248 = vdwg.mxu0
    %3249 = vmatpush.bf16.msra.mxu0 %v507
    %3250 = vmatpush.bf16.msra.mxu0 %v503
    %3251 = vmatpush.bf16.msra.mxu0 %v499
    %3252 = vmatpush.bf16.msra.mxu0 %v495
    %3253 = vmatpush.bf16.msra.mxu0 %v491
    %3254 = vmatpush.bf16.msra.mxu0 %v487
    %3255 = vmatpush.bf16.msra.mxu0 %v483
    %3256 = vmatpush.bf16.msra.mxu0 %v479
    %3257 = vmatmul.bf16.gmra.mxu0 %v3208
    %v3258 = vpop.f32.mrf.mxu0
    %v3259 = vadd.f32 0.0, %v3258
    %v3260 = vpop.f32.mrf.mxu0
    %3261 = vdwg.mxu0
    %v3266 = vrot.slane %v3220, 2
    %v3267 = vrot.slane %v3233, 2
    %v3268 = vrot.slane %v3246, 2
    %v3269 = vrot.slane %v3259, 2
    %v3274 = vadd.f32 %v150, %v3266
    %v3275 = vadd.f32 %v164, %v3267
    %v3276 = vadd.f32 %v178, %v3268
    %v3277 = vadd.f32 %v192, %v3269
    %v3278 = vxor.u32 %v3274, 2147483648
    %v3279 = vmul.f32 %v3278, 1.442695
    %v3280 = vpow.pop %v3279
    %v3281 = vadd.f32 %v3280, 1.0
    %v3282 = vrcp.pop %v3281
    %v3283 = vmul.f32 %v3281, %v3282
    %v3284 = vsub.f32 1.0, %v3283
    %v3285 = vmul.f32 %v3282, %v3284
    %v3286 = vadd.f32 %v3282, %v3285
    %vm3287 = vweird.f32 %v3281
    %vm3288 = vweird.f32 %v3282
    %vm3289 = vmor %vm3287, %vm3288
    %v3290 = vsel %vm3289, %v3282, %v3286
    %v3291 = vand.u32 2147483647, %v3281
    %vm3292 = vcmp.eq.f32.partialorder %v3291, 8.507059e+37
    %v3293 = vand.u32 %v3281, 2147483648
    %v3294 = vor.u32 1.1754944e-38, %v3293
    %v3295 = vsel %vm3292, %v3294, %v3290
    %v3296 = vmul.f32 1.0, %v3295
    %v3297 = vxor.u32 %v3275, 2147483648
    %v3298 = vmul.f32 %v3297, 1.442695
    %v3299 = vpow.pop %v3298
    %v3300 = vadd.f32 %v3299, 1.0
    %v3301 = vrcp.pop %v3300
    %v3302 = vmul.f32 %v3300, %v3301
    %v3303 = vsub.f32 1.0, %v3302
    %v3304 = vmul.f32 %v3301, %v3303
    %v3305 = vadd.f32 %v3301, %v3304
    %vm3306 = vweird.f32 %v3300
    %vm3307 = vweird.f32 %v3301
    %vm3308 = vmor %vm3306, %vm3307
    %v3309 = vsel %vm3308, %v3301, %v3305
    %v3310 = vand.u32 2147483647, %v3300
    %vm3311 = vcmp.eq.f32.partialorder %v3310, 8.507059e+37
    %v3312 = vand.u32 %v3300, 2147483648
    %v3313 = vor.u32 1.1754944e-38, %v3312
    %v3314 = vsel %vm3311, %v3313, %v3309
    %v3315 = vmul.f32 1.0, %v3314
    %v3316 = vtanh.pop %v3276
    %v3317 = vxor.u32 %v3277, 2147483648
    %v3318 = vmul.f32 %v3317, 1.442695
    %v3319 = vpow.pop %v3318
    %v3320 = vadd.f32 %v3319, 1.0
    %v3321 = vrcp.pop %v3320
    %v3322 = vmul.f32 %v3320, %v3321
    %v3323 = vsub.f32 1.0, %v3322
    %v3324 = vmul.f32 %v3321, %v3323
    %v3325 = vadd.f32 %v3321, %v3324
    %vm3326 = vweird.f32 %v3320
    %vm3327 = vweird.f32 %v3321
    %vm3328 = vmor %vm3326, %vm3327
    %v3329 = vsel %vm3328, %v3321, %v3325
    %v3330 = vand.u32 2147483647, %v3320
    %vm3331 = vcmp.eq.f32.partialorder %v3330, 8.507059e+37
    %v3332 = vand.u32 %v3320, 2147483648
    %v3333 = vor.u32 1.1754944e-38, %v3332
    %v3334 = vsel %vm3331, %v3333, %v3329
    %v3335 = vmul.f32 1.0, %v3334
    %v3337 = vrot.slane %v2991, 6
    %v3339 = vmul.f32 %v3315, %v3337
    %v3340 = vmul.f32 %v3296, %v3316
    %v3341 = vadd.f32 %v3339, %v3340
    %v3342 = vtanh.pop %v3341
    %v3343 = vmul.f32 %v3335, %v3342
    %v3344 = vmax.f32 %v3343, 0.0
    %v3345 = vpack.c.bf16 %v3344, %v3344
    %v3347 = vrot.slane %v3345, 3
    %3349 = vmatpush.bf16.msra.mxu0 %v785
    %3350 = vmatpush.bf16.msra.mxu0 %v781
    %3351 = vmatpush.bf16.msra.mxu0 %v777
    %3352 = vmatpush.bf16.msra.mxu0 %v773
    %3353 = vmatpush.bf16.msra.mxu0 %v769
    %3354 = vmatpush.bf16.msra.mxu0 %v765
    %3355 = vmatpush.bf16.msra.mxu0 %v761
    %3356 = vmatpush.bf16.msra.mxu0 %v757
    %3357 = vmatmul.bf16.gmra.mxu0 %v3347
    %v3358 = vpop.f32.mrf.mxu0
    %v3359 = vadd.f32 0.0, %v3358
    %v3360 = vpop.f32.mrf.mxu0
    %3361 = vdwg.mxu0
    %3362 = vmatpush.bf16.msra.mxu0 %v786
    %3363 = vmatpush.bf16.msra.mxu0 %v782
    %3364 = vmatpush.bf16.msra.mxu0 %v778
    %3365 = vmatpush.bf16.msra.mxu0 %v774
    %3366 = vmatpush.bf16.msra.mxu0 %v770
    %3367 = vmatpush.bf16.msra.mxu0 %v766
    %3368 = vmatpush.bf16.msra.mxu0 %v762
    %3369 = vmatpush.bf16.msra.mxu0 %v758
    %3370 = vmatmul.bf16.gmra.mxu0 %v3347
    %v3371 = vpop.f32.mrf.mxu0
    %v3372 = vadd.f32 0.0, %v3371
    %v3373 = vpop.f32.mrf.mxu0
    %3374 = vdwg.mxu0
    %3375 = vmatpush.bf16.msra.mxu0 %v787
    %3376 = vmatpush.bf16.msra.mxu0 %v783
    %3377 = vmatpush.bf16.msra.mxu0 %v779
    %3378 = vmatpush.bf16.msra.mxu0 %v775
    %3379 = vmatpush.bf16.msra.mxu0 %v771
    %3380 = vmatpush.bf16.msra.mxu0 %v767
    %3381 = vmatpush.bf16.msra.mxu0 %v763
    %3382 = vmatpush.bf16.msra.mxu0 %v759
    %3383 = vmatmul.bf16.gmra.mxu0 %v3347
    %v3384 = vpop.f32.mrf.mxu0
    %v3385 = vadd.f32 0.0, %v3384
    %v3386 = vpop.f32.mrf.mxu0
    %3387 = vdwg.mxu0
    %3388 = vmatpush.bf16.msra.mxu0 %v788
    %3389 = vmatpush.bf16.msra.mxu0 %v784
    %3390 = vmatpush.bf16.msra.mxu0 %v780
    %3391 = vmatpush.bf16.msra.mxu0 %v776
    %3392 = vmatpush.bf16.msra.mxu0 %v772
    %3393 = vmatpush.bf16.msra.mxu0 %v768
    %3394 = vmatpush.bf16.msra.mxu0 %v764
    %3395 = vmatpush.bf16.msra.mxu0 %v760
    %3396 = vmatmul.bf16.gmra.mxu0 %v3347
    %v3397 = vpop.f32.mrf.mxu0
    %v3398 = vadd.f32 0.0, %v3397
    %v3399 = vpop.f32.mrf.mxu0
    %3400 = vdwg.mxu0
    %v3405 = vrot.slane %v3359, 2
    %v3406 = vrot.slane %v3372, 2
    %v3407 = vrot.slane %v3385, 2
    %v3408 = vrot.slane %v3398, 2
    %v3413 = vadd.f32 %v240, %v3405
    %v3414 = vadd.f32 %v254, %v3406
    %v3415 = vadd.f32 %v268, %v3407
    %v3416 = vadd.f32 %v282, %v3408
    %v3417 = vpack.c.bf16 %v3204, %v3204
    %v3419 = vrot.slane %v3417, 2
    %3421 = vmatpush.bf16.msra.mxu0 %v1001
    %3422 = vmatpush.bf16.msra.mxu0 %v997
    %3423 = vmatpush.bf16.msra.mxu0 %v993
    %3424 = vmatpush.bf16.msra.mxu0 %v989
    %3425 = vmatpush.bf16.msra.mxu0 %v985
    %3426 = vmatpush.bf16.msra.mxu0 %v981
    %3427 = vmatpush.bf16.msra.mxu0 %v977
    %3428 = vmatpush.bf16.msra.mxu0 %v973
    %3429 = vmatmul.bf16.gmra.mxu0 %v3419
    %v3430 = vpop.f32.mrf.mxu0
    %v3431 = vadd.f32 0.0, %v3430
    %v3432 = vpop.f32.mrf.mxu0
    %3433 = vdwg.mxu0
    %3434 = vmatpush.bf16.msra.mxu0 %v1002
    %3435 = vmatpush.bf16.msra.mxu0 %v998
    %3436 = vmatpush.bf16.msra.mxu0 %v994
    %3437 = vmatpush.bf16.msra.mxu0 %v990
    %3438 = vmatpush.bf16.msra.mxu0 %v986
    %3439 = vmatpush.bf16.msra.mxu0 %v982
    %3440 = vmatpush.bf16.msra.mxu0 %v978
    %3441 = vmatpush.bf16.msra.mxu0 %v974
    %3442 = vmatmul.bf16.gmra.mxu0 %v3419
    %v3443 = vpop.f32.mrf.mxu0
    %v3444 = vadd.f32 0.0, %v3443
    %v3445 = vpop.f32.mrf.mxu0
    %3446 = vdwg.mxu0
    %3447 = vmatpush.bf16.msra.mxu0 %v1003
    %3448 = vmatpush.bf16.msra.mxu0 %v999
    %3449 = vmatpush.bf16.msra.mxu0 %v995
    %3450 = vmatpush.bf16.msra.mxu0 %v991
    %3451 = vmatpush.bf16.msra.mxu0 %v987
    %3452 = vmatpush.bf16.msra.mxu0 %v983
    %3453 = vmatpush.bf16.msra.mxu0 %v979
    %3454 = vmatpush.bf16.msra.mxu0 %v975
    %3455 = vmatmul.bf16.gmra.mxu0 %v3419
    %v3456 = vpop.f32.mrf.mxu0
    %v3457 = vadd.f32 0.0, %v3456
    %v3458 = vpop.f32.mrf.mxu0
    %3459 = vdwg.mxu0
    %3460 = vmatpush.bf16.msra.mxu0 %v1004
    %3461 = vmatpush.bf16.msra.mxu0 %v1000
    %3462 = vmatpush.bf16.msra.mxu0 %v996
    %3463 = vmatpush.bf16.msra.mxu0 %v992
    %3464 = vmatpush.bf16.msra.mxu0 %v988
    %3465 = vmatpush.bf16.msra.mxu0 %v984
    %3466 = vmatpush.bf16.msra.mxu0 %v980
    %3467 = vmatpush.bf16.msra.mxu0 %v976
    %3468 = vmatmul.bf16.gmra.mxu0 %v3419
    %v3469 = vpop.f32.mrf.mxu0
    %v3470 = vadd.f32 0.0, %v3469
    %v3471 = vpop.f32.mrf.mxu0
    %3472 = vdwg.mxu0
    %v3477 = vrot.slane %v3431, 2
    %v3478 = vrot.slane %v3444, 2
    %v3479 = vrot.slane %v3457, 2
    %v3480 = vrot.slane %v3470, 2
    %v3485 = vadd.f32 %v3413, %v3477
    %v3486 = vadd.f32 %v3414, %v3478
    %v3487 = vadd.f32 %v3415, %v3479
    %v3488 = vadd.f32 %v3416, %v3480
    %v3489 = vxor.u32 %v3485, 2147483648
    %v3490 = vmul.f32 %v3489, 1.442695
    %v3491 = vpow.pop %v3490
    %v3492 = vadd.f32 %v3491, 1.0
    %v3493 = vrcp.pop %v3492
    %v3494 = vmul.f32 %v3492, %v3493
    %v3495 = vsub.f32 1.0, %v3494
    %v3496 = vmul.f32 %v3493, %v3495
    %v3497 = vadd.f32 %v3493, %v3496
    %vm3498 = vweird.f32 %v3492
    %vm3499 = vweird.f32 %v3493
    %vm3500 = vmor %vm3498, %vm3499
    %v3501 = vsel %vm3500, %v3493, %v3497
    %v3502 = vand.u32 2147483647, %v3492
    %vm3503 = vcmp.eq.f32.partialorder %v3502, 8.507059e+37
    %v3504 = vand.u32 %v3492, 2147483648
    %v3505 = vor.u32 1.1754944e-38, %v3504
    %v3506 = vsel %vm3503, %v3505, %v3501
    %v3507 = vmul.f32 1.0, %v3506
    %v3508 = vxor.u32 %v3486, 2147483648
    %v3509 = vmul.f32 %v3508, 1.442695
    %v3510 = vpow.pop %v3509
    %v3511 = vadd.f32 %v3510, 1.0
    %v3512 = vrcp.pop %v3511
    %v3513 = vmul.f32 %v3511, %v3512
    %v3514 = vsub.f32 1.0, %v3513
    %v3515 = vmul.f32 %v3512, %v3514
    %v3516 = vadd.f32 %v3512, %v3515
    %vm3517 = vweird.f32 %v3511
    %vm3518 = vweird.f32 %v3512
    %vm3519 = vmor %vm3517, %vm3518
    %v3520 = vsel %vm3519, %v3512, %v3516
    %v3521 = vand.u32 2147483647, %v3511
    %vm3522 = vcmp.eq.f32.partialorder %v3521, 8.507059e+37
    %v3523 = vand.u32 %v3511, 2147483648
    %v3524 = vor.u32 1.1754944e-38, %v3523
    %v3525 = vsel %vm3522, %v3524, %v3520
    %v3526 = vmul.f32 1.0, %v3525
    %v3527 = vtanh.pop %v3487
    %v3528 = vxor.u32 %v3488, 2147483648
    %v3529 = vmul.f32 %v3528, 1.442695
    %v3530 = vpow.pop %v3529
    %v3531 = vadd.f32 %v3530, 1.0
    %v3532 = vrcp.pop %v3531
    %v3533 = vmul.f32 %v3531, %v3532
    %v3534 = vsub.f32 1.0, %v3533
    %v3535 = vmul.f32 %v3532, %v3534
    %v3536 = vadd.f32 %v3532, %v3535
    %vm3537 = vweird.f32 %v3531
    %vm3538 = vweird.f32 %v3532
    %vm3539 = vmor %vm3537, %vm3538
    %v3540 = vsel %vm3539, %v3532, %v3536
    %v3541 = vand.u32 2147483647, %v3531
    %vm3542 = vcmp.eq.f32.partialorder %v3541, 8.507059e+37
    %v3543 = vand.u32 %v3531, 2147483648
    %v3544 = vor.u32 1.1754944e-38, %v3543
    %v3545 = vsel %vm3542, %v3544, %v3540
    %v3546 = vmul.f32 1.0, %v3545
    %v3548 = vrot.slane %v3202, 6
    %v3550 = vmul.f32 %v3526, %v3548
    %v3551 = vmul.f32 %v3507, %v3527
    %v3552 = vadd.f32 %v3550, %v3551
    %v3553 = vtanh.pop %v3552
    %v3554 = vmul.f32 %v3546, %v3553
    %v3555 = vmax.f32 %v3554, 0.0
    %v3557 = vrot.slane %v1500, 2
    %v3559 = vrot.slane %v1850, 4
    %v3561 = vrot.slane %v2200, 6
    %v3563 = vrot.slane %v2855, 2
    %v3565 = vrot.slane %v3205, 4
    %v3567 = vrot.slane %v3555, 6
    %v3570 = vrot.slane %v3557, 6
    %v3571 = vrot.slane %v3559, 4
    %v3572 = vrot.slane %v3561, 2
    %v3573 = vrot.slane %v3563, 6
    %v3574 = vrot.slane %v3565, 4
    %v3575 = vrot.slane %v3567, 2
    %vm3576 = vcmask 1041408
    %v3577 = vsel %vm3576, %v1156, %v3570
    %vm3578 = vcmask 1045508
    %v3579 = vsel %vm3578, %v3571, %v3572
    %vm3580 = vcmask 1043456
    %v3581 = vsel %vm3580, %v3577, %v3579
    %v3582 = vsel %vm3576, %v2511, %v3573
    %v3583 = vsel %vm3578, %v3574, %v3575
    %v3584 = vsel %vm3580, %v3582, %v3583
    %3587 = vst [vmem:[%s8] sm:$0xff] %v3581
    %3588 = vst [vmem:[%s8 + $0x8] sm:$0xff] %v3584
    // Predicated region
    $region50: #{lstmae_forward.1} parent=1 // pred_check
      _
    $region51: #{lstmae_forward.1} parent=1 // pred_check_branch
      %3590 = sbr.rel (0) target = $region53
    $region52: #{lstmae_forward.1} parent=1 // pred_region
      _
    $region53: #{lstmae_forward.1} parent=1 // pred_fallthru
      _
    // Predicated region
    $region54: #{lstmae_forward.1} parent=1 // pred_check
      _
    $region55: #{lstmae_forward.1} parent=1 // pred_check_branch
      %3592 = sbr.rel (0) target = $region57
    $region56: #{lstmae_forward.1} parent=1 // pred_region
      _
    $region57: #{lstmae_forward.1} parent=1 // pred_fallthru
      _
    %3593 = vsyncpa [#allocation3], 1
    %3594 = vsyncpa [#allocation5], 1
    %3595 = vsyncpa [#allocation8], 1

</llo_original>
